<compile_context>
chip_gen: v6e
topology: v6e:2x2x1
jax: 0.10.0
libtpu: 0.0.40
codegen_flags: <defaults>
</compile_context>

<pallas_src>
import jax
import jax.numpy as jnp
from jax.experimental import pallas as pl
from jax.experimental.pallas import tpu as pltpu

IN_F, H1, H2, OUT_F = 4096, 200, 50, 2


def _mlp_kernel(x_ref, w1_ref, b1_ref, w2_ref, b2_ref, w3_ref, b3_ref, o_ref):
    # fc1 + sigmoid: cast the f32 x tile to bf16 on the VPU (free in this
    # mem-bound regime), bf16 x bf16 on the MXU with f32 accumulate,
    # sigmoid goes to the EUP (separate bundle slot).
    x = x_ref[...].astype(jnp.bfloat16)
    h1 = jnp.dot(x, w1_ref[...], preferred_element_type=jnp.float32) + b1_ref[...]
    h1 = jax.nn.sigmoid(h1)

    # fc2 + sigmoid (tiny: keep activations f32 for accuracy, upcast bf16 W2).
    h2 = jnp.dot(h1, w2_ref[...].astype(jnp.float32),
                 preferred_element_type=jnp.float32) + b2_ref[...]
    h2 = jax.nn.sigmoid(h2)

    # fc3 (no activation).
    out = jnp.dot(h2, w3_ref[...].astype(jnp.float32),
                  preferred_element_type=jnp.float32) + b3_ref[...]
    o_ref[...] = out.astype(o_ref.dtype)


def _round_up(x, m):
    return (x + m - 1) // m * m


def prepare_params(w1, b1, w2, b2, w3, b3):
    """One-time parameter prep (not in the per-call hot path).

    Weights [in, out] -> bf16 (halves W1 HBM traffic); biases -> f32 [1, out].
    """
    return (
        jnp.asarray(w1, jnp.bfloat16),
        jnp.asarray(b1, jnp.float32).reshape(1, H1),
        jnp.asarray(w2, jnp.bfloat16),
        jnp.asarray(b2, jnp.float32).reshape(1, H2),
        jnp.asarray(w3, jnp.bfloat16),
        jnp.asarray(b3, jnp.float32).reshape(1, OUT_F),
    )


def fully_connected_nn(x, params, *, tile_b=None):
    """x: [B, 4096] f32; params from prepare_params(). Returns [B, 2] f32."""
    w1, b1, w2, b2, w3, b3 = params
    B, F = x.shape
    assert F == IN_F, f"expected {IN_F} input features, got {F}"

    x = jnp.asarray(x, jnp.float32)

    # Batch tile: big enough to amortize the ~0.35us/step overhead and feed
    # the MXU, capped so double-buffered f32 x tiles + resident bf16 weights
    # stay well inside every generation's VMEM.
    if tile_b is None:
        tile_b = min(256, _round_up(B, 8))
    b_pad = _round_up(B, tile_b)
    if b_pad != B:
        x = jnp.pad(x, ((0, b_pad - B), (0, 0)))
    grid = (b_pad // tile_b,)

    flops = 2 * b_pad * (IN_F * H1 + H1 * H2 + H2 * OUT_F)
    transcendentals = b_pad * (H1 + H2)
    bytes_accessed = (
        b_pad * IN_F * 4                          # x (f32, streamed)
        + (IN_F * H1 + H1 * H2 + H2 * OUT_F) * 2  # weights (bf16, resident)
        + (H1 + H2 + OUT_F) * 4                   # biases (f32)
        + b_pad * OUT_F * 4                       # output (f32)
    )

    out = pl.pallas_call(
        _mlp_kernel,
        out_shape=jax.ShapeDtypeStruct((b_pad, OUT_F), jnp.float32),
        grid_spec=pltpu.PrefetchScalarGridSpec(
            num_scalar_prefetch=0,
            grid=grid,
            in_specs=[
                pl.BlockSpec((tile_b, IN_F), lambda i: (i, 0)),   # x streams
                pl.BlockSpec((IN_F, H1), lambda i: (0, 0)),       # W1 resident
                pl.BlockSpec((1, H1), lambda i: (0, 0)),
                pl.BlockSpec((H1, H2), lambda i: (0, 0)),         # W2 resident
                pl.BlockSpec((1, H2), lambda i: (0, 0)),
                pl.BlockSpec((H2, OUT_F), lambda i: (0, 0)),      # W3 resident
                pl.BlockSpec((1, OUT_F), lambda i: (0, 0)),
            ],
            out_specs=pl.BlockSpec((tile_b, OUT_F), lambda i: (i, 0)),
        ),
        compiler_params=pltpu.CompilerParams(
            dimension_semantics=("parallel",),
            vmem_limit_bytes=40 * 1024 * 1024,
        ),
        cost_estimate=pl.CostEstimate(
            flops=flops,
            transcendentals=transcendentals,
            bytes_accessed=bytes_accessed,
        ),
    )(x, w1, b1, w2, b2, w3, b3)

    return out[:B] if b_pad != B else out


def _init_linear(key, in_features, out_features):
    """nn.Linear-style init (uniform +/- 1/sqrt(in)); weight stored as [in, out]."""
    kw, kb = jax.random.split(key)
    bound = 1.0 / jnp.sqrt(jnp.float32(in_features))
    w = jax.random.uniform(kw, (in_features, out_features), jnp.float32, -bound, bound)
    b = jax.random.uniform(kb, (1, out_features), jnp.float32, -bound, bound)
    return w, b


def reference_forward(x, w1, b1, w2, b2, w3, b3):
    """Pure-JAX reference using the same bf16-quantized operands as the kernel."""
    xf = x.astype(jnp.bfloat16).astype(jnp.float32)
    w1f = w1.astype(jnp.bfloat16).astype(jnp.float32)
    w2f = w2.astype(jnp.bfloat16).astype(jnp.float32)
    w3f = w3.astype(jnp.bfloat16).astype(jnp.float32)
    h1 = jax.nn.sigmoid(xf @ w1f + b1.reshape(1, -1))
    h2 = jax.nn.sigmoid(h1 @ w2f + b2.reshape(1, -1))
    return h2 @ w3f + b3.reshape(1, -1)


if __name__ == "__main__":
    key = jax.random.PRNGKey(0)
    k_x, k1, k2, k3 = jax.random.split(key, 4)

    B = 8  # small batch for the self-test
    x = jax.random.normal(k_x, (B, IN_F), jnp.float32)

    w1, b1 = _init_linear(k1, IN_F, H1)
    w2, b2 = _init_linear(k2, H1, H2)
    w3, b3 = _init_linear(k3, H2, OUT_F)

    params = prepare_params(w1, b1, w2, b2, w3, b3)
    out = fully_connected_nn(x, params)
    out = jax.block_until_ready(out)

    ref = jax.block_until_ready(reference_forward(x, w1, b1, w2, b2, w3, b3))
    assert out.shape == (B, OUT_F), out.shape
    assert jnp.allclose(out, ref, atol=2e-3, rtol=2e-3), "mismatch vs JAX reference"

    print("KERNEL_OK")
</pallas_src>

<mosaic_0001>
module attributes {stable_mosaic.version = 11 : i64} {
  func.func @_mlp_kernel(%arg0: i32, %arg1: memref<8x4096xf32, #tpu.memory_space<vmem>>, %arg2: memref<4096x200xbf16, #tpu.memory_space<vmem>>, %arg3: memref<1x200xf32, #tpu.memory_space<vmem>>, %arg4: memref<200x50xbf16, #tpu.memory_space<vmem>>, %arg5: memref<1x50xf32, #tpu.memory_space<vmem>>, %arg6: memref<50x2xbf16, #tpu.memory_space<vmem>>, %arg7: memref<1x2xf32, #tpu.memory_space<vmem>>, %arg8: memref<8x2xf32, #tpu.memory_space<vmem>>) attributes {dimension_semantics = [#tpu.dimension_semantics<parallel>], iteration_bounds = array<i64: 1>, scalar_prefetch = 0 : i64, scratch_operands = 0 : i64, tpu.core_type = #tpu.core_type<tc>, window_params = [{transform_indices = @transform_0, window_bounds = array<i64: 8, 4096>}, {pipeline_mode = #tpu.pipeline_mode<synchronous>, transform_indices = @transform_1, window_bounds = array<i64: 4096, 200>}, {pipeline_mode = #tpu.pipeline_mode<synchronous>, transform_indices = @transform_2, window_bounds = array<i64: 1, 200>}, {pipeline_mode = #tpu.pipeline_mode<synchronous>, transform_indices = @transform_3, window_bounds = array<i64: 200, 50>}, {pipeline_mode = #tpu.pipeline_mode<synchronous>, transform_indices = @transform_4, window_bounds = array<i64: 1, 50>}, {pipeline_mode = #tpu.pipeline_mode<synchronous>, transform_indices = @transform_5, window_bounds = array<i64: 50, 2>}, {pipeline_mode = #tpu.pipeline_mode<synchronous>, transform_indices = @transform_6, window_bounds = array<i64: 1, 2>}, {transform_indices = @transform_7, window_bounds = array<i64: 8, 2>}]} {
    %c0 = arith.constant 0 : index
    %c0_0 = arith.constant 0 : index
    %0 = vector.load %arg1[%c0, %c0_0] : memref<8x4096xf32, #tpu.memory_space<vmem>>, vector<8x4096xf32>
    %1 = arith.truncf %0 : vector<8x4096xf32> to vector<8x4096xbf16>
    %c0_1 = arith.constant 0 : index
    %c0_2 = arith.constant 0 : index
    %2 = vector.load %arg2[%c0_1, %c0_2] : memref<4096x200xbf16, #tpu.memory_space<vmem>>, vector<4096x200xbf16>
    %cst = arith.constant dense<0.000000e+00> : vector<8x200xf32>
    %3 = tpu.matmul %1, %2, %cst {dimension_numbers = #tpu.dot_dimension_numbers<[1], [0], [0], [1], [0, 0, 1, 1], [], []>} : vector<8x4096xbf16>, vector<4096x200xbf16>, vector<8x200xf32> -> vector<8x200xf32>
    %c0_3 = arith.constant 0 : index
    %c0_4 = arith.constant 0 : index
    %4 = vector.load %arg3[%c0_3, %c0_4] : memref<1x200xf32, #tpu.memory_space<vmem>>, vector<1x200xf32>
    %5 = vector.broadcast %4 : vector<1x200xf32> to vector<8x200xf32>
    %6 = arith.addf %3, %5 : vector<8x200xf32>
    %7 = arith.negf %6 : vector<8x200xf32>
    %8 = math.exp %7 : vector<8x200xf32>
    %cst_5 = arith.constant 1.000000e+00 : f32
    %9 = vector.broadcast %cst_5 : f32 to vector<8x200xf32>
    %10 = arith.addf %9, %8 : vector<8x200xf32>
    %11 = arith.divf %9, %10 : vector<8x200xf32>
    %c0_6 = arith.constant 0 : index
    %c0_7 = arith.constant 0 : index
    %12 = vector.load %arg4[%c0_6, %c0_7] : memref<200x50xbf16, #tpu.memory_space<vmem>>, vector<200x50xbf16>
    %13 = arith.extf %12 : vector<200x50xbf16> to vector<200x50xf32>
    %cst_8 = arith.constant dense<0.000000e+00> : vector<8x50xf32>
    %14 = tpu.matmul %11, %13, %cst_8 {dimension_numbers = #tpu.dot_dimension_numbers<[1], [0], [0], [1], [0, 0, 1, 1], [], []>} : vector<8x200xf32>, vector<200x50xf32>, vector<8x50xf32> -> vector<8x50xf32>
    %c0_9 = arith.constant 0 : index
    %c0_10 = arith.constant 0 : index
    %15 = vector.load %arg5[%c0_9, %c0_10] : memref<1x50xf32, #tpu.memory_space<vmem>>, vector<1x50xf32>
    %16 = vector.broadcast %15 : vector<1x50xf32> to vector<8x50xf32>
    %17 = arith.addf %14, %16 : vector<8x50xf32>
    %18 = arith.negf %17 : vector<8x50xf32>
    %19 = math.exp %18 : vector<8x50xf32>
    %cst_11 = arith.constant 1.000000e+00 : f32
    %20 = vector.broadcast %cst_11 : f32 to vector<8x50xf32>
    %21 = arith.addf %20, %19 : vector<8x50xf32>
    %22 = arith.divf %20, %21 : vector<8x50xf32>
    %c0_12 = arith.constant 0 : index
    %c0_13 = arith.constant 0 : index
    %23 = vector.load %arg6[%c0_12, %c0_13] : memref<50x2xbf16, #tpu.memory_space<vmem>>, vector<50x2xbf16>
    %24 = arith.extf %23 : vector<50x2xbf16> to vector<50x2xf32>
    %cst_14 = arith.constant dense<0.000000e+00> : vector<8x2xf32>
    %25 = tpu.matmul %22, %24, %cst_14 {dimension_numbers = #tpu.dot_dimension_numbers<[1], [0], [0], [1], [0, 0, 1, 1], [], []>} : vector<8x50xf32>, vector<50x2xf32>, vector<8x2xf32> -> vector<8x2xf32>
    %c0_15 = arith.constant 0 : index
    %c0_16 = arith.constant 0 : index
    %26 = vector.load %arg7[%c0_15, %c0_16] : memref<1x2xf32, #tpu.memory_space<vmem>>, vector<1x2xf32>
    %27 = vector.broadcast %26 : vector<1x2xf32> to vector<8x2xf32>
    %28 = arith.addf %25, %27 : vector<8x2xf32>
    %c0_17 = arith.constant 0 : index
    %c0_18 = arith.constant 0 : index
    %29 = vector.load %arg8[%c0_17, %c0_18] : memref<8x2xf32, #tpu.memory_space<vmem>>, vector<8x2xf32>
    tpu.vector_store %arg8[%c0_17, %c0_18], %28 {strides = array<i32>} : memref<8x2xf32, #tpu.memory_space<vmem>>, vector<8x2xf32>,
    return
  }
  func.func @transform_0(%arg0: i32) -> (i32, i32) {
    %c0_i32 = arith.constant 0 : i32
    %c0_i32_0 = arith.constant 0 : i32
    return %arg0, %c0_i32 : i32, i32
  }
  func.func @transform_1(%arg0: i32) -> (i32, i32) {
    %c0_i32 = arith.constant 0 : i32
    %c0_i32_0 = arith.constant 0 : i32
    %c0_i32_1 = arith.constant 0 : i32
    return %c0_i32, %c0_i32_0 : i32, i32
  }
  func.func @transform_2(%arg0: i32) -> (i32, i32) {
    %c0_i32 = arith.constant 0 : i32
    %c0_i32_0 = arith.constant 0 : i32
    %c0_i32_1 = arith.constant 0 : i32
    return %c0_i32, %c0_i32_0 : i32, i32
  }
  func.func @transform_3(%arg0: i32) -> (i32, i32) {
    %c0_i32 = arith.constant 0 : i32
    %c0_i32_0 = arith.constant 0 : i32
    %c0_i32_1 = arith.constant 0 : i32
    return %c0_i32, %c0_i32_0 : i32, i32
  }
  func.func @transform_4(%arg0: i32) -> (i32, i32) {
    %c0_i32 = arith.constant 0 : i32
    %c0_i32_0 = arith.constant 0 : i32
    %c0_i32_1 = arith.constant 0 : i32
    return %c0_i32, %c0_i32_0 : i32, i32
  }
  func.func @transform_5(%arg0: i32) -> (i32, i32) {
    %c0_i32 = arith.constant 0 : i32
    %c0_i32_0 = arith.constant 0 : i32
    %c0_i32_1 = arith.constant 0 : i32
    return %c0_i32, %c0_i32_0 : i32, i32
  }
  func.func @transform_6(%arg0: i32) -> (i32, i32) {
    %c0_i32 = arith.constant 0 : i32
    %c0_i32_0 = arith.constant 0 : i32
    %c0_i32_1 = arith.constant 0 : i32
    return %c0_i32, %c0_i32_0 : i32, i32
  }
  func.func @transform_7(%arg0: i32) -> (i32, i32) {
    %c0_i32 = arith.constant 0 : i32
    %c0_i32_0 = arith.constant 0 : i32
    return %arg0, %c0_i32 : i32, i32
  }
}

</mosaic_0001>

<llo_original>
// kernel: tpu_custom_call.1
$region0: #{tpu_custom_call.1}
  #allocation0 [shape = 'u32[]', space=smem, size = 0x4, offset = 0x4, fixed_abs, tag = 'smem constant byte address 0x4 - core index']
  #allocation1 [shape = 'u32[144,128]{1,0:T(1,128)}', space=vmem, size = 0x12000, scoped, tag = 'internal scratch']
  %s0 = inlined_call_operand.vmem [shape: f32[8,4096], index: 0, kind: input, shape index: {}]
  %s1 = inlined_call_operand.vmem [shape: bf16[4096,200], index: 1, kind: input, shape index: {}]
  %s2 = inlined_call_operand.vmem [shape: f32[1,200], index: 2, kind: input, shape index: {}]
  %s3 = inlined_call_operand.vmem [shape: bf16[200,50], index: 3, kind: input, shape index: {}]
  %s4 = inlined_call_operand.vmem [shape: f32[1,50], index: 4, kind: input, shape index: {}]
  %s5 = inlined_call_operand.vmem [shape: bf16[50,2], index: 5, kind: input, shape index: {}]
  %s6 = inlined_call_operand.vmem [shape: f32[1,2], index: 6, kind: input, shape index: {}]
  %s7 = inlined_call_operand.vmem [shape: f32[8,2], index: 7, kind: output, shape index: {}]
  %s8 = sld [smem:[#allocation0]]
  $region38: #{tpu_custom_call.1} parent=0
    _
  %s10 = ssub.s32 1, %s8
  %s11 = scalar_select 0, %s10, %s8
  // Predicated region
  $region2: #{tpu_custom_call.1} parent=0 // pred_check
    _
  $region3: #{tpu_custom_call.1} parent=0 // pred_check_branch
    %13 = sbr.rel (0) target = $region5
  $region4: #{tpu_custom_call.1} parent=0 // pred_region
    _
  $region5: #{tpu_custom_call.1} parent=0 // pred_fallthru
    _
  // Predicated region
  $region6: #{tpu_custom_call.1} parent=0 // pred_check
    _
  $region7: #{tpu_custom_call.1} parent=0 // pred_check_branch
    %15 = sbr.rel (0) target = $region9
  $region8: #{tpu_custom_call.1} parent=0 // pred_region
    _
  $region9: #{tpu_custom_call.1} parent=0 // pred_fallthru
    _
  // Predicated region
  $region10: #{tpu_custom_call.1} parent=0 // pred_check
    _
  $region11: #{tpu_custom_call.1} parent=0 // pred_check_branch
    %17 = sbr.rel (0) target = $region13
  $region12: #{tpu_custom_call.1} parent=0 // pred_region
    _
  $region13: #{tpu_custom_call.1} parent=0 // pred_fallthru
    _
  // Predicated region
  $region14: #{tpu_custom_call.1} parent=0 // pred_check
    _
  $region15: #{tpu_custom_call.1} parent=0 // pred_check_branch
    %19 = sbr.rel (0) target = $region17
  $region16: #{tpu_custom_call.1} parent=0 // pred_region
    _
  $region17: #{tpu_custom_call.1} parent=0 // pred_fallthru
    _
  // Predicated region
  $region18: #{tpu_custom_call.1} parent=0 // pred_check
    _
  $region19: #{tpu_custom_call.1} parent=0 // pred_check_branch
    %21 = sbr.rel (0) target = $region21
  $region20: #{tpu_custom_call.1} parent=0 // pred_region
    _
  $region21: #{tpu_custom_call.1} parent=0 // pred_fallthru
    _
  // Predicated region
  $region22: #{tpu_custom_call.1} parent=0 // pred_check
    _
  $region23: #{tpu_custom_call.1} parent=0 // pred_check_branch
    %23 = sbr.rel (0) target = $region25
  $region24: #{tpu_custom_call.1} parent=0 // pred_region
    _
  $region25: #{tpu_custom_call.1} parent=0 // pred_fallthru
    _
  // Predicated region
  $region26: #{tpu_custom_call.1} parent=0 // pred_check
    _
  $region27: #{tpu_custom_call.1} parent=0 // pred_check_branch
    %25 = sbr.rel (0) target = $region29
  $region28: #{tpu_custom_call.1} parent=0 // pred_region
    _
  $region29: #{tpu_custom_call.1} parent=0 // pred_fallthru
    _
  %v26 = vld [vmem:[%s0] sm:$0xff]
  %v27 = vld [vmem:[%s0 + $0x8] sm:$0xff]
  %v28 = vld [vmem:[%s0 + $0x10] sm:$0xff]
  %v29 = vld [vmem:[%s0 + $0x18] sm:$0xff]
  %v30 = vld [vmem:[%s0 + $0x20] sm:$0xff]
  %v31 = vld [vmem:[%s0 + $0x28] sm:$0xff]
  %v32 = vld [vmem:[%s0 + $0x30] sm:$0xff]
  %v33 = vld [vmem:[%s0 + $0x38] sm:$0xff]
  %v34 = vld [vmem:[%s0 + $0x40] sm:$0xff]
  %v35 = vld [vmem:[%s0 + $0x48] sm:$0xff]
  %v36 = vld [vmem:[%s0 + $0x50] sm:$0xff]
  %v37 = vld [vmem:[%s0 + $0x58] sm:$0xff]
  %v38 = vld [vmem:[%s0 + $0x60] sm:$0xff]
  %v39 = vld [vmem:[%s0 + $0x68] sm:$0xff]
  %v40 = vld [vmem:[%s0 + $0x70] sm:$0xff]
  %v41 = vld [vmem:[%s0 + $0x78] sm:$0xff]
  %v42 = vld [vmem:[%s0 + $0x80] sm:$0xff]
  %v43 = vld [vmem:[%s0 + $0x88] sm:$0xff]
  %v44 = vld [vmem:[%s0 + $0x90] sm:$0xff]
  %v45 = vld [vmem:[%s0 + $0x98] sm:$0xff]
  %v46 = vld [vmem:[%s0 + $0xa0] sm:$0xff]
  %v47 = vld [vmem:[%s0 + $0xa8] sm:$0xff]
  %v48 = vld [vmem:[%s0 + $0xb0] sm:$0xff]
  %v49 = vld [vmem:[%s0 + $0xb8] sm:$0xff]
  %v50 = vld [vmem:[%s0 + $0xc0] sm:$0xff]
  %v51 = vld [vmem:[%s0 + $0xc8] sm:$0xff]
  %v52 = vld [vmem:[%s0 + $0xd0] sm:$0xff]
  %v53 = vld [vmem:[%s0 + $0xd8] sm:$0xff]
  %v54 = vld [vmem:[%s0 + $0xe0] sm:$0xff]
  %v55 = vld [vmem:[%s0 + $0xe8] sm:$0xff]
  %v56 = vld [vmem:[%s0 + $0xf0] sm:$0xff]
  %v57 = vld [vmem:[%s0 + $0xf8] sm:$0xff]
  %v58 = vpack.c.bf16 %v26, %v26
  %v59 = vpack.c.bf16 %v27, %v27
  %v60 = vpack.c.bf16 %v28, %v28
  %v61 = vpack.c.bf16 %v29, %v29
  %v62 = vpack.c.bf16 %v30, %v30
  %v63 = vpack.c.bf16 %v31, %v31
  %v64 = vpack.c.bf16 %v32, %v32
  %v65 = vpack.c.bf16 %v33, %v33
  %v66 = vpack.c.bf16 %v34, %v34
  %v67 = vpack.c.bf16 %v35, %v35
  %v68 = vpack.c.bf16 %v36, %v36
  %v69 = vpack.c.bf16 %v37, %v37
  %v70 = vpack.c.bf16 %v38, %v38
  %v71 = vpack.c.bf16 %v39, %v39
  %v72 = vpack.c.bf16 %v40, %v40
  %v73 = vpack.c.bf16 %v41, %v41
  %v74 = vpack.c.bf16 %v42, %v42
  %v75 = vpack.c.bf16 %v43, %v43
  %v76 = vpack.c.bf16 %v44, %v44
  %v77 = vpack.c.bf16 %v45, %v45
  %v78 = vpack.c.bf16 %v46, %v46
  %v79 = vpack.c.bf16 %v47, %v47
  %v80 = vpack.c.bf16 %v48, %v48
  %v81 = vpack.c.bf16 %v49, %v49
  %v82 = vpack.c.bf16 %v50, %v50
  %v83 = vpack.c.bf16 %v51, %v51
  %v84 = vpack.c.bf16 %v52, %v52
  %v85 = vpack.c.bf16 %v53, %v53
  %v86 = vpack.c.bf16 %v54, %v54
  %v87 = vpack.c.bf16 %v55, %v55
  %v88 = vpack.c.bf16 %v56, %v56
  %v89 = vpack.c.bf16 %v57, %v57
  %v90 = vld [vmem:[%s1] sm:$0xff]
  %v91 = vld [vmem:[%s1 + $0x8] sm:$0xff]
  %v92 = vld [vmem:[%s1 + $0x10] sm:$0xff]
  %v93 = vld [vmem:[%s1 + $0x18] sm:$0xff]
  %v94 = vld [vmem:[%s1 + $0x20] sm:$0xff]
  %v95 = vld [vmem:[%s1 + $0x28] sm:$0xff]
  %v96 = vld [vmem:[%s1 + $0x30] sm:$0xff]
  %v97 = vld [vmem:[%s1 + $0x38] sm:$0xff]
  %v98 = vld [vmem:[%s1 + $0x40] sm:$0xff]
  %v99 = vld [vmem:[%s1 + $0x48] sm:$0xff]
  %v100 = vld [vmem:[%s1 + $0x50] sm:$0xff]
  %v101 = vld [vmem:[%s1 + $0x58] sm:$0xff]
  %v102 = vld [vmem:[%s1 + $0x60] sm:$0xff]
  %v103 = vld [vmem:[%s1 + $0x68] sm:$0xff]
  %v104 = vld [vmem:[%s1 + $0x70] sm:$0xff]
  %v105 = vld [vmem:[%s1 + $0x78] sm:$0xff]
  %v106 = vld [vmem:[%s1 + $0x80] sm:$0xff]
  %v107 = vld [vmem:[%s1 + $0x88] sm:$0xff]
  %v108 = vld [vmem:[%s1 + $0x90] sm:$0xff]
  %v109 = vld [vmem:[%s1 + $0x98] sm:$0xff]
  %v110 = vld [vmem:[%s1 + $0xa0] sm:$0xff]
  %v111 = vld [vmem:[%s1 + $0xa8] sm:$0xff]
  %v112 = vld [vmem:[%s1 + $0xb0] sm:$0xff]
  %v113 = vld [vmem:[%s1 + $0xb8] sm:$0xff]
  %v114 = vld [vmem:[%s1 + $0xc0] sm:$0xff]
  %v115 = vld [vmem:[%s1 + $0xc8] sm:$0xff]
  %v116 = vld [vmem:[%s1 + $0xd0] sm:$0xff]
  %v117 = vld [vmem:[%s1 + $0xd8] sm:$0xff]
  %v118 = vld [vmem:[%s1 + $0xe0] sm:$0xff]
  %v119 = vld [vmem:[%s1 + $0xe8] sm:$0xff]
  %v120 = vld [vmem:[%s1 + $0xf0] sm:$0xff]
  %v121 = vld [vmem:[%s1 + $0xf8] sm:$0xff]
  %v122 = vld [vmem:[%s1 + $0x100] sm:$0xff]
  %v123 = vld [vmem:[%s1 + $0x108] sm:$0xff]
  %v124 = vld [vmem:[%s1 + $0x110] sm:$0xff]
  %v125 = vld [vmem:[%s1 + $0x118] sm:$0xff]
  %v126 = vld [vmem:[%s1 + $0x120] sm:$0xff]
  %v127 = vld [vmem:[%s1 + $0x128] sm:$0xff]
  %v128 = vld [vmem:[%s1 + $0x130] sm:$0xff]
  %v129 = vld [vmem:[%s1 + $0x138] sm:$0xff]
  %v130 = vld [vmem:[%s1 + $0x140] sm:$0xff]
  %v131 = vld [vmem:[%s1 + $0x148] sm:$0xff]
  %v132 = vld [vmem:[%s1 + $0x150] sm:$0xff]
  %v133 = vld [vmem:[%s1 + $0x158] sm:$0xff]
  %v134 = vld [vmem:[%s1 + $0x160] sm:$0xff]
  %v135 = vld [vmem:[%s1 + $0x168] sm:$0xff]
  %v136 = vld [vmem:[%s1 + $0x170] sm:$0xff]
  %v137 = vld [vmem:[%s1 + $0x178] sm:$0xff]
  %v138 = vld [vmem:[%s1 + $0x180] sm:$0xff]
  %v139 = vld [vmem:[%s1 + $0x188] sm:$0xff]
  %v140 = vld [vmem:[%s1 + $0x190] sm:$0xff]
  %v141 = vld [vmem:[%s1 + $0x198] sm:$0xff]
  %v142 = vld [vmem:[%s1 + $0x1a0] sm:$0xff]
  %v143 = vld [vmem:[%s1 + $0x1a8] sm:$0xff]
  %v144 = vld [vmem:[%s1 + $0x1b0] sm:$0xff]
  %v145 = vld [vmem:[%s1 + $0x1b8] sm:$0xff]
  %v146 = vld [vmem:[%s1 + $0x1c0] sm:$0xff]
  %v147 = vld [vmem:[%s1 + $0x1c8] sm:$0xff]
  %v148 = vld [vmem:[%s1 + $0x1d0] sm:$0xff]
  %v149 = vld [vmem:[%s1 + $0x1d8] sm:$0xff]
  %v150 = vld [vmem:[%s1 + $0x1e0] sm:$0xff]
  %v151 = vld [vmem:[%s1 + $0x1e8] sm:$0xff]
  %v152 = vld [vmem:[%s1 + $0x1f0] sm:$0xff]
  %v153 = vld [vmem:[%s1 + $0x1f8] sm:$0xff]
  %v154 = vld [vmem:[%s1 + $0x200] sm:$0xff]
  %v155 = vld [vmem:[%s1 + $0x208] sm:$0xff]
  %v156 = vld [vmem:[%s1 + $0x210] sm:$0xff]
  %v157 = vld [vmem:[%s1 + $0x218] sm:$0xff]
  %v158 = vld [vmem:[%s1 + $0x220] sm:$0xff]
  %v159 = vld [vmem:[%s1 + $0x228] sm:$0xff]
  %v160 = vld [vmem:[%s1 + $0x230] sm:$0xff]
  %v161 = vld [vmem:[%s1 + $0x238] sm:$0xff]
  %v162 = vld [vmem:[%s1 + $0x240] sm:$0xff]
  %v163 = vld [vmem:[%s1 + $0x248] sm:$0xff]
  %v164 = vld [vmem:[%s1 + $0x250] sm:$0xff]
  %v165 = vld [vmem:[%s1 + $0x258] sm:$0xff]
  %v166 = vld [vmem:[%s1 + $0x260] sm:$0xff]
  %v167 = vld [vmem:[%s1 + $0x268] sm:$0xff]
  %v168 = vld [vmem:[%s1 + $0x270] sm:$0xff]
  %v169 = vld [vmem:[%s1 + $0x278] sm:$0xff]
  %v170 = vld [vmem:[%s1 + $0x280] sm:$0xff]
  %v171 = vld [vmem:[%s1 + $0x288] sm:$0xff]
  %v172 = vld [vmem:[%s1 + $0x290] sm:$0xff]
  %v173 = vld [vmem:[%s1 + $0x298] sm:$0xff]
  %v174 = vld [vmem:[%s1 + $0x2a0] sm:$0xff]
  %v175 = vld [vmem:[%s1 + $0x2a8] sm:$0xff]
  %v176 = vld [vmem:[%s1 + $0x2b0] sm:$0xff]
  %v177 = vld [vmem:[%s1 + $0x2b8] sm:$0xff]
  %v178 = vld [vmem:[%s1 + $0x2c0] sm:$0xff]
  %v179 = vld [vmem:[%s1 + $0x2c8] sm:$0xff]
  %v180 = vld [vmem:[%s1 + $0x2d0] sm:$0xff]
  %v181 = vld [vmem:[%s1 + $0x2d8] sm:$0xff]
  %v182 = vld [vmem:[%s1 + $0x2e0] sm:$0xff]
  %v183 = vld [vmem:[%s1 + $0x2e8] sm:$0xff]
  %v184 = vld [vmem:[%s1 + $0x2f0] sm:$0xff]
  %v185 = vld [vmem:[%s1 + $0x2f8] sm:$0xff]
  %v186 = vld [vmem:[%s1 + $0x300] sm:$0xff]
  %v187 = vld [vmem:[%s1 + $0x308] sm:$0xff]
  %v188 = vld [vmem:[%s1 + $0x310] sm:$0xff]
  %v189 = vld [vmem:[%s1 + $0x318] sm:$0xff]
  %v190 = vld [vmem:[%s1 + $0x320] sm:$0xff]
  %v191 = vld [vmem:[%s1 + $0x328] sm:$0xff]
  %v192 = vld [vmem:[%s1 + $0x330] sm:$0xff]
  %v193 = vld [vmem:[%s1 + $0x338] sm:$0xff]
  %v194 = vld [vmem:[%s1 + $0x340] sm:$0xff]
  %v195 = vld [vmem:[%s1 + $0x348] sm:$0xff]
  %v196 = vld [vmem:[%s1 + $0x350] sm:$0xff]
  %v197 = vld [vmem:[%s1 + $0x358] sm:$0xff]
  %v198 = vld [vmem:[%s1 + $0x360] sm:$0xff]
  %v199 = vld [vmem:[%s1 + $0x368] sm:$0xff]
  %v200 = vld [vmem:[%s1 + $0x370] sm:$0xff]
  %v201 = vld [vmem:[%s1 + $0x378] sm:$0xff]
  %v202 = vld [vmem:[%s1 + $0x380] sm:$0xff]
  %v203 = vld [vmem:[%s1 + $0x388] sm:$0xff]
  %v204 = vld [vmem:[%s1 + $0x390] sm:$0xff]
  %v205 = vld [vmem:[%s1 + $0x398] sm:$0xff]
  %v206 = vld [vmem:[%s1 + $0x3a0] sm:$0xff]
  %v207 = vld [vmem:[%s1 + $0x3a8] sm:$0xff]
  %v208 = vld [vmem:[%s1 + $0x3b0] sm:$0xff]
  %v209 = vld [vmem:[%s1 + $0x3b8] sm:$0xff]
  %v210 = vld [vmem:[%s1 + $0x3c0] sm:$0xff]
  %v211 = vld [vmem:[%s1 + $0x3c8] sm:$0xff]
  %v212 = vld [vmem:[%s1 + $0x3d0] sm:$0xff]
  %v213 = vld [vmem:[%s1 + $0x3d8] sm:$0xff]
  %v214 = vld [vmem:[%s1 + $0x3e0] sm:$0xff]
  %v215 = vld [vmem:[%s1 + $0x3e8] sm:$0xff]
  %v216 = vld [vmem:[%s1 + $0x3f0] sm:$0xff]
  %v217 = vld [vmem:[%s1 + $0x3f8] sm:$0xff]
  %v218 = vld [vmem:[%s1 + $0x400] sm:$0xff]
  %v219 = vld [vmem:[%s1 + $0x408] sm:$0xff]
  %v220 = vld [vmem:[%s1 + $0x410] sm:$0xff]
  %v221 = vld [vmem:[%s1 + $0x418] sm:$0xff]
  %v222 = vld [vmem:[%s1 + $0x420] sm:$0xff]
  %v223 = vld [vmem:[%s1 + $0x428] sm:$0xff]
  %v224 = vld [vmem:[%s1 + $0x430] sm:$0xff]
  %v225 = vld [vmem:[%s1 + $0x438] sm:$0xff]
  %v226 = vld [vmem:[%s1 + $0x440] sm:$0xff]
  %v227 = vld [vmem:[%s1 + $0x448] sm:$0xff]
  %v228 = vld [vmem:[%s1 + $0x450] sm:$0xff]
  %v229 = vld [vmem:[%s1 + $0x458] sm:$0xff]
  %v230 = vld [vmem:[%s1 + $0x460] sm:$0xff]
  %v231 = vld [vmem:[%s1 + $0x468] sm:$0xff]
  %v232 = vld [vmem:[%s1 + $0x470] sm:$0xff]
  %v233 = vld [vmem:[%s1 + $0x478] sm:$0xff]
  %v234 = vld [vmem:[%s1 + $0x480] sm:$0xff]
  %v235 = vld [vmem:[%s1 + $0x488] sm:$0xff]
  %v236 = vld [vmem:[%s1 + $0x490] sm:$0xff]
  %v237 = vld [vmem:[%s1 + $0x498] sm:$0xff]
  %v238 = vld [vmem:[%s1 + $0x4a0] sm:$0xff]
  %v239 = vld [vmem:[%s1 + $0x4a8] sm:$0xff]
  %v240 = vld [vmem:[%s1 + $0x4b0] sm:$0xff]
  %v241 = vld [vmem:[%s1 + $0x4b8] sm:$0xff]
  %v242 = vld [vmem:[%s1 + $0x4c0] sm:$0xff]
  %v243 = vld [vmem:[%s1 + $0x4c8] sm:$0xff]
  %v244 = vld [vmem:[%s1 + $0x4d0] sm:$0xff]
  %v245 = vld [vmem:[%s1 + $0x4d8] sm:$0xff]
  %v246 = vld [vmem:[%s1 + $0x4e0] sm:$0xff]
  %v247 = vld [vmem:[%s1 + $0x4e8] sm:$0xff]
  %v248 = vld [vmem:[%s1 + $0x4f0] sm:$0xff]
  %v249 = vld [vmem:[%s1 + $0x4f8] sm:$0xff]
  %v250 = vld [vmem:[%s1 + $0x500] sm:$0xff]
  %v251 = vld [vmem:[%s1 + $0x508] sm:$0xff]
  %v252 = vld [vmem:[%s1 + $0x510] sm:$0xff]
  %v253 = vld [vmem:[%s1 + $0x518] sm:$0xff]
  %v254 = vld [vmem:[%s1 + $0x520] sm:$0xff]
  %v255 = vld [vmem:[%s1 + $0x528] sm:$0xff]
  %v256 = vld [vmem:[%s1 + $0x530] sm:$0xff]
  %v257 = vld [vmem:[%s1 + $0x538] sm:$0xff]
  %v258 = vld [vmem:[%s1 + $0x540] sm:$0xff]
  %v259 = vld [vmem:[%s1 + $0x548] sm:$0xff]
  %v260 = vld [vmem:[%s1 + $0x550] sm:$0xff]
  %v261 = vld [vmem:[%s1 + $0x558] sm:$0xff]
  %v262 = vld [vmem:[%s1 + $0x560] sm:$0xff]
  %v263 = vld [vmem:[%s1 + $0x568] sm:$0xff]
  %v264 = vld [vmem:[%s1 + $0x570] sm:$0xff]
  %v265 = vld [vmem:[%s1 + $0x578] sm:$0xff]
  %v266 = vld [vmem:[%s1 + $0x580] sm:$0xff]
  %v267 = vld [vmem:[%s1 + $0x588] sm:$0xff]
  %v268 = vld [vmem:[%s1 + $0x590] sm:$0xff]
  %v269 = vld [vmem:[%s1 + $0x598] sm:$0xff]
  %v270 = vld [vmem:[%s1 + $0x5a0] sm:$0xff]
  %v271 = vld [vmem:[%s1 + $0x5a8] sm:$0xff]
  %v272 = vld [vmem:[%s1 + $0x5b0] sm:$0xff]
  %v273 = vld [vmem:[%s1 + $0x5b8] sm:$0xff]
  %v274 = vld [vmem:[%s1 + $0x5c0] sm:$0xff]
  %v275 = vld [vmem:[%s1 + $0x5c8] sm:$0xff]
  %v276 = vld [vmem:[%s1 + $0x5d0] sm:$0xff]
  %v277 = vld [vmem:[%s1 + $0x5d8] sm:$0xff]
  %v278 = vld [vmem:[%s1 + $0x5e0] sm:$0xff]
  %v279 = vld [vmem:[%s1 + $0x5e8] sm:$0xff]
  %v280 = vld [vmem:[%s1 + $0x5f0] sm:$0xff]
  %v281 = vld [vmem:[%s1 + $0x5f8] sm:$0xff]
  %v282 = vld [vmem:[%s1 + $0x600] sm:$0xff]
  %v283 = vld [vmem:[%s1 + $0x608] sm:$0xff]
  %v284 = vld [vmem:[%s1 + $0x610] sm:$0xff]
  %v285 = vld [vmem:[%s1 + $0x618] sm:$0xff]
  %v286 = vld [vmem:[%s1 + $0x620] sm:$0xff]
  %v287 = vld [vmem:[%s1 + $0x628] sm:$0xff]
  %v288 = vld [vmem:[%s1 + $0x630] sm:$0xff]
  %v289 = vld [vmem:[%s1 + $0x638] sm:$0xff]
  %v290 = vld [vmem:[%s1 + $0x640] sm:$0xff]
  %v291 = vld [vmem:[%s1 + $0x648] sm:$0xff]
  %v292 = vld [vmem:[%s1 + $0x650] sm:$0xff]
  %v293 = vld [vmem:[%s1 + $0x658] sm:$0xff]
  %v294 = vld [vmem:[%s1 + $0x660] sm:$0xff]
  %v295 = vld [vmem:[%s1 + $0x668] sm:$0xff]
  %v296 = vld [vmem:[%s1 + $0x670] sm:$0xff]
  %v297 = vld [vmem:[%s1 + $0x678] sm:$0xff]
  %v298 = vld [vmem:[%s1 + $0x680] sm:$0xff]
  %v299 = vld [vmem:[%s1 + $0x688] sm:$0xff]
  %v300 = vld [vmem:[%s1 + $0x690] sm:$0xff]
  %v301 = vld [vmem:[%s1 + $0x698] sm:$0xff]
  %v302 = vld [vmem:[%s1 + $0x6a0] sm:$0xff]
  %v303 = vld [vmem:[%s1 + $0x6a8] sm:$0xff]
  %v304 = vld [vmem:[%s1 + $0x6b0] sm:$0xff]
  %v305 = vld [vmem:[%s1 + $0x6b8] sm:$0xff]
  %v306 = vld [vmem:[%s1 + $0x6c0] sm:$0xff]
  %v307 = vld [vmem:[%s1 + $0x6c8] sm:$0xff]
  %v308 = vld [vmem:[%s1 + $0x6d0] sm:$0xff]
  %v309 = vld [vmem:[%s1 + $0x6d8] sm:$0xff]
  %v310 = vld [vmem:[%s1 + $0x6e0] sm:$0xff]
  %v311 = vld [vmem:[%s1 + $0x6e8] sm:$0xff]
  %v312 = vld [vmem:[%s1 + $0x6f0] sm:$0xff]
  %v313 = vld [vmem:[%s1 + $0x6f8] sm:$0xff]
  %v314 = vld [vmem:[%s1 + $0x700] sm:$0xff]
  %v315 = vld [vmem:[%s1 + $0x708] sm:$0xff]
  %v316 = vld [vmem:[%s1 + $0x710] sm:$0xff]
  %v317 = vld [vmem:[%s1 + $0x718] sm:$0xff]
  %v318 = vld [vmem:[%s1 + $0x720] sm:$0xff]
  %v319 = vld [vmem:[%s1 + $0x728] sm:$0xff]
  %v320 = vld [vmem:[%s1 + $0x730] sm:$0xff]
  %v321 = vld [vmem:[%s1 + $0x738] sm:$0xff]
  %v322 = vld [vmem:[%s1 + $0x740] sm:$0xff]
  %v323 = vld [vmem:[%s1 + $0x748] sm:$0xff]
  %v324 = vld [vmem:[%s1 + $0x750] sm:$0xff]
  %v325 = vld [vmem:[%s1 + $0x758] sm:$0xff]
  %v326 = vld [vmem:[%s1 + $0x760] sm:$0xff]
  %v327 = vld [vmem:[%s1 + $0x768] sm:$0xff]
  %v328 = vld [vmem:[%s1 + $0x770] sm:$0xff]
  %v329 = vld [vmem:[%s1 + $0x778] sm:$0xff]
  %v330 = vld [vmem:[%s1 + $0x780] sm:$0xff]
  %v331 = vld [vmem:[%s1 + $0x788] sm:$0xff]
  %v332 = vld [vmem:[%s1 + $0x790] sm:$0xff]
  %v333 = vld [vmem:[%s1 + $0x798] sm:$0xff]
  %v334 = vld [vmem:[%s1 + $0x7a0] sm:$0xff]
  %v335 = vld [vmem:[%s1 + $0x7a8] sm:$0xff]
  %v336 = vld [vmem:[%s1 + $0x7b0] sm:$0xff]
  %v337 = vld [vmem:[%s1 + $0x7b8] sm:$0xff]
  %v338 = vld [vmem:[%s1 + $0x7c0] sm:$0xff]
  %v339 = vld [vmem:[%s1 + $0x7c8] sm:$0xff]
  %v340 = vld [vmem:[%s1 + $0x7d0] sm:$0xff]
  %v341 = vld [vmem:[%s1 + $0x7d8] sm:$0xff]
  %v342 = vld [vmem:[%s1 + $0x7e0] sm:$0xff]
  %v343 = vld [vmem:[%s1 + $0x7e8] sm:$0xff]
  %v344 = vld [vmem:[%s1 + $0x7f0] sm:$0xff]
  %v345 = vld [vmem:[%s1 + $0x7f8] sm:$0xff]
  %v346 = vld [vmem:[%s1 + $0x800] sm:$0xff]
  %v347 = vld [vmem:[%s1 + $0x808] sm:$0xff]
  %v348 = vld [vmem:[%s1 + $0x810] sm:$0xff]
  %v349 = vld [vmem:[%s1 + $0x818] sm:$0xff]
  %v350 = vld [vmem:[%s1 + $0x820] sm:$0xff]
  %v351 = vld [vmem:[%s1 + $0x828] sm:$0xff]
  %v352 = vld [vmem:[%s1 + $0x830] sm:$0xff]
  %v353 = vld [vmem:[%s1 + $0x838] sm:$0xff]
  %v354 = vld [vmem:[%s1 + $0x840] sm:$0xff]
  %v355 = vld [vmem:[%s1 + $0x848] sm:$0xff]
  %v356 = vld [vmem:[%s1 + $0x850] sm:$0xff]
  %v357 = vld [vmem:[%s1 + $0x858] sm:$0xff]
  %v358 = vld [vmem:[%s1 + $0x860] sm:$0xff]
  %v359 = vld [vmem:[%s1 + $0x868] sm:$0xff]
  %v360 = vld [vmem:[%s1 + $0x870] sm:$0xff]
  %v361 = vld [vmem:[%s1 + $0x878] sm:$0xff]
  %v362 = vld [vmem:[%s1 + $0x880] sm:$0xff]
  %v363 = vld [vmem:[%s1 + $0x888] sm:$0xff]
  %v364 = vld [vmem:[%s1 + $0x890] sm:$0xff]
  %v365 = vld [vmem:[%s1 + $0x898] sm:$0xff]
  %v366 = vld [vmem:[%s1 + $0x8a0] sm:$0xff]
  %v367 = vld [vmem:[%s1 + $0x8a8] sm:$0xff]
  %v368 = vld [vmem:[%s1 + $0x8b0] sm:$0xff]
  %v369 = vld [vmem:[%s1 + $0x8b8] sm:$0xff]
  %v370 = vld [vmem:[%s1 + $0x8c0] sm:$0xff]
  %v371 = vld [vmem:[%s1 + $0x8c8] sm:$0xff]
  %v372 = vld [vmem:[%s1 + $0x8d0] sm:$0xff]
  %v373 = vld [vmem:[%s1 + $0x8d8] sm:$0xff]
  %v374 = vld [vmem:[%s1 + $0x8e0] sm:$0xff]
  %v375 = vld [vmem:[%s1 + $0x8e8] sm:$0xff]
  %v376 = vld [vmem:[%s1 + $0x8f0] sm:$0xff]
  %v377 = vld [vmem:[%s1 + $0x8f8] sm:$0xff]
  %v378 = vld [vmem:[%s1 + $0x900] sm:$0xff]
  %v379 = vld [vmem:[%s1 + $0x908] sm:$0xff]
  %v380 = vld [vmem:[%s1 + $0x910] sm:$0xff]
  %v381 = vld [vmem:[%s1 + $0x918] sm:$0xff]
  %v382 = vld [vmem:[%s1 + $0x920] sm:$0xff]
  %v383 = vld [vmem:[%s1 + $0x928] sm:$0xff]
  %v384 = vld [vmem:[%s1 + $0x930] sm:$0xff]
  %v385 = vld [vmem:[%s1 + $0x938] sm:$0xff]
  %v386 = vld [vmem:[%s1 + $0x940] sm:$0xff]
  %v387 = vld [vmem:[%s1 + $0x948] sm:$0xff]
  %v388 = vld [vmem:[%s1 + $0x950] sm:$0xff]
  %v389 = vld [vmem:[%s1 + $0x958] sm:$0xff]
  %v390 = vld [vmem:[%s1 + $0x960] sm:$0xff]
  %v391 = vld [vmem:[%s1 + $0x968] sm:$0xff]
  %v392 = vld [vmem:[%s1 + $0x970] sm:$0xff]
  %v393 = vld [vmem:[%s1 + $0x978] sm:$0xff]
  %v394 = vld [vmem:[%s1 + $0x980] sm:$0xff]
  %v395 = vld [vmem:[%s1 + $0x988] sm:$0xff]
  %v396 = vld [vmem:[%s1 + $0x990] sm:$0xff]
  %v397 = vld [vmem:[%s1 + $0x998] sm:$0xff]
  %v398 = vld [vmem:[%s1 + $0x9a0] sm:$0xff]
  %v399 = vld [vmem:[%s1 + $0x9a8] sm:$0xff]
  %v400 = vld [vmem:[%s1 + $0x9b0] sm:$0xff]
  %v401 = vld [vmem:[%s1 + $0x9b8] sm:$0xff]
  %v402 = vld [vmem:[%s1 + $0x9c0] sm:$0xff]
  %v403 = vld [vmem:[%s1 + $0x9c8] sm:$0xff]
  %v404 = vld [vmem:[%s1 + $0x9d0] sm:$0xff]
  %v405 = vld [vmem:[%s1 + $0x9d8] sm:$0xff]
  %v406 = vld [vmem:[%s1 + $0x9e0] sm:$0xff]
  %v407 = vld [vmem:[%s1 + $0x9e8] sm:$0xff]
  %v408 = vld [vmem:[%s1 + $0x9f0] sm:$0xff]
  %v409 = vld [vmem:[%s1 + $0x9f8] sm:$0xff]
  %v410 = vld [vmem:[%s1 + $0xa00] sm:$0xff]
  %v411 = vld [vmem:[%s1 + $0xa08] sm:$0xff]
  %v412 = vld [vmem:[%s1 + $0xa10] sm:$0xff]
  %v413 = vld [vmem:[%s1 + $0xa18] sm:$0xff]
  %v414 = vld [vmem:[%s1 + $0xa20] sm:$0xff]
  %v415 = vld [vmem:[%s1 + $0xa28] sm:$0xff]
  %v416 = vld [vmem:[%s1 + $0xa30] sm:$0xff]
  %v417 = vld [vmem:[%s1 + $0xa38] sm:$0xff]
  %v418 = vld [vmem:[%s1 + $0xa40] sm:$0xff]
  %v419 = vld [vmem:[%s1 + $0xa48] sm:$0xff]
  %v420 = vld [vmem:[%s1 + $0xa50] sm:$0xff]
  %v421 = vld [vmem:[%s1 + $0xa58] sm:$0xff]
  %v422 = vld [vmem:[%s1 + $0xa60] sm:$0xff]
  %v423 = vld [vmem:[%s1 + $0xa68] sm:$0xff]
  %v424 = vld [vmem:[%s1 + $0xa70] sm:$0xff]
  %v425 = vld [vmem:[%s1 + $0xa78] sm:$0xff]
  %v426 = vld [vmem:[%s1 + $0xa80] sm:$0xff]
  %v427 = vld [vmem:[%s1 + $0xa88] sm:$0xff]
  %v428 = vld [vmem:[%s1 + $0xa90] sm:$0xff]
  %v429 = vld [vmem:[%s1 + $0xa98] sm:$0xff]
  %v430 = vld [vmem:[%s1 + $0xaa0] sm:$0xff]
  %v431 = vld [vmem:[%s1 + $0xaa8] sm:$0xff]
  %v432 = vld [vmem:[%s1 + $0xab0] sm:$0xff]
  %v433 = vld [vmem:[%s1 + $0xab8] sm:$0xff]
  %v434 = vld [vmem:[%s1 + $0xac0] sm:$0xff]
  %v435 = vld [vmem:[%s1 + $0xac8] sm:$0xff]
  %v436 = vld [vmem:[%s1 + $0xad0] sm:$0xff]
  %v437 = vld [vmem:[%s1 + $0xad8] sm:$0xff]
  %v438 = vld [vmem:[%s1 + $0xae0] sm:$0xff]
  %v439 = vld [vmem:[%s1 + $0xae8] sm:$0xff]
  %v440 = vld [vmem:[%s1 + $0xaf0] sm:$0xff]
  %v441 = vld [vmem:[%s1 + $0xaf8] sm:$0xff]
  %v442 = vld [vmem:[%s1 + $0xb00] sm:$0xff]
  %v443 = vld [vmem:[%s1 + $0xb08] sm:$0xff]
  %v444 = vld [vmem:[%s1 + $0xb10] sm:$0xff]
  %v445 = vld [vmem:[%s1 + $0xb18] sm:$0xff]
  %v446 = vld [vmem:[%s1 + $0xb20] sm:$0xff]
  %v447 = vld [vmem:[%s1 + $0xb28] sm:$0xff]
  %v448 = vld [vmem:[%s1 + $0xb30] sm:$0xff]
  %v449 = vld [vmem:[%s1 + $0xb38] sm:$0xff]
  %v450 = vld [vmem:[%s1 + $0xb40] sm:$0xff]
  %v451 = vld [vmem:[%s1 + $0xb48] sm:$0xff]
  %v452 = vld [vmem:[%s1 + $0xb50] sm:$0xff]
  %v453 = vld [vmem:[%s1 + $0xb58] sm:$0xff]
  %v454 = vld [vmem:[%s1 + $0xb60] sm:$0xff]
  %v455 = vld [vmem:[%s1 + $0xb68] sm:$0xff]
  %v456 = vld [vmem:[%s1 + $0xb70] sm:$0xff]
  %v457 = vld [vmem:[%s1 + $0xb78] sm:$0xff]
  %v458 = vld [vmem:[%s1 + $0xb80] sm:$0xff]
  %v459 = vld [vmem:[%s1 + $0xb88] sm:$0xff]
  %v460 = vld [vmem:[%s1 + $0xb90] sm:$0xff]
  %v461 = vld [vmem:[%s1 + $0xb98] sm:$0xff]
  %v462 = vld [vmem:[%s1 + $0xba0] sm:$0xff]
  %v463 = vld [vmem:[%s1 + $0xba8] sm:$0xff]
  %v464 = vld [vmem:[%s1 + $0xbb0] sm:$0xff]
  %v465 = vld [vmem:[%s1 + $0xbb8] sm:$0xff]
  %v466 = vld [vmem:[%s1 + $0xbc0] sm:$0xff]
  %v467 = vld [vmem:[%s1 + $0xbc8] sm:$0xff]
  %v468 = vld [vmem:[%s1 + $0xbd0] sm:$0xff]
  %v469 = vld [vmem:[%s1 + $0xbd8] sm:$0xff]
  %v470 = vld [vmem:[%s1 + $0xbe0] sm:$0xff]
  %v471 = vld [vmem:[%s1 + $0xbe8] sm:$0xff]
  %v472 = vld [vmem:[%s1 + $0xbf0] sm:$0xff]
  %v473 = vld [vmem:[%s1 + $0xbf8] sm:$0xff]
  %v474 = vld [vmem:[%s1 + $0xc00] sm:$0xff]
  %v475 = vld [vmem:[%s1 + $0xc08] sm:$0xff]
  %v476 = vld [vmem:[%s1 + $0xc10] sm:$0xff]
  %v477 = vld [vmem:[%s1 + $0xc18] sm:$0xff]
  %v478 = vld [vmem:[%s1 + $0xc20] sm:$0xff]
  %v479 = vld [vmem:[%s1 + $0xc28] sm:$0xff]
  %v480 = vld [vmem:[%s1 + $0xc30] sm:$0xff]
  %v481 = vld [vmem:[%s1 + $0xc38] sm:$0xff]
  %v482 = vld [vmem:[%s1 + $0xc40] sm:$0xff]
  %v483 = vld [vmem:[%s1 + $0xc48] sm:$0xff]
  %v484 = vld [vmem:[%s1 + $0xc50] sm:$0xff]
  %v485 = vld [vmem:[%s1 + $0xc58] sm:$0xff]
  %v486 = vld [vmem:[%s1 + $0xc60] sm:$0xff]
  %v487 = vld [vmem:[%s1 + $0xc68] sm:$0xff]
  %v488 = vld [vmem:[%s1 + $0xc70] sm:$0xff]
  %v489 = vld [vmem:[%s1 + $0xc78] sm:$0xff]
  %v490 = vld [vmem:[%s1 + $0xc80] sm:$0xff]
  %v491 = vld [vmem:[%s1 + $0xc88] sm:$0xff]
  %v492 = vld [vmem:[%s1 + $0xc90] sm:$0xff]
  %v493 = vld [vmem:[%s1 + $0xc98] sm:$0xff]
  %v494 = vld [vmem:[%s1 + $0xca0] sm:$0xff]
  %v495 = vld [vmem:[%s1 + $0xca8] sm:$0xff]
  %v496 = vld [vmem:[%s1 + $0xcb0] sm:$0xff]
  %v497 = vld [vmem:[%s1 + $0xcb8] sm:$0xff]
  %v498 = vld [vmem:[%s1 + $0xcc0] sm:$0xff]
  %v499 = vld [vmem:[%s1 + $0xcc8] sm:$0xff]
  %v500 = vld [vmem:[%s1 + $0xcd0] sm:$0xff]
  %v501 = vld [vmem:[%s1 + $0xcd8] sm:$0xff]
  %v502 = vld [vmem:[%s1 + $0xce0] sm:$0xff]
  %v503 = vld [vmem:[%s1 + $0xce8] sm:$0xff]
  %v504 = vld [vmem:[%s1 + $0xcf0] sm:$0xff]
  %v505 = vld [vmem:[%s1 + $0xcf8] sm:$0xff]
  %v506 = vld [vmem:[%s1 + $0xd00] sm:$0xff]
  %v507 = vld [vmem:[%s1 + $0xd08] sm:$0xff]
  %v508 = vld [vmem:[%s1 + $0xd10] sm:$0xff]
  %v509 = vld [vmem:[%s1 + $0xd18] sm:$0xff]
  %v510 = vld [vmem:[%s1 + $0xd20] sm:$0xff]
  %v511 = vld [vmem:[%s1 + $0xd28] sm:$0xff]
  %v512 = vld [vmem:[%s1 + $0xd30] sm:$0xff]
  %v513 = vld [vmem:[%s1 + $0xd38] sm:$0xff]
  %v514 = vld [vmem:[%s1 + $0xd40] sm:$0xff]
  %v515 = vld [vmem:[%s1 + $0xd48] sm:$0xff]
  %v516 = vld [vmem:[%s1 + $0xd50] sm:$0xff]
  %v517 = vld [vmem:[%s1 + $0xd58] sm:$0xff]
  %v518 = vld [vmem:[%s1 + $0xd60] sm:$0xff]
  %v519 = vld [vmem:[%s1 + $0xd68] sm:$0xff]
  %v520 = vld [vmem:[%s1 + $0xd70] sm:$0xff]
  %v521 = vld [vmem:[%s1 + $0xd78] sm:$0xff]
  %v522 = vld [vmem:[%s1 + $0xd80] sm:$0xff]
  %v523 = vld [vmem:[%s1 + $0xd88] sm:$0xff]
  %v524 = vld [vmem:[%s1 + $0xd90] sm:$0xff]
  %v525 = vld [vmem:[%s1 + $0xd98] sm:$0xff]
  %v526 = vld [vmem:[%s1 + $0xda0] sm:$0xff]
  %v527 = vld [vmem:[%s1 + $0xda8] sm:$0xff]
  %v528 = vld [vmem:[%s1 + $0xdb0] sm:$0xff]
  %v529 = vld [vmem:[%s1 + $0xdb8] sm:$0xff]
  %v530 = vld [vmem:[%s1 + $0xdc0] sm:$0xff]
  %v531 = vld [vmem:[%s1 + $0xdc8] sm:$0xff]
  %v532 = vld [vmem:[%s1 + $0xdd0] sm:$0xff]
  %v533 = vld [vmem:[%s1 + $0xdd8] sm:$0xff]
  %v534 = vld [vmem:[%s1 + $0xde0] sm:$0xff]
  %v535 = vld [vmem:[%s1 + $0xde8] sm:$0xff]
  %v536 = vld [vmem:[%s1 + $0xdf0] sm:$0xff]
  %v537 = vld [vmem:[%s1 + $0xdf8] sm:$0xff]
  %v538 = vld [vmem:[%s1 + $0xe00] sm:$0xff]
  %v539 = vld [vmem:[%s1 + $0xe08] sm:$0xff]
  %v540 = vld [vmem:[%s1 + $0xe10] sm:$0xff]
  %v541 = vld [vmem:[%s1 + $0xe18] sm:$0xff]
  %v542 = vld [vmem:[%s1 + $0xe20] sm:$0xff]
  %v543 = vld [vmem:[%s1 + $0xe28] sm:$0xff]
  %v544 = vld [vmem:[%s1 + $0xe30] sm:$0xff]
  %v545 = vld [vmem:[%s1 + $0xe38] sm:$0xff]
  %v546 = vld [vmem:[%s1 + $0xe40] sm:$0xff]
  %v547 = vld [vmem:[%s1 + $0xe48] sm:$0xff]
  %v548 = vld [vmem:[%s1 + $0xe50] sm:$0xff]
  %v549 = vld [vmem:[%s1 + $0xe58] sm:$0xff]
  %v550 = vld [vmem:[%s1 + $0xe60] sm:$0xff]
  %v551 = vld [vmem:[%s1 + $0xe68] sm:$0xff]
  %v552 = vld [vmem:[%s1 + $0xe70] sm:$0xff]
  %v553 = vld [vmem:[%s1 + $0xe78] sm:$0xff]
  %v554 = vld [vmem:[%s1 + $0xe80] sm:$0xff]
  %v555 = vld [vmem:[%s1 + $0xe88] sm:$0xff]
  %v556 = vld [vmem:[%s1 + $0xe90] sm:$0xff]
  %v557 = vld [vmem:[%s1 + $0xe98] sm:$0xff]
  %v558 = vld [vmem:[%s1 + $0xea0] sm:$0xff]
  %v559 = vld [vmem:[%s1 + $0xea8] sm:$0xff]
  %v560 = vld [vmem:[%s1 + $0xeb0] sm:$0xff]
  %v561 = vld [vmem:[%s1 + $0xeb8] sm:$0xff]
  %v562 = vld [vmem:[%s1 + $0xec0] sm:$0xff]
  %v563 = vld [vmem:[%s1 + $0xec8] sm:$0xff]
  %v564 = vld [vmem:[%s1 + $0xed0] sm:$0xff]
  %v565 = vld [vmem:[%s1 + $0xed8] sm:$0xff]
  %v566 = vld [vmem:[%s1 + $0xee0] sm:$0xff]
  %v567 = vld [vmem:[%s1 + $0xee8] sm:$0xff]
  %v568 = vld [vmem:[%s1 + $0xef0] sm:$0xff]
  %v569 = vld [vmem:[%s1 + $0xef8] sm:$0xff]
  %v570 = vld [vmem:[%s1 + $0xf00] sm:$0xff]
  %v571 = vld [vmem:[%s1 + $0xf08] sm:$0xff]
  %v572 = vld [vmem:[%s1 + $0xf10] sm:$0xff]
  %v573 = vld [vmem:[%s1 + $0xf18] sm:$0xff]
  %v574 = vld [vmem:[%s1 + $0xf20] sm:$0xff]
  %v575 = vld [vmem:[%s1 + $0xf28] sm:$0xff]
  %v576 = vld [vmem:[%s1 + $0xf30] sm:$0xff]
  %v577 = vld [vmem:[%s1 + $0xf38] sm:$0xff]
  %v578 = vld [vmem:[%s1 + $0xf40] sm:$0xff]
  %v579 = vld [vmem:[%s1 + $0xf48] sm:$0xff]
  %v580 = vld [vmem:[%s1 + $0xf50] sm:$0xff]
  %v581 = vld [vmem:[%s1 + $0xf58] sm:$0xff]
  %v582 = vld [vmem:[%s1 + $0xf60] sm:$0xff]
  %v583 = vld [vmem:[%s1 + $0xf68] sm:$0xff]
  %v584 = vld [vmem:[%s1 + $0xf70] sm:$0xff]
  %v585 = vld [vmem:[%s1 + $0xf78] sm:$0xff]
  %v586 = vld [vmem:[%s1 + $0xf80] sm:$0xff]
  %v587 = vld [vmem:[%s1 + $0xf88] sm:$0xff]
  %v588 = vld [vmem:[%s1 + $0xf90] sm:$0xff]
  %v589 = vld [vmem:[%s1 + $0xf98] sm:$0xff]
  %v590 = vld [vmem:[%s1 + $0xfa0] sm:$0xff]
  %v591 = vld [vmem:[%s1 + $0xfa8] sm:$0xff]
  %v592 = vld [vmem:[%s1 + $0xfb0] sm:$0xff]
  %v593 = vld [vmem:[%s1 + $0xfb8] sm:$0xff]
  %v594 = vld [vmem:[%s1 + $0xfc0] sm:$0xff]
  %v595 = vld [vmem:[%s1 + $0xfc8] sm:$0xff]
  %v596 = vld [vmem:[%s1 + $0xfd0] sm:$0xff]
  %v597 = vld [vmem:[%s1 + $0xfd8] sm:$0xff]
  %v598 = vld [vmem:[%s1 + $0xfe0] sm:$0xff]
  %v599 = vld [vmem:[%s1 + $0xfe8] sm:$0xff]
  %v600 = vld [vmem:[%s1 + $0xff0] sm:$0xff]
  %v601 = vld [vmem:[%s1 + $0xff8] sm:$0xff]
  %v602 = vld [vmem:[%s2] sm:$0x3]
  %v604 = vlaneseq
  %v605 = vshrl.u32 %v604, 7
  %v606 = vsub.s32 0, %v605
  %v607 = vrot.slane %v602, %v606
  %v608 = vlaneseq
  %v609 = vshrl.u32 %v608, 7
  %v610 = vsub.s32 1, %v609
  %v611 = vrot.slane %v602, %v610
  %v1126 = vunpack.c.l.b16 %v90
  %v1127 = vunpack.c.h.b16 %v90
  %v1128 = vunpack.c.l.b16 %v91
  %v1129 = vunpack.c.h.b16 %v91
  %v1130 = vunpack.c.l.b16 %v92
  %v1131 = vunpack.c.h.b16 %v92
  %v1132 = vunpack.c.l.b16 %v93
  %v1133 = vunpack.c.h.b16 %v93
  %v1134 = vunpack.c.l.b16 %v94
  %v1135 = vunpack.c.h.b16 %v94
  %v1136 = vunpack.c.l.b16 %v95
  %v1137 = vunpack.c.h.b16 %v95
  %v1138 = vunpack.c.l.b16 %v96
  %v1139 = vunpack.c.h.b16 %v96
  %v1140 = vunpack.c.l.b16 %v97
  %v1141 = vunpack.c.h.b16 %v97
  %v1142 = vunpack.c.l.b16 %v98
  %v1143 = vunpack.c.h.b16 %v98
  %v1144 = vunpack.c.l.b16 %v99
  %v1145 = vunpack.c.h.b16 %v99
  %v1146 = vunpack.c.l.b16 %v100
  %v1147 = vunpack.c.h.b16 %v100
  %v1148 = vunpack.c.l.b16 %v101
  %v1149 = vunpack.c.h.b16 %v101
  %v1150 = vunpack.c.l.b16 %v102
  %v1151 = vunpack.c.h.b16 %v102
  %v1152 = vunpack.c.l.b16 %v103
  %v1153 = vunpack.c.h.b16 %v103
  %v1154 = vunpack.c.l.b16 %v104
  %v1155 = vunpack.c.h.b16 %v104
  %v1156 = vunpack.c.l.b16 %v105
  %v1157 = vunpack.c.h.b16 %v105
  %v1158 = vunpack.c.l.b16 %v106
  %v1159 = vunpack.c.h.b16 %v106
  %v1160 = vunpack.c.l.b16 %v107
  %v1161 = vunpack.c.h.b16 %v107
  %v1162 = vunpack.c.l.b16 %v108
  %v1163 = vunpack.c.h.b16 %v108
  %v1164 = vunpack.c.l.b16 %v109
  %v1165 = vunpack.c.h.b16 %v109
  %v1166 = vunpack.c.l.b16 %v110
  %v1167 = vunpack.c.h.b16 %v110
  %v1168 = vunpack.c.l.b16 %v111
  %v1169 = vunpack.c.h.b16 %v111
  %v1170 = vunpack.c.l.b16 %v112
  %v1171 = vunpack.c.h.b16 %v112
  %v1172 = vunpack.c.l.b16 %v113
  %v1173 = vunpack.c.h.b16 %v113
  %v1174 = vunpack.c.l.b16 %v114
  %v1175 = vunpack.c.h.b16 %v114
  %v1176 = vunpack.c.l.b16 %v115
  %v1177 = vunpack.c.h.b16 %v115
  %v1178 = vunpack.c.l.b16 %v116
  %v1179 = vunpack.c.h.b16 %v116
  %v1180 = vunpack.c.l.b16 %v117
  %v1181 = vunpack.c.h.b16 %v117
  %v1182 = vunpack.c.l.b16 %v118
  %v1183 = vunpack.c.h.b16 %v118
  %v1184 = vunpack.c.l.b16 %v119
  %v1185 = vunpack.c.h.b16 %v119
  %v1186 = vunpack.c.l.b16 %v120
  %v1187 = vunpack.c.h.b16 %v120
  %v1188 = vunpack.c.l.b16 %v121
  %v1189 = vunpack.c.h.b16 %v121
  %v1190 = vunpack.c.l.b16 %v122
  %v1191 = vunpack.c.h.b16 %v122
  %v1192 = vunpack.c.l.b16 %v123
  %v1193 = vunpack.c.h.b16 %v123
  %v1194 = vunpack.c.l.b16 %v124
  %v1195 = vunpack.c.h.b16 %v124
  %v1196 = vunpack.c.l.b16 %v125
  %v1197 = vunpack.c.h.b16 %v125
  %v1198 = vunpack.c.l.b16 %v126
  %v1199 = vunpack.c.h.b16 %v126
  %v1200 = vunpack.c.l.b16 %v127
  %v1201 = vunpack.c.h.b16 %v127
  %v1202 = vunpack.c.l.b16 %v128
  %v1203 = vunpack.c.h.b16 %v128
  %v1204 = vunpack.c.l.b16 %v129
  %v1205 = vunpack.c.h.b16 %v129
  %v1206 = vunpack.c.l.b16 %v130
  %v1207 = vunpack.c.h.b16 %v130
  %v1208 = vunpack.c.l.b16 %v131
  %v1209 = vunpack.c.h.b16 %v131
  %v1210 = vunpack.c.l.b16 %v132
  %v1211 = vunpack.c.h.b16 %v132
  %v1212 = vunpack.c.l.b16 %v133
  %v1213 = vunpack.c.h.b16 %v133
  %v1214 = vunpack.c.l.b16 %v134
  %v1215 = vunpack.c.h.b16 %v134
  %v1216 = vunpack.c.l.b16 %v135
  %v1217 = vunpack.c.h.b16 %v135
  %v1218 = vunpack.c.l.b16 %v136
  %v1219 = vunpack.c.h.b16 %v136
  %v1220 = vunpack.c.l.b16 %v137
  %v1221 = vunpack.c.h.b16 %v137
  %v1222 = vunpack.c.l.b16 %v138
  %v1223 = vunpack.c.h.b16 %v138
  %v1224 = vunpack.c.l.b16 %v139
  %v1225 = vunpack.c.h.b16 %v139
  %v1226 = vunpack.c.l.b16 %v140
  %v1227 = vunpack.c.h.b16 %v140
  %v1228 = vunpack.c.l.b16 %v141
  %v1229 = vunpack.c.h.b16 %v141
  %v1230 = vunpack.c.l.b16 %v142
  %v1231 = vunpack.c.h.b16 %v142
  %v1232 = vunpack.c.l.b16 %v143
  %v1233 = vunpack.c.h.b16 %v143
  %v1234 = vunpack.c.l.b16 %v144
  %v1235 = vunpack.c.h.b16 %v144
  %v1236 = vunpack.c.l.b16 %v145
  %v1237 = vunpack.c.h.b16 %v145
  %v1238 = vunpack.c.l.b16 %v146
  %v1239 = vunpack.c.h.b16 %v146
  %v1240 = vunpack.c.l.b16 %v147
  %v1241 = vunpack.c.h.b16 %v147
  %v1242 = vunpack.c.l.b16 %v148
  %v1243 = vunpack.c.h.b16 %v148
  %v1244 = vunpack.c.l.b16 %v149
  %v1245 = vunpack.c.h.b16 %v149
  %v1246 = vunpack.c.l.b16 %v150
  %v1247 = vunpack.c.h.b16 %v150
  %v1248 = vunpack.c.l.b16 %v151
  %v1249 = vunpack.c.h.b16 %v151
  %v1250 = vunpack.c.l.b16 %v152
  %v1251 = vunpack.c.h.b16 %v152
  %v1252 = vunpack.c.l.b16 %v153
  %v1253 = vunpack.c.h.b16 %v153
  %v1254 = vunpack.c.l.b16 %v154
  %v1255 = vunpack.c.h.b16 %v154
  %v1256 = vunpack.c.l.b16 %v155
  %v1257 = vunpack.c.h.b16 %v155
  %v1258 = vunpack.c.l.b16 %v156
  %v1259 = vunpack.c.h.b16 %v156
  %v1260 = vunpack.c.l.b16 %v157
  %v1261 = vunpack.c.h.b16 %v157
  %v1262 = vunpack.c.l.b16 %v158
  %v1263 = vunpack.c.h.b16 %v158
  %v1264 = vunpack.c.l.b16 %v159
  %v1265 = vunpack.c.h.b16 %v159
  %v1266 = vunpack.c.l.b16 %v160
  %v1267 = vunpack.c.h.b16 %v160
  %v1268 = vunpack.c.l.b16 %v161
  %v1269 = vunpack.c.h.b16 %v161
  %v1270 = vunpack.c.l.b16 %v162
  %v1271 = vunpack.c.h.b16 %v162
  %v1272 = vunpack.c.l.b16 %v163
  %v1273 = vunpack.c.h.b16 %v163
  %v1274 = vunpack.c.l.b16 %v164
  %v1275 = vunpack.c.h.b16 %v164
  %v1276 = vunpack.c.l.b16 %v165
  %v1277 = vunpack.c.h.b16 %v165
  %v1278 = vunpack.c.l.b16 %v166
  %v1279 = vunpack.c.h.b16 %v166
  %v1280 = vunpack.c.l.b16 %v167
  %v1281 = vunpack.c.h.b16 %v167
  %v1282 = vunpack.c.l.b16 %v168
  %v1283 = vunpack.c.h.b16 %v168
  %v1284 = vunpack.c.l.b16 %v169
  %v1285 = vunpack.c.h.b16 %v169
  %v1286 = vunpack.c.l.b16 %v170
  %v1287 = vunpack.c.h.b16 %v170
  %v1288 = vunpack.c.l.b16 %v171
  %v1289 = vunpack.c.h.b16 %v171
  %v1290 = vunpack.c.l.b16 %v172
  %v1291 = vunpack.c.h.b16 %v172
  %v1292 = vunpack.c.l.b16 %v173
  %v1293 = vunpack.c.h.b16 %v173
  %v1294 = vunpack.c.l.b16 %v174
  %v1295 = vunpack.c.h.b16 %v174
  %v1296 = vunpack.c.l.b16 %v175
  %v1297 = vunpack.c.h.b16 %v175
  %v1298 = vunpack.c.l.b16 %v176
  %v1299 = vunpack.c.h.b16 %v176
  %v1300 = vunpack.c.l.b16 %v177
  %v1301 = vunpack.c.h.b16 %v177
  %v1302 = vunpack.c.l.b16 %v178
  %v1303 = vunpack.c.h.b16 %v178
  %v1304 = vunpack.c.l.b16 %v179
  %v1305 = vunpack.c.h.b16 %v179
  %v1306 = vunpack.c.l.b16 %v180
  %v1307 = vunpack.c.h.b16 %v180
  %v1308 = vunpack.c.l.b16 %v181
  %v1309 = vunpack.c.h.b16 %v181
  %v1310 = vunpack.c.l.b16 %v182
  %v1311 = vunpack.c.h.b16 %v182
  %v1312 = vunpack.c.l.b16 %v183
  %v1313 = vunpack.c.h.b16 %v183
  %v1314 = vunpack.c.l.b16 %v184
  %v1315 = vunpack.c.h.b16 %v184
  %v1316 = vunpack.c.l.b16 %v185
  %v1317 = vunpack.c.h.b16 %v185
  %v1318 = vunpack.c.l.b16 %v186
  %v1319 = vunpack.c.h.b16 %v186
  %v1320 = vunpack.c.l.b16 %v187
  %v1321 = vunpack.c.h.b16 %v187
  %v1322 = vunpack.c.l.b16 %v188
  %v1323 = vunpack.c.h.b16 %v188
  %v1324 = vunpack.c.l.b16 %v189
  %v1325 = vunpack.c.h.b16 %v189
  %v1326 = vunpack.c.l.b16 %v190
  %v1327 = vunpack.c.h.b16 %v190
  %v1328 = vunpack.c.l.b16 %v191
  %v1329 = vunpack.c.h.b16 %v191
  %v1330 = vunpack.c.l.b16 %v192
  %v1331 = vunpack.c.h.b16 %v192
  %v1332 = vunpack.c.l.b16 %v193
  %v1333 = vunpack.c.h.b16 %v193
  %v1334 = vunpack.c.l.b16 %v194
  %v1335 = vunpack.c.h.b16 %v194
  %v1336 = vunpack.c.l.b16 %v195
  %v1337 = vunpack.c.h.b16 %v195
  %v1338 = vunpack.c.l.b16 %v196
  %v1339 = vunpack.c.h.b16 %v196
  %v1340 = vunpack.c.l.b16 %v197
  %v1341 = vunpack.c.h.b16 %v197
  %v1342 = vunpack.c.l.b16 %v198
  %v1343 = vunpack.c.h.b16 %v198
  %v1344 = vunpack.c.l.b16 %v199
  %v1345 = vunpack.c.h.b16 %v199
  %v1346 = vunpack.c.l.b16 %v200
  %v1347 = vunpack.c.h.b16 %v200
  %v1348 = vunpack.c.l.b16 %v201
  %v1349 = vunpack.c.h.b16 %v201
  %v1350 = vunpack.c.l.b16 %v202
  %v1351 = vunpack.c.h.b16 %v202
  %v1352 = vunpack.c.l.b16 %v203
  %v1353 = vunpack.c.h.b16 %v203
  %v1354 = vunpack.c.l.b16 %v204
  %v1355 = vunpack.c.h.b16 %v204
  %v1356 = vunpack.c.l.b16 %v205
  %v1357 = vunpack.c.h.b16 %v205
  %v1358 = vunpack.c.l.b16 %v206
  %v1359 = vunpack.c.h.b16 %v206
  %v1360 = vunpack.c.l.b16 %v207
  %v1361 = vunpack.c.h.b16 %v207
  %v1362 = vunpack.c.l.b16 %v208
  %v1363 = vunpack.c.h.b16 %v208
  %v1364 = vunpack.c.l.b16 %v209
  %v1365 = vunpack.c.h.b16 %v209
  %v1366 = vunpack.c.l.b16 %v210
  %v1367 = vunpack.c.h.b16 %v210
  %v1368 = vunpack.c.l.b16 %v211
  %v1369 = vunpack.c.h.b16 %v211
  %v1370 = vunpack.c.l.b16 %v212
  %v1371 = vunpack.c.h.b16 %v212
  %v1372 = vunpack.c.l.b16 %v213
  %v1373 = vunpack.c.h.b16 %v213
  %v1374 = vunpack.c.l.b16 %v214
  %v1375 = vunpack.c.h.b16 %v214
  %v1376 = vunpack.c.l.b16 %v215
  %v1377 = vunpack.c.h.b16 %v215
  %v1378 = vunpack.c.l.b16 %v216
  %v1379 = vunpack.c.h.b16 %v216
  %v1380 = vunpack.c.l.b16 %v217
  %v1381 = vunpack.c.h.b16 %v217
  %v1382 = vunpack.c.l.b16 %v218
  %v1383 = vunpack.c.h.b16 %v218
  %v1384 = vunpack.c.l.b16 %v219
  %v1385 = vunpack.c.h.b16 %v219
  %v1386 = vunpack.c.l.b16 %v220
  %v1387 = vunpack.c.h.b16 %v220
  %v1388 = vunpack.c.l.b16 %v221
  %v1389 = vunpack.c.h.b16 %v221
  %v1390 = vunpack.c.l.b16 %v222
  %v1391 = vunpack.c.h.b16 %v222
  %v1392 = vunpack.c.l.b16 %v223
  %v1393 = vunpack.c.h.b16 %v223
  %v1394 = vunpack.c.l.b16 %v224
  %v1395 = vunpack.c.h.b16 %v224
  %v1396 = vunpack.c.l.b16 %v225
  %v1397 = vunpack.c.h.b16 %v225
  %v1398 = vunpack.c.l.b16 %v226
  %v1399 = vunpack.c.h.b16 %v226
  %v1400 = vunpack.c.l.b16 %v227
  %v1401 = vunpack.c.h.b16 %v227
  %v1402 = vunpack.c.l.b16 %v228
  %v1403 = vunpack.c.h.b16 %v228
  %v1404 = vunpack.c.l.b16 %v229
  %v1405 = vunpack.c.h.b16 %v229
  %v1406 = vunpack.c.l.b16 %v230
  %v1407 = vunpack.c.h.b16 %v230
  %v1408 = vunpack.c.l.b16 %v231
  %v1409 = vunpack.c.h.b16 %v231
  %v1410 = vunpack.c.l.b16 %v232
  %v1411 = vunpack.c.h.b16 %v232
  %v1412 = vunpack.c.l.b16 %v233
  %v1413 = vunpack.c.h.b16 %v233
  %v1414 = vunpack.c.l.b16 %v234
  %v1415 = vunpack.c.h.b16 %v234
  %v1416 = vunpack.c.l.b16 %v235
  %v1417 = vunpack.c.h.b16 %v235
  %v1418 = vunpack.c.l.b16 %v236
  %v1419 = vunpack.c.h.b16 %v236
  %v1420 = vunpack.c.l.b16 %v237
  %v1421 = vunpack.c.h.b16 %v237
  %v1422 = vunpack.c.l.b16 %v238
  %v1423 = vunpack.c.h.b16 %v238
  %v1424 = vunpack.c.l.b16 %v239
  %v1425 = vunpack.c.h.b16 %v239
  %v1426 = vunpack.c.l.b16 %v240
  %v1427 = vunpack.c.h.b16 %v240
  %v1428 = vunpack.c.l.b16 %v241
  %v1429 = vunpack.c.h.b16 %v241
  %v1430 = vunpack.c.l.b16 %v242
  %v1431 = vunpack.c.h.b16 %v242
  %v1432 = vunpack.c.l.b16 %v243
  %v1433 = vunpack.c.h.b16 %v243
  %v1434 = vunpack.c.l.b16 %v244
  %v1435 = vunpack.c.h.b16 %v244
  %v1436 = vunpack.c.l.b16 %v245
  %v1437 = vunpack.c.h.b16 %v245
  %v1438 = vunpack.c.l.b16 %v246
  %v1439 = vunpack.c.h.b16 %v246
  %v1440 = vunpack.c.l.b16 %v247
  %v1441 = vunpack.c.h.b16 %v247
  %v1442 = vunpack.c.l.b16 %v248
  %v1443 = vunpack.c.h.b16 %v248
  %v1444 = vunpack.c.l.b16 %v249
  %v1445 = vunpack.c.h.b16 %v249
  %v1446 = vunpack.c.l.b16 %v250
  %v1447 = vunpack.c.h.b16 %v250
  %v1448 = vunpack.c.l.b16 %v251
  %v1449 = vunpack.c.h.b16 %v251
  %v1450 = vunpack.c.l.b16 %v252
  %v1451 = vunpack.c.h.b16 %v252
  %v1452 = vunpack.c.l.b16 %v253
  %v1453 = vunpack.c.h.b16 %v253
  %v1454 = vunpack.c.l.b16 %v254
  %v1455 = vunpack.c.h.b16 %v254
  %v1456 = vunpack.c.l.b16 %v255
  %v1457 = vunpack.c.h.b16 %v255
  %v1458 = vunpack.c.l.b16 %v256
  %v1459 = vunpack.c.h.b16 %v256
  %v1460 = vunpack.c.l.b16 %v257
  %v1461 = vunpack.c.h.b16 %v257
  %v1462 = vunpack.c.l.b16 %v258
  %v1463 = vunpack.c.h.b16 %v258
  %v1464 = vunpack.c.l.b16 %v259
  %v1465 = vunpack.c.h.b16 %v259
  %v1466 = vunpack.c.l.b16 %v260
  %v1467 = vunpack.c.h.b16 %v260
  %v1468 = vunpack.c.l.b16 %v261
  %v1469 = vunpack.c.h.b16 %v261
  %v1470 = vunpack.c.l.b16 %v262
  %v1471 = vunpack.c.h.b16 %v262
  %v1472 = vunpack.c.l.b16 %v263
  %v1473 = vunpack.c.h.b16 %v263
  %v1474 = vunpack.c.l.b16 %v264
  %v1475 = vunpack.c.h.b16 %v264
  %v1476 = vunpack.c.l.b16 %v265
  %v1477 = vunpack.c.h.b16 %v265
  %v1478 = vunpack.c.l.b16 %v266
  %v1479 = vunpack.c.h.b16 %v266
  %v1480 = vunpack.c.l.b16 %v267
  %v1481 = vunpack.c.h.b16 %v267
  %v1482 = vunpack.c.l.b16 %v268
  %v1483 = vunpack.c.h.b16 %v268
  %v1484 = vunpack.c.l.b16 %v269
  %v1485 = vunpack.c.h.b16 %v269
  %v1486 = vunpack.c.l.b16 %v270
  %v1487 = vunpack.c.h.b16 %v270
  %v1488 = vunpack.c.l.b16 %v271
  %v1489 = vunpack.c.h.b16 %v271
  %v1490 = vunpack.c.l.b16 %v272
  %v1491 = vunpack.c.h.b16 %v272
  %v1492 = vunpack.c.l.b16 %v273
  %v1493 = vunpack.c.h.b16 %v273
  %v1494 = vunpack.c.l.b16 %v274
  %v1495 = vunpack.c.h.b16 %v274
  %v1496 = vunpack.c.l.b16 %v275
  %v1497 = vunpack.c.h.b16 %v275
  %v1498 = vunpack.c.l.b16 %v276
  %v1499 = vunpack.c.h.b16 %v276
  %v1500 = vunpack.c.l.b16 %v277
  %v1501 = vunpack.c.h.b16 %v277
  %v1502 = vunpack.c.l.b16 %v278
  %v1503 = vunpack.c.h.b16 %v278
  %v1504 = vunpack.c.l.b16 %v279
  %v1505 = vunpack.c.h.b16 %v279
  %v1506 = vunpack.c.l.b16 %v280
  %v1507 = vunpack.c.h.b16 %v280
  %v1508 = vunpack.c.l.b16 %v281
  %v1509 = vunpack.c.h.b16 %v281
  %v1510 = vunpack.c.l.b16 %v282
  %v1511 = vunpack.c.h.b16 %v282
  %v1512 = vunpack.c.l.b16 %v283
  %v1513 = vunpack.c.h.b16 %v283
  %v1514 = vunpack.c.l.b16 %v284
  %v1515 = vunpack.c.h.b16 %v284
  %v1516 = vunpack.c.l.b16 %v285
  %v1517 = vunpack.c.h.b16 %v285
  %v1518 = vunpack.c.l.b16 %v286
  %v1519 = vunpack.c.h.b16 %v286
  %v1520 = vunpack.c.l.b16 %v287
  %v1521 = vunpack.c.h.b16 %v287
  %v1522 = vunpack.c.l.b16 %v288
  %v1523 = vunpack.c.h.b16 %v288
  %v1524 = vunpack.c.l.b16 %v289
  %v1525 = vunpack.c.h.b16 %v289
  %v1526 = vunpack.c.l.b16 %v290
  %v1527 = vunpack.c.h.b16 %v290
  %v1528 = vunpack.c.l.b16 %v291
  %v1529 = vunpack.c.h.b16 %v291
  %v1530 = vunpack.c.l.b16 %v292
  %v1531 = vunpack.c.h.b16 %v292
  %v1532 = vunpack.c.l.b16 %v293
  %v1533 = vunpack.c.h.b16 %v293
  %v1534 = vunpack.c.l.b16 %v294
  %v1535 = vunpack.c.h.b16 %v294
  %v1536 = vunpack.c.l.b16 %v295
  %v1537 = vunpack.c.h.b16 %v295
  %v1538 = vunpack.c.l.b16 %v296
  %v1539 = vunpack.c.h.b16 %v296
  %v1540 = vunpack.c.l.b16 %v297
  %v1541 = vunpack.c.h.b16 %v297
  %v1542 = vunpack.c.l.b16 %v298
  %v1543 = vunpack.c.h.b16 %v298
  %v1544 = vunpack.c.l.b16 %v299
  %v1545 = vunpack.c.h.b16 %v299
  %v1546 = vunpack.c.l.b16 %v300
  %v1547 = vunpack.c.h.b16 %v300
  %v1548 = vunpack.c.l.b16 %v301
  %v1549 = vunpack.c.h.b16 %v301
  %v1550 = vunpack.c.l.b16 %v302
  %v1551 = vunpack.c.h.b16 %v302
  %v1552 = vunpack.c.l.b16 %v303
  %v1553 = vunpack.c.h.b16 %v303
  %v1554 = vunpack.c.l.b16 %v304
  %v1555 = vunpack.c.h.b16 %v304
  %v1556 = vunpack.c.l.b16 %v305
  %v1557 = vunpack.c.h.b16 %v305
  %v1558 = vunpack.c.l.b16 %v306
  %v1559 = vunpack.c.h.b16 %v306
  %v1560 = vunpack.c.l.b16 %v307
  %v1561 = vunpack.c.h.b16 %v307
  %v1562 = vunpack.c.l.b16 %v308
  %v1563 = vunpack.c.h.b16 %v308
  %v1564 = vunpack.c.l.b16 %v309
  %v1565 = vunpack.c.h.b16 %v309
  %v1566 = vunpack.c.l.b16 %v310
  %v1567 = vunpack.c.h.b16 %v310
  %v1568 = vunpack.c.l.b16 %v311
  %v1569 = vunpack.c.h.b16 %v311
  %v1570 = vunpack.c.l.b16 %v312
  %v1571 = vunpack.c.h.b16 %v312
  %v1572 = vunpack.c.l.b16 %v313
  %v1573 = vunpack.c.h.b16 %v313
  %v1574 = vunpack.c.l.b16 %v314
  %v1575 = vunpack.c.h.b16 %v314
  %v1576 = vunpack.c.l.b16 %v315
  %v1577 = vunpack.c.h.b16 %v315
  %v1578 = vunpack.c.l.b16 %v316
  %v1579 = vunpack.c.h.b16 %v316
  %v1580 = vunpack.c.l.b16 %v317
  %v1581 = vunpack.c.h.b16 %v317
  %v1582 = vunpack.c.l.b16 %v318
  %v1583 = vunpack.c.h.b16 %v318
  %v1584 = vunpack.c.l.b16 %v319
  %v1585 = vunpack.c.h.b16 %v319
  %v1586 = vunpack.c.l.b16 %v320
  %v1587 = vunpack.c.h.b16 %v320
  %v1588 = vunpack.c.l.b16 %v321
  %v1589 = vunpack.c.h.b16 %v321
  %v1590 = vunpack.c.l.b16 %v322
  %v1591 = vunpack.c.h.b16 %v322
  %v1592 = vunpack.c.l.b16 %v323
  %v1593 = vunpack.c.h.b16 %v323
  %v1594 = vunpack.c.l.b16 %v324
  %v1595 = vunpack.c.h.b16 %v324
  %v1596 = vunpack.c.l.b16 %v325
  %v1597 = vunpack.c.h.b16 %v325
  %v1598 = vunpack.c.l.b16 %v326
  %v1599 = vunpack.c.h.b16 %v326
  %v1600 = vunpack.c.l.b16 %v327
  %v1601 = vunpack.c.h.b16 %v327
  %v1602 = vunpack.c.l.b16 %v328
  %v1603 = vunpack.c.h.b16 %v328
  %v1604 = vunpack.c.l.b16 %v329
  %v1605 = vunpack.c.h.b16 %v329
  %v1606 = vunpack.c.l.b16 %v330
  %v1607 = vunpack.c.h.b16 %v330
  %v1608 = vunpack.c.l.b16 %v331
  %v1609 = vunpack.c.h.b16 %v331
  %v1610 = vunpack.c.l.b16 %v332
  %v1611 = vunpack.c.h.b16 %v332
  %v1612 = vunpack.c.l.b16 %v333
  %v1613 = vunpack.c.h.b16 %v333
  %v1614 = vunpack.c.l.b16 %v334
  %v1615 = vunpack.c.h.b16 %v334
  %v1616 = vunpack.c.l.b16 %v335
  %v1617 = vunpack.c.h.b16 %v335
  %v1618 = vunpack.c.l.b16 %v336
  %v1619 = vunpack.c.h.b16 %v336
  %v1620 = vunpack.c.l.b16 %v337
  %v1621 = vunpack.c.h.b16 %v337
  %v1622 = vunpack.c.l.b16 %v338
  %v1623 = vunpack.c.h.b16 %v338
  %v1624 = vunpack.c.l.b16 %v339
  %v1625 = vunpack.c.h.b16 %v339
  %v1626 = vunpack.c.l.b16 %v340
  %v1627 = vunpack.c.h.b16 %v340
  %v1628 = vunpack.c.l.b16 %v341
  %v1629 = vunpack.c.h.b16 %v341
  %v1630 = vunpack.c.l.b16 %v342
  %v1631 = vunpack.c.h.b16 %v342
  %v1632 = vunpack.c.l.b16 %v343
  %v1633 = vunpack.c.h.b16 %v343
  %v1634 = vunpack.c.l.b16 %v344
  %v1635 = vunpack.c.h.b16 %v344
  %v1636 = vunpack.c.l.b16 %v345
  %v1637 = vunpack.c.h.b16 %v345
  %v1638 = vunpack.c.l.b16 %v346
  %v1639 = vunpack.c.h.b16 %v346
  %v1640 = vunpack.c.l.b16 %v347
  %v1641 = vunpack.c.h.b16 %v347
  %v1642 = vunpack.c.l.b16 %v348
  %v1643 = vunpack.c.h.b16 %v348
  %v1644 = vunpack.c.l.b16 %v349
  %v1645 = vunpack.c.h.b16 %v349
  %v1646 = vunpack.c.l.b16 %v350
  %v1647 = vunpack.c.h.b16 %v350
  %v1648 = vunpack.c.l.b16 %v351
  %v1649 = vunpack.c.h.b16 %v351
  %v1650 = vunpack.c.l.b16 %v352
  %v1651 = vunpack.c.h.b16 %v352
  %v1652 = vunpack.c.l.b16 %v353
  %v1653 = vunpack.c.h.b16 %v353
  %v1654 = vunpack.c.l.b16 %v354
  %v1655 = vunpack.c.h.b16 %v354
  %v1656 = vunpack.c.l.b16 %v355
  %v1657 = vunpack.c.h.b16 %v355
  %v1658 = vunpack.c.l.b16 %v356
  %v1659 = vunpack.c.h.b16 %v356
  %v1660 = vunpack.c.l.b16 %v357
  %v1661 = vunpack.c.h.b16 %v357
  %v1662 = vunpack.c.l.b16 %v358
  %v1663 = vunpack.c.h.b16 %v358
  %v1664 = vunpack.c.l.b16 %v359
  %v1665 = vunpack.c.h.b16 %v359
  %v1666 = vunpack.c.l.b16 %v360
  %v1667 = vunpack.c.h.b16 %v360
  %v1668 = vunpack.c.l.b16 %v361
  %v1669 = vunpack.c.h.b16 %v361
  %v1670 = vunpack.c.l.b16 %v362
  %v1671 = vunpack.c.h.b16 %v362
  %v1672 = vunpack.c.l.b16 %v363
  %v1673 = vunpack.c.h.b16 %v363
  %v1674 = vunpack.c.l.b16 %v364
  %v1675 = vunpack.c.h.b16 %v364
  %v1676 = vunpack.c.l.b16 %v365
  %v1677 = vunpack.c.h.b16 %v365
  %v1678 = vunpack.c.l.b16 %v366
  %v1679 = vunpack.c.h.b16 %v366
  %v1680 = vunpack.c.l.b16 %v367
  %v1681 = vunpack.c.h.b16 %v367
  %v1682 = vunpack.c.l.b16 %v368
  %v1683 = vunpack.c.h.b16 %v368
  %v1684 = vunpack.c.l.b16 %v369
  %v1685 = vunpack.c.h.b16 %v369
  %v1686 = vunpack.c.l.b16 %v370
  %v1687 = vunpack.c.h.b16 %v370
  %v1688 = vunpack.c.l.b16 %v371
  %v1689 = vunpack.c.h.b16 %v371
  %v1690 = vunpack.c.l.b16 %v372
  %v1691 = vunpack.c.h.b16 %v372
  %v1692 = vunpack.c.l.b16 %v373
  %v1693 = vunpack.c.h.b16 %v373
  %v1694 = vunpack.c.l.b16 %v374
  %v1695 = vunpack.c.h.b16 %v374
  %v1696 = vunpack.c.l.b16 %v375
  %v1697 = vunpack.c.h.b16 %v375
  %v1698 = vunpack.c.l.b16 %v376
  %v1699 = vunpack.c.h.b16 %v376
  %v1700 = vunpack.c.l.b16 %v377
  %v1701 = vunpack.c.h.b16 %v377
  %v1702 = vunpack.c.l.b16 %v378
  %v1703 = vunpack.c.h.b16 %v378
  %v1704 = vunpack.c.l.b16 %v379
  %v1705 = vunpack.c.h.b16 %v379
  %v1706 = vunpack.c.l.b16 %v380
  %v1707 = vunpack.c.h.b16 %v380
  %v1708 = vunpack.c.l.b16 %v381
  %v1709 = vunpack.c.h.b16 %v381
  %v1710 = vunpack.c.l.b16 %v382
  %v1711 = vunpack.c.h.b16 %v382
  %v1712 = vunpack.c.l.b16 %v383
  %v1713 = vunpack.c.h.b16 %v383
  %v1714 = vunpack.c.l.b16 %v384
  %v1715 = vunpack.c.h.b16 %v384
  %v1716 = vunpack.c.l.b16 %v385
  %v1717 = vunpack.c.h.b16 %v385
  %v1718 = vunpack.c.l.b16 %v386
  %v1719 = vunpack.c.h.b16 %v386
  %v1720 = vunpack.c.l.b16 %v387
  %v1721 = vunpack.c.h.b16 %v387
  %v1722 = vunpack.c.l.b16 %v388
  %v1723 = vunpack.c.h.b16 %v388
  %v1724 = vunpack.c.l.b16 %v389
  %v1725 = vunpack.c.h.b16 %v389
  %v1726 = vunpack.c.l.b16 %v390
  %v1727 = vunpack.c.h.b16 %v390
  %v1728 = vunpack.c.l.b16 %v391
  %v1729 = vunpack.c.h.b16 %v391
  %v1730 = vunpack.c.l.b16 %v392
  %v1731 = vunpack.c.h.b16 %v392
  %v1732 = vunpack.c.l.b16 %v393
  %v1733 = vunpack.c.h.b16 %v393
  %v1734 = vunpack.c.l.b16 %v394
  %v1735 = vunpack.c.h.b16 %v394
  %v1736 = vunpack.c.l.b16 %v395
  %v1737 = vunpack.c.h.b16 %v395
  %v1738 = vunpack.c.l.b16 %v396
  %v1739 = vunpack.c.h.b16 %v396
  %v1740 = vunpack.c.l.b16 %v397
  %v1741 = vunpack.c.h.b16 %v397
  %v1742 = vunpack.c.l.b16 %v398
  %v1743 = vunpack.c.h.b16 %v398
  %v1744 = vunpack.c.l.b16 %v399
  %v1745 = vunpack.c.h.b16 %v399
  %v1746 = vunpack.c.l.b16 %v400
  %v1747 = vunpack.c.h.b16 %v400
  %v1748 = vunpack.c.l.b16 %v401
  %v1749 = vunpack.c.h.b16 %v401
  %v1750 = vunpack.c.l.b16 %v402
  %v1751 = vunpack.c.h.b16 %v402
  %v1752 = vunpack.c.l.b16 %v403
  %v1753 = vunpack.c.h.b16 %v403
  %v1754 = vunpack.c.l.b16 %v404
  %v1755 = vunpack.c.h.b16 %v404
  %v1756 = vunpack.c.l.b16 %v405
  %v1757 = vunpack.c.h.b16 %v405
  %v1758 = vunpack.c.l.b16 %v406
  %v1759 = vunpack.c.h.b16 %v406
  %v1760 = vunpack.c.l.b16 %v407
  %v1761 = vunpack.c.h.b16 %v407
  %v1762 = vunpack.c.l.b16 %v408
  %v1763 = vunpack.c.h.b16 %v408
  %v1764 = vunpack.c.l.b16 %v409
  %v1765 = vunpack.c.h.b16 %v409
  %v1766 = vunpack.c.l.b16 %v410
  %v1767 = vunpack.c.h.b16 %v410
  %v1768 = vunpack.c.l.b16 %v411
  %v1769 = vunpack.c.h.b16 %v411
  %v1770 = vunpack.c.l.b16 %v412
  %v1771 = vunpack.c.h.b16 %v412
  %v1772 = vunpack.c.l.b16 %v413
  %v1773 = vunpack.c.h.b16 %v413
  %v1774 = vunpack.c.l.b16 %v414
  %v1775 = vunpack.c.h.b16 %v414
  %v1776 = vunpack.c.l.b16 %v415
  %v1777 = vunpack.c.h.b16 %v415
  %v1778 = vunpack.c.l.b16 %v416
  %v1779 = vunpack.c.h.b16 %v416
  %v1780 = vunpack.c.l.b16 %v417
  %v1781 = vunpack.c.h.b16 %v417
  %v1782 = vunpack.c.l.b16 %v418
  %v1783 = vunpack.c.h.b16 %v418
  %v1784 = vunpack.c.l.b16 %v419
  %v1785 = vunpack.c.h.b16 %v419
  %v1786 = vunpack.c.l.b16 %v420
  %v1787 = vunpack.c.h.b16 %v420
  %v1788 = vunpack.c.l.b16 %v421
  %v1789 = vunpack.c.h.b16 %v421
  %v1790 = vunpack.c.l.b16 %v422
  %v1791 = vunpack.c.h.b16 %v422
  %v1792 = vunpack.c.l.b16 %v423
  %v1793 = vunpack.c.h.b16 %v423
  %v1794 = vunpack.c.l.b16 %v424
  %v1795 = vunpack.c.h.b16 %v424
  %v1796 = vunpack.c.l.b16 %v425
  %v1797 = vunpack.c.h.b16 %v425
  %v1798 = vunpack.c.l.b16 %v426
  %v1799 = vunpack.c.h.b16 %v426
  %v1800 = vunpack.c.l.b16 %v427
  %v1801 = vunpack.c.h.b16 %v427
  %v1802 = vunpack.c.l.b16 %v428
  %v1803 = vunpack.c.h.b16 %v428
  %v1804 = vunpack.c.l.b16 %v429
  %v1805 = vunpack.c.h.b16 %v429
  %v1806 = vunpack.c.l.b16 %v430
  %v1807 = vunpack.c.h.b16 %v430
  %v1808 = vunpack.c.l.b16 %v431
  %v1809 = vunpack.c.h.b16 %v431
  %v1810 = vunpack.c.l.b16 %v432
  %v1811 = vunpack.c.h.b16 %v432
  %v1812 = vunpack.c.l.b16 %v433
  %v1813 = vunpack.c.h.b16 %v433
  %v1814 = vunpack.c.l.b16 %v434
  %v1815 = vunpack.c.h.b16 %v434
  %v1816 = vunpack.c.l.b16 %v435
  %v1817 = vunpack.c.h.b16 %v435
  %v1818 = vunpack.c.l.b16 %v436
  %v1819 = vunpack.c.h.b16 %v436
  %v1820 = vunpack.c.l.b16 %v437
  %v1821 = vunpack.c.h.b16 %v437
  %v1822 = vunpack.c.l.b16 %v438
  %v1823 = vunpack.c.h.b16 %v438
  %v1824 = vunpack.c.l.b16 %v439
  %v1825 = vunpack.c.h.b16 %v439
  %v1826 = vunpack.c.l.b16 %v440
  %v1827 = vunpack.c.h.b16 %v440
  %v1828 = vunpack.c.l.b16 %v441
  %v1829 = vunpack.c.h.b16 %v441
  %v1830 = vunpack.c.l.b16 %v442
  %v1831 = vunpack.c.h.b16 %v442
  %v1832 = vunpack.c.l.b16 %v443
  %v1833 = vunpack.c.h.b16 %v443
  %v1834 = vunpack.c.l.b16 %v444
  %v1835 = vunpack.c.h.b16 %v444
  %v1836 = vunpack.c.l.b16 %v445
  %v1837 = vunpack.c.h.b16 %v445
  %v1838 = vunpack.c.l.b16 %v446
  %v1839 = vunpack.c.h.b16 %v446
  %v1840 = vunpack.c.l.b16 %v447
  %v1841 = vunpack.c.h.b16 %v447
  %v1842 = vunpack.c.l.b16 %v448
  %v1843 = vunpack.c.h.b16 %v448
  %v1844 = vunpack.c.l.b16 %v449
  %v1845 = vunpack.c.h.b16 %v449
  %v1846 = vunpack.c.l.b16 %v450
  %v1847 = vunpack.c.h.b16 %v450
  %v1848 = vunpack.c.l.b16 %v451
  %v1849 = vunpack.c.h.b16 %v451
  %v1850 = vunpack.c.l.b16 %v452
  %v1851 = vunpack.c.h.b16 %v452
  %v1852 = vunpack.c.l.b16 %v453
  %v1853 = vunpack.c.h.b16 %v453
  %v1854 = vunpack.c.l.b16 %v454
  %v1855 = vunpack.c.h.b16 %v454
  %v1856 = vunpack.c.l.b16 %v455
  %v1857 = vunpack.c.h.b16 %v455
  %v1858 = vunpack.c.l.b16 %v456
  %v1859 = vunpack.c.h.b16 %v456
  %v1860 = vunpack.c.l.b16 %v457
  %v1861 = vunpack.c.h.b16 %v457
  %v1862 = vunpack.c.l.b16 %v458
  %v1863 = vunpack.c.h.b16 %v458
  %v1864 = vunpack.c.l.b16 %v459
  %v1865 = vunpack.c.h.b16 %v459
  %v1866 = vunpack.c.l.b16 %v460
  %v1867 = vunpack.c.h.b16 %v460
  %v1868 = vunpack.c.l.b16 %v461
  %v1869 = vunpack.c.h.b16 %v461
  %v1870 = vunpack.c.l.b16 %v462
  %v1871 = vunpack.c.h.b16 %v462
  %v1872 = vunpack.c.l.b16 %v463
  %v1873 = vunpack.c.h.b16 %v463
  %v1874 = vunpack.c.l.b16 %v464
  %v1875 = vunpack.c.h.b16 %v464
  %v1876 = vunpack.c.l.b16 %v465
  %v1877 = vunpack.c.h.b16 %v465
  %v1878 = vunpack.c.l.b16 %v466
  %v1879 = vunpack.c.h.b16 %v466
  %v1880 = vunpack.c.l.b16 %v467
  %v1881 = vunpack.c.h.b16 %v467
  %v1882 = vunpack.c.l.b16 %v468
  %v1883 = vunpack.c.h.b16 %v468
  %v1884 = vunpack.c.l.b16 %v469
  %v1885 = vunpack.c.h.b16 %v469
  %v1886 = vunpack.c.l.b16 %v470
  %v1887 = vunpack.c.h.b16 %v470
  %v1888 = vunpack.c.l.b16 %v471
  %v1889 = vunpack.c.h.b16 %v471
  %v1890 = vunpack.c.l.b16 %v472
  %v1891 = vunpack.c.h.b16 %v472
  %v1892 = vunpack.c.l.b16 %v473
  %v1893 = vunpack.c.h.b16 %v473
  %v1894 = vunpack.c.l.b16 %v474
  %v1895 = vunpack.c.h.b16 %v474
  %v1896 = vunpack.c.l.b16 %v475
  %v1897 = vunpack.c.h.b16 %v475
  %v1898 = vunpack.c.l.b16 %v476
  %v1899 = vunpack.c.h.b16 %v476
  %v1900 = vunpack.c.l.b16 %v477
  %v1901 = vunpack.c.h.b16 %v477
  %v1902 = vunpack.c.l.b16 %v478
  %v1903 = vunpack.c.h.b16 %v478
  %v1904 = vunpack.c.l.b16 %v479
  %v1905 = vunpack.c.h.b16 %v479
  %v1906 = vunpack.c.l.b16 %v480
  %v1907 = vunpack.c.h.b16 %v480
  %v1908 = vunpack.c.l.b16 %v481
  %v1909 = vunpack.c.h.b16 %v481
  %v1910 = vunpack.c.l.b16 %v482
  %v1911 = vunpack.c.h.b16 %v482
  %v1912 = vunpack.c.l.b16 %v483
  %v1913 = vunpack.c.h.b16 %v483
  %v1914 = vunpack.c.l.b16 %v484
  %v1915 = vunpack.c.h.b16 %v484
  %v1916 = vunpack.c.l.b16 %v485
  %v1917 = vunpack.c.h.b16 %v485
  %v1918 = vunpack.c.l.b16 %v486
  %v1919 = vunpack.c.h.b16 %v486
  %v1920 = vunpack.c.l.b16 %v487
  %v1921 = vunpack.c.h.b16 %v487
  %v1922 = vunpack.c.l.b16 %v488
  %v1923 = vunpack.c.h.b16 %v488
  %v1924 = vunpack.c.l.b16 %v489
  %v1925 = vunpack.c.h.b16 %v489
  %v1926 = vunpack.c.l.b16 %v490
  %v1927 = vunpack.c.h.b16 %v490
  %v1928 = vunpack.c.l.b16 %v491
  %v1929 = vunpack.c.h.b16 %v491
  %v1930 = vunpack.c.l.b16 %v492
  %v1931 = vunpack.c.h.b16 %v492
  %v1932 = vunpack.c.l.b16 %v493
  %v1933 = vunpack.c.h.b16 %v493
  %v1934 = vunpack.c.l.b16 %v494
  %v1935 = vunpack.c.h.b16 %v494
  %v1936 = vunpack.c.l.b16 %v495
  %v1937 = vunpack.c.h.b16 %v495
  %v1938 = vunpack.c.l.b16 %v496
  %v1939 = vunpack.c.h.b16 %v496
  %v1940 = vunpack.c.l.b16 %v497
  %v1941 = vunpack.c.h.b16 %v497
  %v1942 = vunpack.c.l.b16 %v498
  %v1943 = vunpack.c.h.b16 %v498
  %v1944 = vunpack.c.l.b16 %v499
  %v1945 = vunpack.c.h.b16 %v499
  %v1946 = vunpack.c.l.b16 %v500
  %v1947 = vunpack.c.h.b16 %v500
  %v1948 = vunpack.c.l.b16 %v501
  %v1949 = vunpack.c.h.b16 %v501
  %v1950 = vunpack.c.l.b16 %v502
  %v1951 = vunpack.c.h.b16 %v502
  %v1952 = vunpack.c.l.b16 %v503
  %v1953 = vunpack.c.h.b16 %v503
  %v1954 = vunpack.c.l.b16 %v504
  %v1955 = vunpack.c.h.b16 %v504
  %v1956 = vunpack.c.l.b16 %v505
  %v1957 = vunpack.c.h.b16 %v505
  %v1958 = vunpack.c.l.b16 %v506
  %v1959 = vunpack.c.h.b16 %v506
  %v1960 = vunpack.c.l.b16 %v507
  %v1961 = vunpack.c.h.b16 %v507
  %v1962 = vunpack.c.l.b16 %v508
  %v1963 = vunpack.c.h.b16 %v508
  %v1964 = vunpack.c.l.b16 %v509
  %v1965 = vunpack.c.h.b16 %v509
  %v1966 = vunpack.c.l.b16 %v510
  %v1967 = vunpack.c.h.b16 %v510
  %v1968 = vunpack.c.l.b16 %v511
  %v1969 = vunpack.c.h.b16 %v511
  %v1970 = vunpack.c.l.b16 %v512
  %v1971 = vunpack.c.h.b16 %v512
  %v1972 = vunpack.c.l.b16 %v513
  %v1973 = vunpack.c.h.b16 %v513
  %v1974 = vunpack.c.l.b16 %v514
  %v1975 = vunpack.c.h.b16 %v514
  %v1976 = vunpack.c.l.b16 %v515
  %v1977 = vunpack.c.h.b16 %v515
  %v1978 = vunpack.c.l.b16 %v516
  %v1979 = vunpack.c.h.b16 %v516
  %v1980 = vunpack.c.l.b16 %v517
  %v1981 = vunpack.c.h.b16 %v517
  %v1982 = vunpack.c.l.b16 %v518
  %v1983 = vunpack.c.h.b16 %v518
  %v1984 = vunpack.c.l.b16 %v519
  %v1985 = vunpack.c.h.b16 %v519
  %v1986 = vunpack.c.l.b16 %v520
  %v1987 = vunpack.c.h.b16 %v520
  %v1988 = vunpack.c.l.b16 %v521
  %v1989 = vunpack.c.h.b16 %v521
  %v1990 = vunpack.c.l.b16 %v522
  %v1991 = vunpack.c.h.b16 %v522
  %v1992 = vunpack.c.l.b16 %v523
  %v1993 = vunpack.c.h.b16 %v523
  %v1994 = vunpack.c.l.b16 %v524
  %v1995 = vunpack.c.h.b16 %v524
  %v1996 = vunpack.c.l.b16 %v525
  %v1997 = vunpack.c.h.b16 %v525
  %v1998 = vunpack.c.l.b16 %v526
  %v1999 = vunpack.c.h.b16 %v526
  %v2000 = vunpack.c.l.b16 %v527
  %v2001 = vunpack.c.h.b16 %v527
  %v2002 = vunpack.c.l.b16 %v528
  %v2003 = vunpack.c.h.b16 %v528
  %v2004 = vunpack.c.l.b16 %v529
  %v2005 = vunpack.c.h.b16 %v529
  %v2006 = vunpack.c.l.b16 %v530
  %v2007 = vunpack.c.h.b16 %v530
  %v2008 = vunpack.c.l.b16 %v531
  %v2009 = vunpack.c.h.b16 %v531
  %v2010 = vunpack.c.l.b16 %v532
  %v2011 = vunpack.c.h.b16 %v532
  %v2012 = vunpack.c.l.b16 %v533
  %v2013 = vunpack.c.h.b16 %v533
  %v2014 = vunpack.c.l.b16 %v534
  %v2015 = vunpack.c.h.b16 %v534
  %v2016 = vunpack.c.l.b16 %v535
  %v2017 = vunpack.c.h.b16 %v535
  %v2018 = vunpack.c.l.b16 %v536
  %v2019 = vunpack.c.h.b16 %v536
  %v2020 = vunpack.c.l.b16 %v537
  %v2021 = vunpack.c.h.b16 %v537
  %v2022 = vunpack.c.l.b16 %v538
  %v2023 = vunpack.c.h.b16 %v538
  %v2024 = vunpack.c.l.b16 %v539
  %v2025 = vunpack.c.h.b16 %v539
  %v2026 = vunpack.c.l.b16 %v540
  %v2027 = vunpack.c.h.b16 %v540
  %v2028 = vunpack.c.l.b16 %v541
  %v2029 = vunpack.c.h.b16 %v541
  %v2030 = vunpack.c.l.b16 %v542
  %v2031 = vunpack.c.h.b16 %v542
  %v2032 = vunpack.c.l.b16 %v543
  %v2033 = vunpack.c.h.b16 %v543
  %v2034 = vunpack.c.l.b16 %v544
  %v2035 = vunpack.c.h.b16 %v544
  %v2036 = vunpack.c.l.b16 %v545
  %v2037 = vunpack.c.h.b16 %v545
  %v2038 = vunpack.c.l.b16 %v546
  %v2039 = vunpack.c.h.b16 %v546
  %v2040 = vunpack.c.l.b16 %v547
  %v2041 = vunpack.c.h.b16 %v547
  %v2042 = vunpack.c.l.b16 %v548
  %v2043 = vunpack.c.h.b16 %v548
  %v2044 = vunpack.c.l.b16 %v549
  %v2045 = vunpack.c.h.b16 %v549
  %v2046 = vunpack.c.l.b16 %v550
  %v2047 = vunpack.c.h.b16 %v550
  %v2048 = vunpack.c.l.b16 %v551
  %v2049 = vunpack.c.h.b16 %v551
  %v2050 = vunpack.c.l.b16 %v552
  %v2051 = vunpack.c.h.b16 %v552
  %v2052 = vunpack.c.l.b16 %v553
  %v2053 = vunpack.c.h.b16 %v553
  %v2054 = vunpack.c.l.b16 %v554
  %v2055 = vunpack.c.h.b16 %v554
  %v2056 = vunpack.c.l.b16 %v555
  %v2057 = vunpack.c.h.b16 %v555
  %v2058 = vunpack.c.l.b16 %v556
  %v2059 = vunpack.c.h.b16 %v556
  %v2060 = vunpack.c.l.b16 %v557
  %v2061 = vunpack.c.h.b16 %v557
  %v2062 = vunpack.c.l.b16 %v558
  %v2063 = vunpack.c.h.b16 %v558
  %v2064 = vunpack.c.l.b16 %v559
  %v2065 = vunpack.c.h.b16 %v559
  %v2066 = vunpack.c.l.b16 %v560
  %v2067 = vunpack.c.h.b16 %v560
  %v2068 = vunpack.c.l.b16 %v561
  %v2069 = vunpack.c.h.b16 %v561
  %v2070 = vunpack.c.l.b16 %v562
  %v2071 = vunpack.c.h.b16 %v562
  %v2072 = vunpack.c.l.b16 %v563
  %v2073 = vunpack.c.h.b16 %v563
  %v2074 = vunpack.c.l.b16 %v564
  %v2075 = vunpack.c.h.b16 %v564
  %v2076 = vunpack.c.l.b16 %v565
  %v2077 = vunpack.c.h.b16 %v565
  %v2078 = vunpack.c.l.b16 %v566
  %v2079 = vunpack.c.h.b16 %v566
  %v2080 = vunpack.c.l.b16 %v567
  %v2081 = vunpack.c.h.b16 %v567
  %v2082 = vunpack.c.l.b16 %v568
  %v2083 = vunpack.c.h.b16 %v568
  %v2084 = vunpack.c.l.b16 %v569
  %v2085 = vunpack.c.h.b16 %v569
  %v2086 = vunpack.c.l.b16 %v570
  %v2087 = vunpack.c.h.b16 %v570
  %v2088 = vunpack.c.l.b16 %v571
  %v2089 = vunpack.c.h.b16 %v571
  %v2090 = vunpack.c.l.b16 %v572
  %v2091 = vunpack.c.h.b16 %v572
  %v2092 = vunpack.c.l.b16 %v573
  %v2093 = vunpack.c.h.b16 %v573
  %v2094 = vunpack.c.l.b16 %v574
  %v2095 = vunpack.c.h.b16 %v574
  %v2096 = vunpack.c.l.b16 %v575
  %v2097 = vunpack.c.h.b16 %v575
  %v2098 = vunpack.c.l.b16 %v576
  %v2099 = vunpack.c.h.b16 %v576
  %v2100 = vunpack.c.l.b16 %v577
  %v2101 = vunpack.c.h.b16 %v577
  %v2102 = vunpack.c.l.b16 %v578
  %v2103 = vunpack.c.h.b16 %v578
  %v2104 = vunpack.c.l.b16 %v579
  %v2105 = vunpack.c.h.b16 %v579
  %v2106 = vunpack.c.l.b16 %v580
  %v2107 = vunpack.c.h.b16 %v580
  %v2108 = vunpack.c.l.b16 %v581
  %v2109 = vunpack.c.h.b16 %v581
  %v2110 = vunpack.c.l.b16 %v582
  %v2111 = vunpack.c.h.b16 %v582
  %v2112 = vunpack.c.l.b16 %v583
  %v2113 = vunpack.c.h.b16 %v583
  %v2114 = vunpack.c.l.b16 %v584
  %v2115 = vunpack.c.h.b16 %v584
  %v2116 = vunpack.c.l.b16 %v585
  %v2117 = vunpack.c.h.b16 %v585
  %v2118 = vunpack.c.l.b16 %v586
  %v2119 = vunpack.c.h.b16 %v586
  %v2120 = vunpack.c.l.b16 %v587
  %v2121 = vunpack.c.h.b16 %v587
  %v2122 = vunpack.c.l.b16 %v588
  %v2123 = vunpack.c.h.b16 %v588
  %v2124 = vunpack.c.l.b16 %v589
  %v2125 = vunpack.c.h.b16 %v589
  %v2126 = vunpack.c.l.b16 %v590
  %v2127 = vunpack.c.h.b16 %v590
  %v2128 = vunpack.c.l.b16 %v591
  %v2129 = vunpack.c.h.b16 %v591
  %v2130 = vunpack.c.l.b16 %v592
  %v2131 = vunpack.c.h.b16 %v592
  %v2132 = vunpack.c.l.b16 %v593
  %v2133 = vunpack.c.h.b16 %v593
  %v2134 = vunpack.c.l.b16 %v594
  %v2135 = vunpack.c.h.b16 %v594
  %v2136 = vunpack.c.l.b16 %v595
  %v2137 = vunpack.c.h.b16 %v595
  %v2138 = vunpack.c.l.b16 %v596
  %v2139 = vunpack.c.h.b16 %v596
  %v2140 = vunpack.c.l.b16 %v597
  %v2141 = vunpack.c.h.b16 %v597
  %v2142 = vunpack.c.l.b16 %v598
  %v2143 = vunpack.c.h.b16 %v598
  %v2144 = vunpack.c.l.b16 %v599
  %v2145 = vunpack.c.h.b16 %v599
  %v2146 = vunpack.c.l.b16 %v600
  %v2147 = vunpack.c.h.b16 %v600
  %v2148 = vunpack.c.l.b16 %v601
  %v2149 = vunpack.c.h.b16 %v601
  %v2150 = vpack.c.b16 %v1128, %v1126
  %v2151 = vpack.c.b16 %v1129, %v1127
  %v2152 = vpack.c.b16 %v1132, %v1130
  %v2153 = vpack.c.b16 %v1133, %v1131
  %v2154 = vpack.c.b16 %v1136, %v1134
  %v2155 = vpack.c.b16 %v1137, %v1135
  %v2156 = vpack.c.b16 %v1140, %v1138
  %v2157 = vpack.c.b16 %v1141, %v1139
  %v2158 = vpack.c.b16 %v1144, %v1142
  %v2159 = vpack.c.b16 %v1145, %v1143
  %v2160 = vpack.c.b16 %v1148, %v1146
  %v2161 = vpack.c.b16 %v1149, %v1147
  %v2162 = vpack.c.b16 %v1152, %v1150
  %v2163 = vpack.c.b16 %v1153, %v1151
  %v2164 = vpack.c.b16 %v1156, %v1154
  %v2165 = vpack.c.b16 %v1157, %v1155
  %v2166 = vpack.c.b16 %v1160, %v1158
  %v2167 = vpack.c.b16 %v1161, %v1159
  %v2168 = vpack.c.b16 %v1164, %v1162
  %v2169 = vpack.c.b16 %v1165, %v1163
  %v2170 = vpack.c.b16 %v1168, %v1166
  %v2171 = vpack.c.b16 %v1169, %v1167
  %v2172 = vpack.c.b16 %v1172, %v1170
  %v2173 = vpack.c.b16 %v1173, %v1171
  %v2174 = vpack.c.b16 %v1176, %v1174
  %v2175 = vpack.c.b16 %v1177, %v1175
  %v2176 = vpack.c.b16 %v1180, %v1178
  %v2177 = vpack.c.b16 %v1181, %v1179
  %v2178 = vpack.c.b16 %v1184, %v1182
  %v2179 = vpack.c.b16 %v1185, %v1183
  %v2180 = vpack.c.b16 %v1188, %v1186
  %v2181 = vpack.c.b16 %v1189, %v1187
  %v2182 = vpack.c.b16 %v1192, %v1190
  %v2183 = vpack.c.b16 %v1193, %v1191
  %v2184 = vpack.c.b16 %v1196, %v1194
  %v2185 = vpack.c.b16 %v1197, %v1195
  %v2186 = vpack.c.b16 %v1200, %v1198
  %v2187 = vpack.c.b16 %v1201, %v1199
  %v2188 = vpack.c.b16 %v1204, %v1202
  %v2189 = vpack.c.b16 %v1205, %v1203
  %v2190 = vpack.c.b16 %v1208, %v1206
  %v2191 = vpack.c.b16 %v1209, %v1207
  %v2192 = vpack.c.b16 %v1212, %v1210
  %v2193 = vpack.c.b16 %v1213, %v1211
  %v2194 = vpack.c.b16 %v1216, %v1214
  %v2195 = vpack.c.b16 %v1217, %v1215
  %v2196 = vpack.c.b16 %v1220, %v1218
  %v2197 = vpack.c.b16 %v1221, %v1219
  %v2198 = vpack.c.b16 %v1224, %v1222
  %v2199 = vpack.c.b16 %v1225, %v1223
  %v2200 = vpack.c.b16 %v1228, %v1226
  %v2201 = vpack.c.b16 %v1229, %v1227
  %v2202 = vpack.c.b16 %v1232, %v1230
  %v2203 = vpack.c.b16 %v1233, %v1231
  %v2204 = vpack.c.b16 %v1236, %v1234
  %v2205 = vpack.c.b16 %v1237, %v1235
  %v2206 = vpack.c.b16 %v1240, %v1238
  %v2207 = vpack.c.b16 %v1241, %v1239
  %v2208 = vpack.c.b16 %v1244, %v1242
  %v2209 = vpack.c.b16 %v1245, %v1243
  %v2210 = vpack.c.b16 %v1248, %v1246
  %v2211 = vpack.c.b16 %v1249, %v1247
  %v2212 = vpack.c.b16 %v1252, %v1250
  %v2213 = vpack.c.b16 %v1253, %v1251
  %v2214 = vpack.c.b16 %v1256, %v1254
  %v2215 = vpack.c.b16 %v1257, %v1255
  %v2216 = vpack.c.b16 %v1260, %v1258
  %v2217 = vpack.c.b16 %v1261, %v1259
  %v2218 = vpack.c.b16 %v1264, %v1262
  %v2219 = vpack.c.b16 %v1265, %v1263
  %v2220 = vpack.c.b16 %v1268, %v1266
  %v2221 = vpack.c.b16 %v1269, %v1267
  %v2222 = vpack.c.b16 %v1272, %v1270
  %v2223 = vpack.c.b16 %v1273, %v1271
  %v2224 = vpack.c.b16 %v1276, %v1274
  %v2225 = vpack.c.b16 %v1277, %v1275
  %v2226 = vpack.c.b16 %v1280, %v1278
  %v2227 = vpack.c.b16 %v1281, %v1279
  %v2228 = vpack.c.b16 %v1284, %v1282
  %v2229 = vpack.c.b16 %v1285, %v1283
  %v2230 = vpack.c.b16 %v1288, %v1286
  %v2231 = vpack.c.b16 %v1289, %v1287
  %v2232 = vpack.c.b16 %v1292, %v1290
  %v2233 = vpack.c.b16 %v1293, %v1291
  %v2234 = vpack.c.b16 %v1296, %v1294
  %v2235 = vpack.c.b16 %v1297, %v1295
  %v2236 = vpack.c.b16 %v1300, %v1298
  %v2237 = vpack.c.b16 %v1301, %v1299
  %v2238 = vpack.c.b16 %v1304, %v1302
  %v2239 = vpack.c.b16 %v1305, %v1303
  %v2240 = vpack.c.b16 %v1308, %v1306
  %v2241 = vpack.c.b16 %v1309, %v1307
  %v2242 = vpack.c.b16 %v1312, %v1310
  %v2243 = vpack.c.b16 %v1313, %v1311
  %v2244 = vpack.c.b16 %v1316, %v1314
  %v2245 = vpack.c.b16 %v1317, %v1315
  %v2246 = vpack.c.b16 %v1320, %v1318
  %v2247 = vpack.c.b16 %v1321, %v1319
  %v2248 = vpack.c.b16 %v1324, %v1322
  %v2249 = vpack.c.b16 %v1325, %v1323
  %v2250 = vpack.c.b16 %v1328, %v1326
  %v2251 = vpack.c.b16 %v1329, %v1327
  %v2252 = vpack.c.b16 %v1332, %v1330
  %v2253 = vpack.c.b16 %v1333, %v1331
  %v2254 = vpack.c.b16 %v1336, %v1334
  %v2255 = vpack.c.b16 %v1337, %v1335
  %v2256 = vpack.c.b16 %v1340, %v1338
  %v2257 = vpack.c.b16 %v1341, %v1339
  %v2258 = vpack.c.b16 %v1344, %v1342
  %v2259 = vpack.c.b16 %v1345, %v1343
  %v2260 = vpack.c.b16 %v1348, %v1346
  %v2261 = vpack.c.b16 %v1349, %v1347
  %v2262 = vpack.c.b16 %v1352, %v1350
  %v2263 = vpack.c.b16 %v1353, %v1351
  %v2264 = vpack.c.b16 %v1356, %v1354
  %v2265 = vpack.c.b16 %v1357, %v1355
  %v2266 = vpack.c.b16 %v1360, %v1358
  %v2267 = vpack.c.b16 %v1361, %v1359
  %v2268 = vpack.c.b16 %v1364, %v1362
  %v2269 = vpack.c.b16 %v1365, %v1363
  %v2270 = vpack.c.b16 %v1368, %v1366
  %v2271 = vpack.c.b16 %v1369, %v1367
  %v2272 = vpack.c.b16 %v1372, %v1370
  %v2273 = vpack.c.b16 %v1373, %v1371
  %v2274 = vpack.c.b16 %v1376, %v1374
  %v2275 = vpack.c.b16 %v1377, %v1375
  %v2276 = vpack.c.b16 %v1380, %v1378
  %v2277 = vpack.c.b16 %v1381, %v1379
  %v2278 = vpack.c.b16 %v1384, %v1382
  %v2279 = vpack.c.b16 %v1385, %v1383
  %v2280 = vpack.c.b16 %v1388, %v1386
  %v2281 = vpack.c.b16 %v1389, %v1387
  %v2282 = vpack.c.b16 %v1392, %v1390
  %v2283 = vpack.c.b16 %v1393, %v1391
  %v2284 = vpack.c.b16 %v1396, %v1394
  %v2285 = vpack.c.b16 %v1397, %v1395
  %v2286 = vpack.c.b16 %v1400, %v1398
  %v2287 = vpack.c.b16 %v1401, %v1399
  %v2288 = vpack.c.b16 %v1404, %v1402
  %v2289 = vpack.c.b16 %v1405, %v1403
  %v2290 = vpack.c.b16 %v1408, %v1406
  %v2291 = vpack.c.b16 %v1409, %v1407
  %v2292 = vpack.c.b16 %v1412, %v1410
  %v2293 = vpack.c.b16 %v1413, %v1411
  %v2294 = vpack.c.b16 %v1416, %v1414
  %v2295 = vpack.c.b16 %v1417, %v1415
  %v2296 = vpack.c.b16 %v1420, %v1418
  %v2297 = vpack.c.b16 %v1421, %v1419
  %v2298 = vpack.c.b16 %v1424, %v1422
  %v2299 = vpack.c.b16 %v1425, %v1423
  %v2300 = vpack.c.b16 %v1428, %v1426
  %v2301 = vpack.c.b16 %v1429, %v1427
  %v2302 = vpack.c.b16 %v1432, %v1430
  %v2303 = vpack.c.b16 %v1433, %v1431
  %v2304 = vpack.c.b16 %v1436, %v1434
  %v2305 = vpack.c.b16 %v1437, %v1435
  %v2306 = vpack.c.b16 %v1440, %v1438
  %v2307 = vpack.c.b16 %v1441, %v1439
  %v2308 = vpack.c.b16 %v1444, %v1442
  %v2309 = vpack.c.b16 %v1445, %v1443
  %v2310 = vpack.c.b16 %v1448, %v1446
  %v2311 = vpack.c.b16 %v1449, %v1447
  %v2312 = vpack.c.b16 %v1452, %v1450
  %v2313 = vpack.c.b16 %v1453, %v1451
  %v2314 = vpack.c.b16 %v1456, %v1454
  %v2315 = vpack.c.b16 %v1457, %v1455
  %v2316 = vpack.c.b16 %v1460, %v1458
  %v2317 = vpack.c.b16 %v1461, %v1459
  %v2318 = vpack.c.b16 %v1464, %v1462
  %v2319 = vpack.c.b16 %v1465, %v1463
  %v2320 = vpack.c.b16 %v1468, %v1466
  %v2321 = vpack.c.b16 %v1469, %v1467
  %v2322 = vpack.c.b16 %v1472, %v1470
  %v2323 = vpack.c.b16 %v1473, %v1471
  %v2324 = vpack.c.b16 %v1476, %v1474
  %v2325 = vpack.c.b16 %v1477, %v1475
  %v2326 = vpack.c.b16 %v1480, %v1478
  %v2327 = vpack.c.b16 %v1481, %v1479
  %v2328 = vpack.c.b16 %v1484, %v1482
  %v2329 = vpack.c.b16 %v1485, %v1483
  %v2330 = vpack.c.b16 %v1488, %v1486
  %v2331 = vpack.c.b16 %v1489, %v1487
  %v2332 = vpack.c.b16 %v1492, %v1490
  %v2333 = vpack.c.b16 %v1493, %v1491
  %v2334 = vpack.c.b16 %v1496, %v1494
  %v2335 = vpack.c.b16 %v1497, %v1495
  %v2336 = vpack.c.b16 %v1500, %v1498
  %v2337 = vpack.c.b16 %v1501, %v1499
  %v2338 = vpack.c.b16 %v1504, %v1502
  %v2339 = vpack.c.b16 %v1505, %v1503
  %v2340 = vpack.c.b16 %v1508, %v1506
  %v2341 = vpack.c.b16 %v1509, %v1507
  %v2342 = vpack.c.b16 %v1512, %v1510
  %v2343 = vpack.c.b16 %v1513, %v1511
  %v2344 = vpack.c.b16 %v1516, %v1514
  %v2345 = vpack.c.b16 %v1517, %v1515
  %v2346 = vpack.c.b16 %v1520, %v1518
  %v2347 = vpack.c.b16 %v1521, %v1519
  %v2348 = vpack.c.b16 %v1524, %v1522
  %v2349 = vpack.c.b16 %v1525, %v1523
  %v2350 = vpack.c.b16 %v1528, %v1526
  %v2351 = vpack.c.b16 %v1529, %v1527
  %v2352 = vpack.c.b16 %v1532, %v1530
  %v2353 = vpack.c.b16 %v1533, %v1531
  %v2354 = vpack.c.b16 %v1536, %v1534
  %v2355 = vpack.c.b16 %v1537, %v1535
  %v2356 = vpack.c.b16 %v1540, %v1538
  %v2357 = vpack.c.b16 %v1541, %v1539
  %v2358 = vpack.c.b16 %v1544, %v1542
  %v2359 = vpack.c.b16 %v1545, %v1543
  %v2360 = vpack.c.b16 %v1548, %v1546
  %v2361 = vpack.c.b16 %v1549, %v1547
  %v2362 = vpack.c.b16 %v1552, %v1550
  %v2363 = vpack.c.b16 %v1553, %v1551
  %v2364 = vpack.c.b16 %v1556, %v1554
  %v2365 = vpack.c.b16 %v1557, %v1555
  %v2366 = vpack.c.b16 %v1560, %v1558
  %v2367 = vpack.c.b16 %v1561, %v1559
  %v2368 = vpack.c.b16 %v1564, %v1562
  %v2369 = vpack.c.b16 %v1565, %v1563
  %v2370 = vpack.c.b16 %v1568, %v1566
  %v2371 = vpack.c.b16 %v1569, %v1567
  %v2372 = vpack.c.b16 %v1572, %v1570
  %v2373 = vpack.c.b16 %v1573, %v1571
  %v2374 = vpack.c.b16 %v1576, %v1574
  %v2375 = vpack.c.b16 %v1577, %v1575
  %v2376 = vpack.c.b16 %v1580, %v1578
  %v2377 = vpack.c.b16 %v1581, %v1579
  %v2378 = vpack.c.b16 %v1584, %v1582
  %v2379 = vpack.c.b16 %v1585, %v1583
  %v2380 = vpack.c.b16 %v1588, %v1586
  %v2381 = vpack.c.b16 %v1589, %v1587
  %v2382 = vpack.c.b16 %v1592, %v1590
  %v2383 = vpack.c.b16 %v1593, %v1591
  %v2384 = vpack.c.b16 %v1596, %v1594
  %v2385 = vpack.c.b16 %v1597, %v1595
  %v2386 = vpack.c.b16 %v1600, %v1598
  %v2387 = vpack.c.b16 %v1601, %v1599
  %v2388 = vpack.c.b16 %v1604, %v1602
  %v2389 = vpack.c.b16 %v1605, %v1603
  %v2390 = vpack.c.b16 %v1608, %v1606
  %v2391 = vpack.c.b16 %v1609, %v1607
  %v2392 = vpack.c.b16 %v1612, %v1610
  %v2393 = vpack.c.b16 %v1613, %v1611
  %v2394 = vpack.c.b16 %v1616, %v1614
  %v2395 = vpack.c.b16 %v1617, %v1615
  %v2396 = vpack.c.b16 %v1620, %v1618
  %v2397 = vpack.c.b16 %v1621, %v1619
  %v2398 = vpack.c.b16 %v1624, %v1622
  %v2399 = vpack.c.b16 %v1625, %v1623
  %v2400 = vpack.c.b16 %v1628, %v1626
  %v2401 = vpack.c.b16 %v1629, %v1627
  %v2402 = vpack.c.b16 %v1632, %v1630
  %v2403 = vpack.c.b16 %v1633, %v1631
  %v2404 = vpack.c.b16 %v1636, %v1634
  %v2405 = vpack.c.b16 %v1637, %v1635
  %v2406 = vpack.c.b16 %v1640, %v1638
  %v2407 = vpack.c.b16 %v1641, %v1639
  %v2408 = vpack.c.b16 %v1644, %v1642
  %v2409 = vpack.c.b16 %v1645, %v1643
  %v2410 = vpack.c.b16 %v1648, %v1646
  %v2411 = vpack.c.b16 %v1649, %v1647
  %v2412 = vpack.c.b16 %v1652, %v1650
  %v2413 = vpack.c.b16 %v1653, %v1651
  %v2414 = vpack.c.b16 %v1656, %v1654
  %v2415 = vpack.c.b16 %v1657, %v1655
  %v2416 = vpack.c.b16 %v1660, %v1658
  %v2417 = vpack.c.b16 %v1661, %v1659
  %v2418 = vpack.c.b16 %v1664, %v1662
  %v2419 = vpack.c.b16 %v1665, %v1663
  %v2420 = vpack.c.b16 %v1668, %v1666
  %v2421 = vpack.c.b16 %v1669, %v1667
  %v2422 = vpack.c.b16 %v1672, %v1670
  %v2423 = vpack.c.b16 %v1673, %v1671
  %v2424 = vpack.c.b16 %v1676, %v1674
  %v2425 = vpack.c.b16 %v1677, %v1675
  %v2426 = vpack.c.b16 %v1680, %v1678
  %v2427 = vpack.c.b16 %v1681, %v1679
  %v2428 = vpack.c.b16 %v1684, %v1682
  %v2429 = vpack.c.b16 %v1685, %v1683
  %v2430 = vpack.c.b16 %v1688, %v1686
  %v2431 = vpack.c.b16 %v1689, %v1687
  %v2432 = vpack.c.b16 %v1692, %v1690
  %v2433 = vpack.c.b16 %v1693, %v1691
  %v2434 = vpack.c.b16 %v1696, %v1694
  %v2435 = vpack.c.b16 %v1697, %v1695
  %v2436 = vpack.c.b16 %v1700, %v1698
  %v2437 = vpack.c.b16 %v1701, %v1699
  %v2438 = vpack.c.b16 %v1704, %v1702
  %v2439 = vpack.c.b16 %v1705, %v1703
  %v2440 = vpack.c.b16 %v1708, %v1706
  %v2441 = vpack.c.b16 %v1709, %v1707
  %v2442 = vpack.c.b16 %v1712, %v1710
  %v2443 = vpack.c.b16 %v1713, %v1711
  %v2444 = vpack.c.b16 %v1716, %v1714
  %v2445 = vpack.c.b16 %v1717, %v1715
  %v2446 = vpack.c.b16 %v1720, %v1718
  %v2447 = vpack.c.b16 %v1721, %v1719
  %v2448 = vpack.c.b16 %v1724, %v1722
  %v2449 = vpack.c.b16 %v1725, %v1723
  %v2450 = vpack.c.b16 %v1728, %v1726
  %v2451 = vpack.c.b16 %v1729, %v1727
  %v2452 = vpack.c.b16 %v1732, %v1730
  %v2453 = vpack.c.b16 %v1733, %v1731
  %v2454 = vpack.c.b16 %v1736, %v1734
  %v2455 = vpack.c.b16 %v1737, %v1735
  %v2456 = vpack.c.b16 %v1740, %v1738
  %v2457 = vpack.c.b16 %v1741, %v1739
  %v2458 = vpack.c.b16 %v1744, %v1742
  %v2459 = vpack.c.b16 %v1745, %v1743
  %v2460 = vpack.c.b16 %v1748, %v1746
  %v2461 = vpack.c.b16 %v1749, %v1747
  %v2462 = vpack.c.b16 %v1752, %v1750
  %v2463 = vpack.c.b16 %v1753, %v1751
  %v2464 = vpack.c.b16 %v1756, %v1754
  %v2465 = vpack.c.b16 %v1757, %v1755
  %v2466 = vpack.c.b16 %v1760, %v1758
  %v2467 = vpack.c.b16 %v1761, %v1759
  %v2468 = vpack.c.b16 %v1764, %v1762
  %v2469 = vpack.c.b16 %v1765, %v1763
  %v2470 = vpack.c.b16 %v1768, %v1766
  %v2471 = vpack.c.b16 %v1769, %v1767
  %v2472 = vpack.c.b16 %v1772, %v1770
  %v2473 = vpack.c.b16 %v1773, %v1771
  %v2474 = vpack.c.b16 %v1776, %v1774
  %v2475 = vpack.c.b16 %v1777, %v1775
  %v2476 = vpack.c.b16 %v1780, %v1778
  %v2477 = vpack.c.b16 %v1781, %v1779
  %v2478 = vpack.c.b16 %v1784, %v1782
  %v2479 = vpack.c.b16 %v1785, %v1783
  %v2480 = vpack.c.b16 %v1788, %v1786
  %v2481 = vpack.c.b16 %v1789, %v1787
  %v2482 = vpack.c.b16 %v1792, %v1790
  %v2483 = vpack.c.b16 %v1793, %v1791
  %v2484 = vpack.c.b16 %v1796, %v1794
  %v2485 = vpack.c.b16 %v1797, %v1795
  %v2486 = vpack.c.b16 %v1800, %v1798
  %v2487 = vpack.c.b16 %v1801, %v1799
  %v2488 = vpack.c.b16 %v1804, %v1802
  %v2489 = vpack.c.b16 %v1805, %v1803
  %v2490 = vpack.c.b16 %v1808, %v1806
  %v2491 = vpack.c.b16 %v1809, %v1807
  %v2492 = vpack.c.b16 %v1812, %v1810
  %v2493 = vpack.c.b16 %v1813, %v1811
  %v2494 = vpack.c.b16 %v1816, %v1814
  %v2495 = vpack.c.b16 %v1817, %v1815
  %v2496 = vpack.c.b16 %v1820, %v1818
  %v2497 = vpack.c.b16 %v1821, %v1819
  %v2498 = vpack.c.b16 %v1824, %v1822
  %v2499 = vpack.c.b16 %v1825, %v1823
  %v2500 = vpack.c.b16 %v1828, %v1826
  %v2501 = vpack.c.b16 %v1829, %v1827
  %v2502 = vpack.c.b16 %v1832, %v1830
  %v2503 = vpack.c.b16 %v1833, %v1831
  %v2504 = vpack.c.b16 %v1836, %v1834
  %v2505 = vpack.c.b16 %v1837, %v1835
  %v2506 = vpack.c.b16 %v1840, %v1838
  %v2507 = vpack.c.b16 %v1841, %v1839
  %v2508 = vpack.c.b16 %v1844, %v1842
  %v2509 = vpack.c.b16 %v1845, %v1843
  %v2510 = vpack.c.b16 %v1848, %v1846
  %v2511 = vpack.c.b16 %v1849, %v1847
  %v2512 = vpack.c.b16 %v1852, %v1850
  %v2513 = vpack.c.b16 %v1853, %v1851
  %v2514 = vpack.c.b16 %v1856, %v1854
  %v2515 = vpack.c.b16 %v1857, %v1855
  %v2516 = vpack.c.b16 %v1860, %v1858
  %v2517 = vpack.c.b16 %v1861, %v1859
  %v2518 = vpack.c.b16 %v1864, %v1862
  %v2519 = vpack.c.b16 %v1865, %v1863
  %v2520 = vpack.c.b16 %v1868, %v1866
  %v2521 = vpack.c.b16 %v1869, %v1867
  %v2522 = vpack.c.b16 %v1872, %v1870
  %v2523 = vpack.c.b16 %v1873, %v1871
  %v2524 = vpack.c.b16 %v1876, %v1874
  %v2525 = vpack.c.b16 %v1877, %v1875
  %v2526 = vpack.c.b16 %v1880, %v1878
  %v2527 = vpack.c.b16 %v1881, %v1879
  %v2528 = vpack.c.b16 %v1884, %v1882
  %v2529 = vpack.c.b16 %v1885, %v1883
  %v2530 = vpack.c.b16 %v1888, %v1886
  %v2531 = vpack.c.b16 %v1889, %v1887
  %v2532 = vpack.c.b16 %v1892, %v1890
  %v2533 = vpack.c.b16 %v1893, %v1891
  %v2534 = vpack.c.b16 %v1896, %v1894
  %v2535 = vpack.c.b16 %v1897, %v1895
  %v2536 = vpack.c.b16 %v1900, %v1898
  %v2537 = vpack.c.b16 %v1901, %v1899
  %v2538 = vpack.c.b16 %v1904, %v1902
  %v2539 = vpack.c.b16 %v1905, %v1903
  %v2540 = vpack.c.b16 %v1908, %v1906
  %v2541 = vpack.c.b16 %v1909, %v1907
  %v2542 = vpack.c.b16 %v1912, %v1910
  %v2543 = vpack.c.b16 %v1913, %v1911
  %v2544 = vpack.c.b16 %v1916, %v1914
  %v2545 = vpack.c.b16 %v1917, %v1915
  %v2546 = vpack.c.b16 %v1920, %v1918
  %v2547 = vpack.c.b16 %v1921, %v1919
  %v2548 = vpack.c.b16 %v1924, %v1922
  %v2549 = vpack.c.b16 %v1925, %v1923
  %v2550 = vpack.c.b16 %v1928, %v1926
  %v2551 = vpack.c.b16 %v1929, %v1927
  %v2552 = vpack.c.b16 %v1932, %v1930
  %v2553 = vpack.c.b16 %v1933, %v1931
  %v2554 = vpack.c.b16 %v1936, %v1934
  %v2555 = vpack.c.b16 %v1937, %v1935
  %v2556 = vpack.c.b16 %v1940, %v1938
  %v2557 = vpack.c.b16 %v1941, %v1939
  %v2558 = vpack.c.b16 %v1944, %v1942
  %v2559 = vpack.c.b16 %v1945, %v1943
  %v2560 = vpack.c.b16 %v1948, %v1946
  %v2561 = vpack.c.b16 %v1949, %v1947
  %v2562 = vpack.c.b16 %v1952, %v1950
  %v2563 = vpack.c.b16 %v1953, %v1951
  %v2564 = vpack.c.b16 %v1956, %v1954
  %v2565 = vpack.c.b16 %v1957, %v1955
  %v2566 = vpack.c.b16 %v1960, %v1958
  %v2567 = vpack.c.b16 %v1961, %v1959
  %v2568 = vpack.c.b16 %v1964, %v1962
  %v2569 = vpack.c.b16 %v1965, %v1963
  %v2570 = vpack.c.b16 %v1968, %v1966
  %v2571 = vpack.c.b16 %v1969, %v1967
  %v2572 = vpack.c.b16 %v1972, %v1970
  %v2573 = vpack.c.b16 %v1973, %v1971
  %v2574 = vpack.c.b16 %v1976, %v1974
  %v2575 = vpack.c.b16 %v1977, %v1975
  %v2576 = vpack.c.b16 %v1980, %v1978
  %v2577 = vpack.c.b16 %v1981, %v1979
  %v2578 = vpack.c.b16 %v1984, %v1982
  %v2579 = vpack.c.b16 %v1985, %v1983
  %v2580 = vpack.c.b16 %v1988, %v1986
  %v2581 = vpack.c.b16 %v1989, %v1987
  %v2582 = vpack.c.b16 %v1992, %v1990
  %v2583 = vpack.c.b16 %v1993, %v1991
  %v2584 = vpack.c.b16 %v1996, %v1994
  %v2585 = vpack.c.b16 %v1997, %v1995
  %v2586 = vpack.c.b16 %v2000, %v1998
  %v2587 = vpack.c.b16 %v2001, %v1999
  %v2588 = vpack.c.b16 %v2004, %v2002
  %v2589 = vpack.c.b16 %v2005, %v2003
  %v2590 = vpack.c.b16 %v2008, %v2006
  %v2591 = vpack.c.b16 %v2009, %v2007
  %v2592 = vpack.c.b16 %v2012, %v2010
  %v2593 = vpack.c.b16 %v2013, %v2011
  %v2594 = vpack.c.b16 %v2016, %v2014
  %v2595 = vpack.c.b16 %v2017, %v2015
  %v2596 = vpack.c.b16 %v2020, %v2018
  %v2597 = vpack.c.b16 %v2021, %v2019
  %v2598 = vpack.c.b16 %v2024, %v2022
  %v2599 = vpack.c.b16 %v2025, %v2023
  %v2600 = vpack.c.b16 %v2028, %v2026
  %v2601 = vpack.c.b16 %v2029, %v2027
  %v2602 = vpack.c.b16 %v2032, %v2030
  %v2603 = vpack.c.b16 %v2033, %v2031
  %v2604 = vpack.c.b16 %v2036, %v2034
  %v2605 = vpack.c.b16 %v2037, %v2035
  %v2606 = vpack.c.b16 %v2040, %v2038
  %v2607 = vpack.c.b16 %v2041, %v2039
  %v2608 = vpack.c.b16 %v2044, %v2042
  %v2609 = vpack.c.b16 %v2045, %v2043
  %v2610 = vpack.c.b16 %v2048, %v2046
  %v2611 = vpack.c.b16 %v2049, %v2047
  %v2612 = vpack.c.b16 %v2052, %v2050
  %v2613 = vpack.c.b16 %v2053, %v2051
  %v2614 = vpack.c.b16 %v2056, %v2054
  %v2615 = vpack.c.b16 %v2057, %v2055
  %v2616 = vpack.c.b16 %v2060, %v2058
  %v2617 = vpack.c.b16 %v2061, %v2059
  %v2618 = vpack.c.b16 %v2064, %v2062
  %v2619 = vpack.c.b16 %v2065, %v2063
  %v2620 = vpack.c.b16 %v2068, %v2066
  %v2621 = vpack.c.b16 %v2069, %v2067
  %v2622 = vpack.c.b16 %v2072, %v2070
  %v2623 = vpack.c.b16 %v2073, %v2071
  %v2624 = vpack.c.b16 %v2076, %v2074
  %v2625 = vpack.c.b16 %v2077, %v2075
  %v2626 = vpack.c.b16 %v2080, %v2078
  %v2627 = vpack.c.b16 %v2081, %v2079
  %v2628 = vpack.c.b16 %v2084, %v2082
  %v2629 = vpack.c.b16 %v2085, %v2083
  %v2630 = vpack.c.b16 %v2088, %v2086
  %v2631 = vpack.c.b16 %v2089, %v2087
  %v2632 = vpack.c.b16 %v2092, %v2090
  %v2633 = vpack.c.b16 %v2093, %v2091
  %v2634 = vpack.c.b16 %v2096, %v2094
  %v2635 = vpack.c.b16 %v2097, %v2095
  %v2636 = vpack.c.b16 %v2100, %v2098
  %v2637 = vpack.c.b16 %v2101, %v2099
  %v2638 = vpack.c.b16 %v2104, %v2102
  %v2639 = vpack.c.b16 %v2105, %v2103
  %v2640 = vpack.c.b16 %v2108, %v2106
  %v2641 = vpack.c.b16 %v2109, %v2107
  %v2642 = vpack.c.b16 %v2112, %v2110
  %v2643 = vpack.c.b16 %v2113, %v2111
  %v2644 = vpack.c.b16 %v2116, %v2114
  %v2645 = vpack.c.b16 %v2117, %v2115
  %v2646 = vpack.c.b16 %v2120, %v2118
  %v2647 = vpack.c.b16 %v2121, %v2119
  %v2648 = vpack.c.b16 %v2124, %v2122
  %v2649 = vpack.c.b16 %v2125, %v2123
  %v2650 = vpack.c.b16 %v2128, %v2126
  %v2651 = vpack.c.b16 %v2129, %v2127
  %v2652 = vpack.c.b16 %v2132, %v2130
  %v2653 = vpack.c.b16 %v2133, %v2131
  %v2654 = vpack.c.b16 %v2136, %v2134
  %v2655 = vpack.c.b16 %v2137, %v2135
  %v2656 = vpack.c.b16 %v2140, %v2138
  %v2657 = vpack.c.b16 %v2141, %v2139
  %v2658 = vpack.c.b16 %v2144, %v2142
  %v2659 = vpack.c.b16 %v2145, %v2143
  %v2660 = vpack.c.b16 %v2148, %v2146
  %v2661 = vpack.c.b16 %v2149, %v2147
  %3174 = vmatprep.subr.bf16.mxu0 %v2165
  %3175 = vmatpush1.bf16.msra.mxu0 %v2164
  %3176 = vmatprep.subr.bf16.mxu0 %v2163
  %3177 = vmatpush1.bf16.msra.mxu0 %v2162
  %3178 = vmatprep.subr.bf16.mxu0 %v2161
  %3179 = vmatpush1.bf16.msra.mxu0 %v2160
  %3180 = vmatprep.subr.bf16.mxu0 %v2159
  %3181 = vmatpush1.bf16.msra.mxu0 %v2158
  %3182 = vmatprep.subr.bf16.mxu0 %v2157
  %3183 = vmatpush1.bf16.msra.mxu0 %v2156
  %3184 = vmatprep.subr.bf16.mxu0 %v2155
  %3185 = vmatpush1.bf16.msra.mxu0 %v2154
  %3186 = vmatprep.subr.bf16.mxu0 %v2153
  %3187 = vmatpush1.bf16.msra.mxu0 %v2152
  %3188 = vmatprep.subr.bf16.mxu0 %v2151
  %3189 = vmatpush1.bf16.msra.mxu0 %v2150
  %3190 = vmatprep.subr.bf16.mxu0 %v2181
  %3191 = vmatpush2.bf16.msra.mxu0 %v2180
  %3192 = vmatprep.subr.bf16.mxu0 %v2179
  %3193 = vmatpush2.bf16.msra.mxu0 %v2178
  %3194 = vmatprep.subr.bf16.mxu0 %v2177
  %3195 = vmatpush2.bf16.msra.mxu0 %v2176
  %3196 = vmatprep.subr.bf16.mxu0 %v2175
  %3197 = vmatpush2.bf16.msra.mxu0 %v2174
  %3198 = vmatprep.subr.bf16.mxu0 %v2173
  %3199 = vmatpush2.bf16.msra.mxu0 %v2172
  %3200 = vmatprep.subr.bf16.mxu0 %v2171
  %3201 = vmatpush2.bf16.msra.mxu0 %v2170
  %3202 = vmatprep.subr.bf16.mxu0 %v2169
  %3203 = vmatpush2.bf16.msra.mxu0 %v2168
  %3204 = vmatprep.subr.bf16.mxu0 %v2167
  %3205 = vmatpush2.bf16.msra.mxu0 %v2166
  %3206 = vmatprep.mubr.bf16.mxu0 %v59
  %3207 = vmatmul.mubr.bf16.gmra.mxu0 %v58
  %v3208 = vpop.f32.mrf.mxu0
  %v3209 = vadd.f32 %v607, %v3208
  %v3210 = vpop.f32.mrf.mxu0
  %v3211 = vadd.f32 %v611, %v3210
  %v3212 = vpop.f32.mrf.mxu0
  %v3213 = vpop.f32.mrf.mxu0
  %3214 = vdwg.mxu0
  %3215 = vmatprep.subr.bf16.mxu0 %v2197
  %3216 = vmatpush1.bf16.msra.mxu0 %v2196
  %3217 = vmatprep.subr.bf16.mxu0 %v2195
  %3218 = vmatpush1.bf16.msra.mxu0 %v2194
  %3219 = vmatprep.subr.bf16.mxu0 %v2193
  %3220 = vmatpush1.bf16.msra.mxu0 %v2192
  %3221 = vmatprep.subr.bf16.mxu0 %v2191
  %3222 = vmatpush1.bf16.msra.mxu0 %v2190
  %3223 = vmatprep.subr.bf16.mxu0 %v2189
  %3224 = vmatpush1.bf16.msra.mxu0 %v2188
  %3225 = vmatprep.subr.bf16.mxu0 %v2187
  %3226 = vmatpush1.bf16.msra.mxu0 %v2186
  %3227 = vmatprep.subr.bf16.mxu0 %v2185
  %3228 = vmatpush1.bf16.msra.mxu0 %v2184
  %3229 = vmatprep.subr.bf16.mxu0 %v2183
  %3230 = vmatpush1.bf16.msra.mxu0 %v2182
  %3231 = vmatprep.subr.bf16.mxu0 %v2213
  %3232 = vmatpush2.bf16.msra.mxu0 %v2212
  %3233 = vmatprep.subr.bf16.mxu0 %v2211
  %3234 = vmatpush2.bf16.msra.mxu0 %v2210
  %3235 = vmatprep.subr.bf16.mxu0 %v2209
  %3236 = vmatpush2.bf16.msra.mxu0 %v2208
  %3237 = vmatprep.subr.bf16.mxu0 %v2207
  %3238 = vmatpush2.bf16.msra.mxu0 %v2206
  %3239 = vmatprep.subr.bf16.mxu0 %v2205
  %3240 = vmatpush2.bf16.msra.mxu0 %v2204
  %3241 = vmatprep.subr.bf16.mxu0 %v2203
  %3242 = vmatpush2.bf16.msra.mxu0 %v2202
  %3243 = vmatprep.subr.bf16.mxu0 %v2201
  %3244 = vmatpush2.bf16.msra.mxu0 %v2200
  %3245 = vmatprep.subr.bf16.mxu0 %v2199
  %3246 = vmatpush2.bf16.msra.mxu0 %v2198
  %3247 = vmatprep.mubr.bf16.mxu0 %v61
  %3248 = vmatmul.mubr.bf16.gmra.mxu0 %v60
  %v3249 = vpop.f32.mrf.mxu0
  %v3250 = vadd.f32 %v3209, %v3249
  %v3251 = vpop.f32.mrf.mxu0
  %v3252 = vadd.f32 %v3211, %v3251
  %v3253 = vpop.f32.mrf.mxu0
  %v3254 = vpop.f32.mrf.mxu0
  %3255 = vdwg.mxu0
  %3256 = vmatprep.subr.bf16.mxu0 %v2229
  %3257 = vmatpush1.bf16.msra.mxu0 %v2228
  %3258 = vmatprep.subr.bf16.mxu0 %v2227
  %3259 = vmatpush1.bf16.msra.mxu0 %v2226
  %3260 = vmatprep.subr.bf16.mxu0 %v2225
  %3261 = vmatpush1.bf16.msra.mxu0 %v2224
  %3262 = vmatprep.subr.bf16.mxu0 %v2223
  %3263 = vmatpush1.bf16.msra.mxu0 %v2222
  %3264 = vmatprep.subr.bf16.mxu0 %v2221
  %3265 = vmatpush1.bf16.msra.mxu0 %v2220
  %3266 = vmatprep.subr.bf16.mxu0 %v2219
  %3267 = vmatpush1.bf16.msra.mxu0 %v2218
  %3268 = vmatprep.subr.bf16.mxu0 %v2217
  %3269 = vmatpush1.bf16.msra.mxu0 %v2216
  %3270 = vmatprep.subr.bf16.mxu0 %v2215
  %3271 = vmatpush1.bf16.msra.mxu0 %v2214
  %3272 = vmatprep.subr.bf16.mxu0 %v2245
  %3273 = vmatpush2.bf16.msra.mxu0 %v2244
  %3274 = vmatprep.subr.bf16.mxu0 %v2243
  %3275 = vmatpush2.bf16.msra.mxu0 %v2242
  %3276 = vmatprep.subr.bf16.mxu0 %v2241
  %3277 = vmatpush2.bf16.msra.mxu0 %v2240
  %3278 = vmatprep.subr.bf16.mxu0 %v2239
  %3279 = vmatpush2.bf16.msra.mxu0 %v2238
  %3280 = vmatprep.subr.bf16.mxu0 %v2237
  %3281 = vmatpush2.bf16.msra.mxu0 %v2236
  %3282 = vmatprep.subr.bf16.mxu0 %v2235
  %3283 = vmatpush2.bf16.msra.mxu0 %v2234
  %3284 = vmatprep.subr.bf16.mxu0 %v2233
  %3285 = vmatpush2.bf16.msra.mxu0 %v2232
  %3286 = vmatprep.subr.bf16.mxu0 %v2231
  %3287 = vmatpush2.bf16.msra.mxu0 %v2230
  %3288 = vmatprep.mubr.bf16.mxu0 %v63
  %3289 = vmatmul.mubr.bf16.gmra.mxu0 %v62
  %v3290 = vpop.f32.mrf.mxu0
  %v3291 = vadd.f32 %v3250, %v3290
  %v3292 = vpop.f32.mrf.mxu0
  %v3293 = vadd.f32 %v3252, %v3292
  %v3294 = vpop.f32.mrf.mxu0
  %v3295 = vpop.f32.mrf.mxu0
  %3296 = vdwg.mxu0
  %3297 = vmatprep.subr.bf16.mxu0 %v2261
  %3298 = vmatpush1.bf16.msra.mxu0 %v2260
  %3299 = vmatprep.subr.bf16.mxu0 %v2259
  %3300 = vmatpush1.bf16.msra.mxu0 %v2258
  %3301 = vmatprep.subr.bf16.mxu0 %v2257
  %3302 = vmatpush1.bf16.msra.mxu0 %v2256
  %3303 = vmatprep.subr.bf16.mxu0 %v2255
  %3304 = vmatpush1.bf16.msra.mxu0 %v2254
  %3305 = vmatprep.subr.bf16.mxu0 %v2253
  %3306 = vmatpush1.bf16.msra.mxu0 %v2252
  %3307 = vmatprep.subr.bf16.mxu0 %v2251
  %3308 = vmatpush1.bf16.msra.mxu0 %v2250
  %3309 = vmatprep.subr.bf16.mxu0 %v2249
  %3310 = vmatpush1.bf16.msra.mxu0 %v2248
  %3311 = vmatprep.subr.bf16.mxu0 %v2247
  %3312 = vmatpush1.bf16.msra.mxu0 %v2246
  %3313 = vmatprep.subr.bf16.mxu0 %v2277
  %3314 = vmatpush2.bf16.msra.mxu0 %v2276
  %3315 = vmatprep.subr.bf16.mxu0 %v2275
  %3316 = vmatpush2.bf16.msra.mxu0 %v2274
  %3317 = vmatprep.subr.bf16.mxu0 %v2273
  %3318 = vmatpush2.bf16.msra.mxu0 %v2272
  %3319 = vmatprep.subr.bf16.mxu0 %v2271
  %3320 = vmatpush2.bf16.msra.mxu0 %v2270
  %3321 = vmatprep.subr.bf16.mxu0 %v2269
  %3322 = vmatpush2.bf16.msra.mxu0 %v2268
  %3323 = vmatprep.subr.bf16.mxu0 %v2267
  %3324 = vmatpush2.bf16.msra.mxu0 %v2266
  %3325 = vmatprep.subr.bf16.mxu0 %v2265
  %3326 = vmatpush2.bf16.msra.mxu0 %v2264
  %3327 = vmatprep.subr.bf16.mxu0 %v2263
  %3328 = vmatpush2.bf16.msra.mxu0 %v2262
  %3329 = vmatprep.mubr.bf16.mxu0 %v65
  %3330 = vmatmul.mubr.bf16.gmra.mxu0 %v64
  %v3331 = vpop.f32.mrf.mxu0
  %v3332 = vadd.f32 %v3291, %v3331
  %v3333 = vpop.f32.mrf.mxu0
  %v3334 = vadd.f32 %v3293, %v3333
  %v3335 = vpop.f32.mrf.mxu0
  %v3336 = vpop.f32.mrf.mxu0
  %3337 = vdwg.mxu0
  %3338 = vmatprep.subr.bf16.mxu0 %v2293
  %3339 = vmatpush1.bf16.msra.mxu0 %v2292
  %3340 = vmatprep.subr.bf16.mxu0 %v2291
  %3341 = vmatpush1.bf16.msra.mxu0 %v2290
  %3342 = vmatprep.subr.bf16.mxu0 %v2289
  %3343 = vmatpush1.bf16.msra.mxu0 %v2288
  %3344 = vmatprep.subr.bf16.mxu0 %v2287
  %3345 = vmatpush1.bf16.msra.mxu0 %v2286
  %3346 = vmatprep.subr.bf16.mxu0 %v2285
  %3347 = vmatpush1.bf16.msra.mxu0 %v2284
  %3348 = vmatprep.subr.bf16.mxu0 %v2283
  %3349 = vmatpush1.bf16.msra.mxu0 %v2282
  %3350 = vmatprep.subr.bf16.mxu0 %v2281
  %3351 = vmatpush1.bf16.msra.mxu0 %v2280
  %3352 = vmatprep.subr.bf16.mxu0 %v2279
  %3353 = vmatpush1.bf16.msra.mxu0 %v2278
  %3354 = vmatprep.subr.bf16.mxu0 %v2309
  %3355 = vmatpush2.bf16.msra.mxu0 %v2308
  %3356 = vmatprep.subr.bf16.mxu0 %v2307
  %3357 = vmatpush2.bf16.msra.mxu0 %v2306
  %3358 = vmatprep.subr.bf16.mxu0 %v2305
  %3359 = vmatpush2.bf16.msra.mxu0 %v2304
  %3360 = vmatprep.subr.bf16.mxu0 %v2303
  %3361 = vmatpush2.bf16.msra.mxu0 %v2302
  %3362 = vmatprep.subr.bf16.mxu0 %v2301
  %3363 = vmatpush2.bf16.msra.mxu0 %v2300
  %3364 = vmatprep.subr.bf16.mxu0 %v2299
  %3365 = vmatpush2.bf16.msra.mxu0 %v2298
  %3366 = vmatprep.subr.bf16.mxu0 %v2297
  %3367 = vmatpush2.bf16.msra.mxu0 %v2296
  %3368 = vmatprep.subr.bf16.mxu0 %v2295
  %3369 = vmatpush2.bf16.msra.mxu0 %v2294
  %3370 = vmatprep.mubr.bf16.mxu0 %v67
  %3371 = vmatmul.mubr.bf16.gmra.mxu0 %v66
  %v3372 = vpop.f32.mrf.mxu0
  %v3373 = vadd.f32 %v3332, %v3372
  %v3374 = vpop.f32.mrf.mxu0
  %v3375 = vadd.f32 %v3334, %v3374
  %v3376 = vpop.f32.mrf.mxu0
  %v3377 = vpop.f32.mrf.mxu0
  %3378 = vdwg.mxu0
  %3379 = vmatprep.subr.bf16.mxu0 %v2325
  %3380 = vmatpush1.bf16.msra.mxu0 %v2324
  %3381 = vmatprep.subr.bf16.mxu0 %v2323
  %3382 = vmatpush1.bf16.msra.mxu0 %v2322
  %3383 = vmatprep.subr.bf16.mxu0 %v2321
  %3384 = vmatpush1.bf16.msra.mxu0 %v2320
  %3385 = vmatprep.subr.bf16.mxu0 %v2319
  %3386 = vmatpush1.bf16.msra.mxu0 %v2318
  %3387 = vmatprep.subr.bf16.mxu0 %v2317
  %3388 = vmatpush1.bf16.msra.mxu0 %v2316
  %3389 = vmatprep.subr.bf16.mxu0 %v2315
  %3390 = vmatpush1.bf16.msra.mxu0 %v2314
  %3391 = vmatprep.subr.bf16.mxu0 %v2313
  %3392 = vmatpush1.bf16.msra.mxu0 %v2312
  %3393 = vmatprep.subr.bf16.mxu0 %v2311
  %3394 = vmatpush1.bf16.msra.mxu0 %v2310
  %3395 = vmatprep.subr.bf16.mxu0 %v2341
  %3396 = vmatpush2.bf16.msra.mxu0 %v2340
  %3397 = vmatprep.subr.bf16.mxu0 %v2339
  %3398 = vmatpush2.bf16.msra.mxu0 %v2338
  %3399 = vmatprep.subr.bf16.mxu0 %v2337
  %3400 = vmatpush2.bf16.msra.mxu0 %v2336
  %3401 = vmatprep.subr.bf16.mxu0 %v2335
  %3402 = vmatpush2.bf16.msra.mxu0 %v2334
  %3403 = vmatprep.subr.bf16.mxu0 %v2333
  %3404 = vmatpush2.bf16.msra.mxu0 %v2332
  %3405 = vmatprep.subr.bf16.mxu0 %v2331
  %3406 = vmatpush2.bf16.msra.mxu0 %v2330
  %3407 = vmatprep.subr.bf16.mxu0 %v2329
  %3408 = vmatpush2.bf16.msra.mxu0 %v2328
  %3409 = vmatprep.subr.bf16.mxu0 %v2327
  %3410 = vmatpush2.bf16.msra.mxu0 %v2326
  %3411 = vmatprep.mubr.bf16.mxu0 %v69
  %3412 = vmatmul.mubr.bf16.gmra.mxu0 %v68
  %v3413 = vpop.f32.mrf.mxu0
  %v3414 = vadd.f32 %v3373, %v3413
  %v3415 = vpop.f32.mrf.mxu0
  %v3416 = vadd.f32 %v3375, %v3415
  %v3417 = vpop.f32.mrf.mxu0
  %v3418 = vpop.f32.mrf.mxu0
  %3419 = vdwg.mxu0
  %3420 = vmatprep.subr.bf16.mxu0 %v2357
  %3421 = vmatpush1.bf16.msra.mxu0 %v2356
  %3422 = vmatprep.subr.bf16.mxu0 %v2355
  %3423 = vmatpush1.bf16.msra.mxu0 %v2354
  %3424 = vmatprep.subr.bf16.mxu0 %v2353
  %3425 = vmatpush1.bf16.msra.mxu0 %v2352
  %3426 = vmatprep.subr.bf16.mxu0 %v2351
  %3427 = vmatpush1.bf16.msra.mxu0 %v2350
  %3428 = vmatprep.subr.bf16.mxu0 %v2349
  %3429 = vmatpush1.bf16.msra.mxu0 %v2348
  %3430 = vmatprep.subr.bf16.mxu0 %v2347
  %3431 = vmatpush1.bf16.msra.mxu0 %v2346
  %3432 = vmatprep.subr.bf16.mxu0 %v2345
  %3433 = vmatpush1.bf16.msra.mxu0 %v2344
  %3434 = vmatprep.subr.bf16.mxu0 %v2343
  %3435 = vmatpush1.bf16.msra.mxu0 %v2342
  %3436 = vmatprep.subr.bf16.mxu0 %v2373
  %3437 = vmatpush2.bf16.msra.mxu0 %v2372
  %3438 = vmatprep.subr.bf16.mxu0 %v2371
  %3439 = vmatpush2.bf16.msra.mxu0 %v2370
  %3440 = vmatprep.subr.bf16.mxu0 %v2369
  %3441 = vmatpush2.bf16.msra.mxu0 %v2368
  %3442 = vmatprep.subr.bf16.mxu0 %v2367
  %3443 = vmatpush2.bf16.msra.mxu0 %v2366
  %3444 = vmatprep.subr.bf16.mxu0 %v2365
  %3445 = vmatpush2.bf16.msra.mxu0 %v2364
  %3446 = vmatprep.subr.bf16.mxu0 %v2363
  %3447 = vmatpush2.bf16.msra.mxu0 %v2362
  %3448 = vmatprep.subr.bf16.mxu0 %v2361
  %3449 = vmatpush2.bf16.msra.mxu0 %v2360
  %3450 = vmatprep.subr.bf16.mxu0 %v2359
  %3451 = vmatpush2.bf16.msra.mxu0 %v2358
  %3452 = vmatprep.mubr.bf16.mxu0 %v71
  %3453 = vmatmul.mubr.bf16.gmra.mxu0 %v70
  %v3454 = vpop.f32.mrf.mxu0
  %v3455 = vadd.f32 %v3414, %v3454
  %v3456 = vpop.f32.mrf.mxu0
  %v3457 = vadd.f32 %v3416, %v3456
  %v3458 = vpop.f32.mrf.mxu0
  %v3459 = vpop.f32.mrf.mxu0
  %3460 = vdwg.mxu0
  %3461 = vmatprep.subr.bf16.mxu0 %v2389
  %3462 = vmatpush1.bf16.msra.mxu0 %v2388
  %3463 = vmatprep.subr.bf16.mxu0 %v2387
  %3464 = vmatpush1.bf16.msra.mxu0 %v2386
  %3465 = vmatprep.subr.bf16.mxu0 %v2385
  %3466 = vmatpush1.bf16.msra.mxu0 %v2384
  %3467 = vmatprep.subr.bf16.mxu0 %v2383
  %3468 = vmatpush1.bf16.msra.mxu0 %v2382
  %3469 = vmatprep.subr.bf16.mxu0 %v2381
  %3470 = vmatpush1.bf16.msra.mxu0 %v2380
  %3471 = vmatprep.subr.bf16.mxu0 %v2379
  %3472 = vmatpush1.bf16.msra.mxu0 %v2378
  %3473 = vmatprep.subr.bf16.mxu0 %v2377
  %3474 = vmatpush1.bf16.msra.mxu0 %v2376
  %3475 = vmatprep.subr.bf16.mxu0 %v2375
  %3476 = vmatpush1.bf16.msra.mxu0 %v2374
  %3477 = vmatprep.subr.bf16.mxu0 %v2405
  %3478 = vmatpush2.bf16.msra.mxu0 %v2404
  %3479 = vmatprep.subr.bf16.mxu0 %v2403
  %3480 = vmatpush2.bf16.msra.mxu0 %v2402
  %3481 = vmatprep.subr.bf16.mxu0 %v2401
  %3482 = vmatpush2.bf16.msra.mxu0 %v2400
  %3483 = vmatprep.subr.bf16.mxu0 %v2399
  %3484 = vmatpush2.bf16.msra.mxu0 %v2398
  %3485 = vmatprep.subr.bf16.mxu0 %v2397
  %3486 = vmatpush2.bf16.msra.mxu0 %v2396
  %3487 = vmatprep.subr.bf16.mxu0 %v2395
  %3488 = vmatpush2.bf16.msra.mxu0 %v2394
  %3489 = vmatprep.subr.bf16.mxu0 %v2393
  %3490 = vmatpush2.bf16.msra.mxu0 %v2392
  %3491 = vmatprep.subr.bf16.mxu0 %v2391
  %3492 = vmatpush2.bf16.msra.mxu0 %v2390
  %3493 = vmatprep.mubr.bf16.mxu0 %v73
  %3494 = vmatmul.mubr.bf16.gmra.mxu0 %v72
  %v3495 = vpop.f32.mrf.mxu0
  %v3496 = vadd.f32 %v3455, %v3495
  %v3497 = vpop.f32.mrf.mxu0
  %v3498 = vadd.f32 %v3457, %v3497
  %v3499 = vpop.f32.mrf.mxu0
  %v3500 = vpop.f32.mrf.mxu0
  %3501 = vdwg.mxu0
  %3502 = vmatprep.subr.bf16.mxu0 %v2421
  %3503 = vmatpush1.bf16.msra.mxu0 %v2420
  %3504 = vmatprep.subr.bf16.mxu0 %v2419
  %3505 = vmatpush1.bf16.msra.mxu0 %v2418
  %3506 = vmatprep.subr.bf16.mxu0 %v2417
  %3507 = vmatpush1.bf16.msra.mxu0 %v2416
  %3508 = vmatprep.subr.bf16.mxu0 %v2415
  %3509 = vmatpush1.bf16.msra.mxu0 %v2414
  %3510 = vmatprep.subr.bf16.mxu0 %v2413
  %3511 = vmatpush1.bf16.msra.mxu0 %v2412
  %3512 = vmatprep.subr.bf16.mxu0 %v2411
  %3513 = vmatpush1.bf16.msra.mxu0 %v2410
  %3514 = vmatprep.subr.bf16.mxu0 %v2409
  %3515 = vmatpush1.bf16.msra.mxu0 %v2408
  %3516 = vmatprep.subr.bf16.mxu0 %v2407
  %3517 = vmatpush1.bf16.msra.mxu0 %v2406
  %3518 = vmatprep.subr.bf16.mxu0 %v2437
  %3519 = vmatpush2.bf16.msra.mxu0 %v2436
  %3520 = vmatprep.subr.bf16.mxu0 %v2435
  %3521 = vmatpush2.bf16.msra.mxu0 %v2434
  %3522 = vmatprep.subr.bf16.mxu0 %v2433
  %3523 = vmatpush2.bf16.msra.mxu0 %v2432
  %3524 = vmatprep.subr.bf16.mxu0 %v2431
  %3525 = vmatpush2.bf16.msra.mxu0 %v2430
  %3526 = vmatprep.subr.bf16.mxu0 %v2429
  %3527 = vmatpush2.bf16.msra.mxu0 %v2428
  %3528 = vmatprep.subr.bf16.mxu0 %v2427
  %3529 = vmatpush2.bf16.msra.mxu0 %v2426
  %3530 = vmatprep.subr.bf16.mxu0 %v2425
  %3531 = vmatpush2.bf16.msra.mxu0 %v2424
  %3532 = vmatprep.subr.bf16.mxu0 %v2423
  %3533 = vmatpush2.bf16.msra.mxu0 %v2422
  %3534 = vmatprep.mubr.bf16.mxu0 %v75
  %3535 = vmatmul.mubr.bf16.gmra.mxu0 %v74
  %v3536 = vpop.f32.mrf.mxu0
  %v3537 = vadd.f32 %v3496, %v3536
  %v3538 = vpop.f32.mrf.mxu0
  %v3539 = vadd.f32 %v3498, %v3538
  %v3540 = vpop.f32.mrf.mxu0
  %v3541 = vpop.f32.mrf.mxu0
  %3542 = vdwg.mxu0
  %3543 = vmatprep.subr.bf16.mxu0 %v2453
  %3544 = vmatpush1.bf16.msra.mxu0 %v2452
  %3545 = vmatprep.subr.bf16.mxu0 %v2451
  %3546 = vmatpush1.bf16.msra.mxu0 %v2450
  %3547 = vmatprep.subr.bf16.mxu0 %v2449
  %3548 = vmatpush1.bf16.msra.mxu0 %v2448
  %3549 = vmatprep.subr.bf16.mxu0 %v2447
  %3550 = vmatpush1.bf16.msra.mxu0 %v2446
  %3551 = vmatprep.subr.bf16.mxu0 %v2445
  %3552 = vmatpush1.bf16.msra.mxu0 %v2444
  %3553 = vmatprep.subr.bf16.mxu0 %v2443
  %3554 = vmatpush1.bf16.msra.mxu0 %v2442
  %3555 = vmatprep.subr.bf16.mxu0 %v2441
  %3556 = vmatpush1.bf16.msra.mxu0 %v2440
  %3557 = vmatprep.subr.bf16.mxu0 %v2439
  %3558 = vmatpush1.bf16.msra.mxu0 %v2438
  %3559 = vmatprep.subr.bf16.mxu0 %v2469
  %3560 = vmatpush2.bf16.msra.mxu0 %v2468
  %3561 = vmatprep.subr.bf16.mxu0 %v2467
  %3562 = vmatpush2.bf16.msra.mxu0 %v2466
  %3563 = vmatprep.subr.bf16.mxu0 %v2465
  %3564 = vmatpush2.bf16.msra.mxu0 %v2464
  %3565 = vmatprep.subr.bf16.mxu0 %v2463
  %3566 = vmatpush2.bf16.msra.mxu0 %v2462
  %3567 = vmatprep.subr.bf16.mxu0 %v2461
  %3568 = vmatpush2.bf16.msra.mxu0 %v2460
  %3569 = vmatprep.subr.bf16.mxu0 %v2459
  %3570 = vmatpush2.bf16.msra.mxu0 %v2458
  %3571 = vmatprep.subr.bf16.mxu0 %v2457
  %3572 = vmatpush2.bf16.msra.mxu0 %v2456
  %3573 = vmatprep.subr.bf16.mxu0 %v2455
  %3574 = vmatpush2.bf16.msra.mxu0 %v2454
  %3575 = vmatprep.mubr.bf16.mxu0 %v77
  %3576 = vmatmul.mubr.bf16.gmra.mxu0 %v76
  %v3577 = vpop.f32.mrf.mxu0
  %v3578 = vadd.f32 %v3537, %v3577
  %v3579 = vpop.f32.mrf.mxu0
  %v3580 = vadd.f32 %v3539, %v3579
  %v3581 = vpop.f32.mrf.mxu0
  %v3582 = vpop.f32.mrf.mxu0
  %3583 = vdwg.mxu0
  %3584 = vmatprep.subr.bf16.mxu0 %v2485
  %3585 = vmatpush1.bf16.msra.mxu0 %v2484
  %3586 = vmatprep.subr.bf16.mxu0 %v2483
  %3587 = vmatpush1.bf16.msra.mxu0 %v2482
  %3588 = vmatprep.subr.bf16.mxu0 %v2481
  %3589 = vmatpush1.bf16.msra.mxu0 %v2480
  %3590 = vmatprep.subr.bf16.mxu0 %v2479
  %3591 = vmatpush1.bf16.msra.mxu0 %v2478
  %3592 = vmatprep.subr.bf16.mxu0 %v2477
  %3593 = vmatpush1.bf16.msra.mxu0 %v2476
  %3594 = vmatprep.subr.bf16.mxu0 %v2475
  %3595 = vmatpush1.bf16.msra.mxu0 %v2474
  %3596 = vmatprep.subr.bf16.mxu0 %v2473
  %3597 = vmatpush1.bf16.msra.mxu0 %v2472
  %3598 = vmatprep.subr.bf16.mxu0 %v2471
  %3599 = vmatpush1.bf16.msra.mxu0 %v2470
  %3600 = vmatprep.subr.bf16.mxu0 %v2501
  %3601 = vmatpush2.bf16.msra.mxu0 %v2500
  %3602 = vmatprep.subr.bf16.mxu0 %v2499
  %3603 = vmatpush2.bf16.msra.mxu0 %v2498
  %3604 = vmatprep.subr.bf16.mxu0 %v2497
  %3605 = vmatpush2.bf16.msra.mxu0 %v2496
  %3606 = vmatprep.subr.bf16.mxu0 %v2495
  %3607 = vmatpush2.bf16.msra.mxu0 %v2494
  %3608 = vmatprep.subr.bf16.mxu0 %v2493
  %3609 = vmatpush2.bf16.msra.mxu0 %v2492
  %3610 = vmatprep.subr.bf16.mxu0 %v2491
  %3611 = vmatpush2.bf16.msra.mxu0 %v2490
  %3612 = vmatprep.subr.bf16.mxu0 %v2489
  %3613 = vmatpush2.bf16.msra.mxu0 %v2488
  %3614 = vmatprep.subr.bf16.mxu0 %v2487
  %3615 = vmatpush2.bf16.msra.mxu0 %v2486
  %3616 = vmatprep.mubr.bf16.mxu0 %v79
  %3617 = vmatmul.mubr.bf16.gmra.mxu0 %v78
  %v3618 = vpop.f32.mrf.mxu0
  %v3619 = vadd.f32 %v3578, %v3618
  %v3620 = vpop.f32.mrf.mxu0
  %v3621 = vadd.f32 %v3580, %v3620
  %v3622 = vpop.f32.mrf.mxu0
  %v3623 = vpop.f32.mrf.mxu0
  %3624 = vdwg.mxu0
  %3625 = vmatprep.subr.bf16.mxu0 %v2517
  %3626 = vmatpush1.bf16.msra.mxu0 %v2516
  %3627 = vmatprep.subr.bf16.mxu0 %v2515
  %3628 = vmatpush1.bf16.msra.mxu0 %v2514
  %3629 = vmatprep.subr.bf16.mxu0 %v2513
  %3630 = vmatpush1.bf16.msra.mxu0 %v2512
  %3631 = vmatprep.subr.bf16.mxu0 %v2511
  %3632 = vmatpush1.bf16.msra.mxu0 %v2510
  %3633 = vmatprep.subr.bf16.mxu0 %v2509
  %3634 = vmatpush1.bf16.msra.mxu0 %v2508
  %3635 = vmatprep.subr.bf16.mxu0 %v2507
  %3636 = vmatpush1.bf16.msra.mxu0 %v2506
  %3637 = vmatprep.subr.bf16.mxu0 %v2505
  %3638 = vmatpush1.bf16.msra.mxu0 %v2504
  %3639 = vmatprep.subr.bf16.mxu0 %v2503
  %3640 = vmatpush1.bf16.msra.mxu0 %v2502
  %3641 = vmatprep.subr.bf16.mxu0 %v2533
  %3642 = vmatpush2.bf16.msra.mxu0 %v2532
  %3643 = vmatprep.subr.bf16.mxu0 %v2531
  %3644 = vmatpush2.bf16.msra.mxu0 %v2530
  %3645 = vmatprep.subr.bf16.mxu0 %v2529
  %3646 = vmatpush2.bf16.msra.mxu0 %v2528
  %3647 = vmatprep.subr.bf16.mxu0 %v2527
  %3648 = vmatpush2.bf16.msra.mxu0 %v2526
  %3649 = vmatprep.subr.bf16.mxu0 %v2525
  %3650 = vmatpush2.bf16.msra.mxu0 %v2524
  %3651 = vmatprep.subr.bf16.mxu0 %v2523
  %3652 = vmatpush2.bf16.msra.mxu0 %v2522
  %3653 = vmatprep.subr.bf16.mxu0 %v2521
  %3654 = vmatpush2.bf16.msra.mxu0 %v2520
  %3655 = vmatprep.subr.bf16.mxu0 %v2519
  %3656 = vmatpush2.bf16.msra.mxu0 %v2518
  %3657 = vmatprep.mubr.bf16.mxu0 %v81
  %3658 = vmatmul.mubr.bf16.gmra.mxu0 %v80
  %v3659 = vpop.f32.mrf.mxu0
  %v3660 = vadd.f32 %v3619, %v3659
  %v3661 = vpop.f32.mrf.mxu0
  %v3662 = vadd.f32 %v3621, %v3661
  %v3663 = vpop.f32.mrf.mxu0
  %v3664 = vpop.f32.mrf.mxu0
  %3665 = vdwg.mxu0
  %3666 = vmatprep.subr.bf16.mxu0 %v2549
  %3667 = vmatpush1.bf16.msra.mxu0 %v2548
  %3668 = vmatprep.subr.bf16.mxu0 %v2547
  %3669 = vmatpush1.bf16.msra.mxu0 %v2546
  %3670 = vmatprep.subr.bf16.mxu0 %v2545
  %3671 = vmatpush1.bf16.msra.mxu0 %v2544
  %3672 = vmatprep.subr.bf16.mxu0 %v2543
  %3673 = vmatpush1.bf16.msra.mxu0 %v2542
  %3674 = vmatprep.subr.bf16.mxu0 %v2541
  %3675 = vmatpush1.bf16.msra.mxu0 %v2540
  %3676 = vmatprep.subr.bf16.mxu0 %v2539
  %3677 = vmatpush1.bf16.msra.mxu0 %v2538
  %3678 = vmatprep.subr.bf16.mxu0 %v2537
  %3679 = vmatpush1.bf16.msra.mxu0 %v2536
  %3680 = vmatprep.subr.bf16.mxu0 %v2535
  %3681 = vmatpush1.bf16.msra.mxu0 %v2534
  %3682 = vmatprep.subr.bf16.mxu0 %v2565
  %3683 = vmatpush2.bf16.msra.mxu0 %v2564
  %3684 = vmatprep.subr.bf16.mxu0 %v2563
  %3685 = vmatpush2.bf16.msra.mxu0 %v2562
  %3686 = vmatprep.subr.bf16.mxu0 %v2561
  %3687 = vmatpush2.bf16.msra.mxu0 %v2560
  %3688 = vmatprep.subr.bf16.mxu0 %v2559
  %3689 = vmatpush2.bf16.msra.mxu0 %v2558
  %3690 = vmatprep.subr.bf16.mxu0 %v2557
  %3691 = vmatpush2.bf16.msra.mxu0 %v2556
  %3692 = vmatprep.subr.bf16.mxu0 %v2555
  %3693 = vmatpush2.bf16.msra.mxu0 %v2554
  %3694 = vmatprep.subr.bf16.mxu0 %v2553
  %3695 = vmatpush2.bf16.msra.mxu0 %v2552
  %3696 = vmatprep.subr.bf16.mxu0 %v2551
  %3697 = vmatpush2.bf16.msra.mxu0 %v2550
  %3698 = vmatprep.mubr.bf16.mxu0 %v83
  %3699 = vmatmul.mubr.bf16.gmra.mxu0 %v82
  %v3700 = vpop.f32.mrf.mxu0
  %v3701 = vadd.f32 %v3660, %v3700
  %v3702 = vpop.f32.mrf.mxu0
  %v3703 = vadd.f32 %v3662, %v3702
  %v3704 = vpop.f32.mrf.mxu0
  %v3705 = vpop.f32.mrf.mxu0
  %3706 = vdwg.mxu0
  %3707 = vmatprep.subr.bf16.mxu0 %v2581
  %3708 = vmatpush1.bf16.msra.mxu0 %v2580
  %3709 = vmatprep.subr.bf16.mxu0 %v2579
  %3710 = vmatpush1.bf16.msra.mxu0 %v2578
  %3711 = vmatprep.subr.bf16.mxu0 %v2577
  %3712 = vmatpush1.bf16.msra.mxu0 %v2576
  %3713 = vmatprep.subr.bf16.mxu0 %v2575
  %3714 = vmatpush1.bf16.msra.mxu0 %v2574
  %3715 = vmatprep.subr.bf16.mxu0 %v2573
  %3716 = vmatpush1.bf16.msra.mxu0 %v2572
  %3717 = vmatprep.subr.bf16.mxu0 %v2571
  %3718 = vmatpush1.bf16.msra.mxu0 %v2570
  %3719 = vmatprep.subr.bf16.mxu0 %v2569
  %3720 = vmatpush1.bf16.msra.mxu0 %v2568
  %3721 = vmatprep.subr.bf16.mxu0 %v2567
  %3722 = vmatpush1.bf16.msra.mxu0 %v2566
  %3723 = vmatprep.subr.bf16.mxu0 %v2597
  %3724 = vmatpush2.bf16.msra.mxu0 %v2596
  %3725 = vmatprep.subr.bf16.mxu0 %v2595
  %3726 = vmatpush2.bf16.msra.mxu0 %v2594
  %3727 = vmatprep.subr.bf16.mxu0 %v2593
  %3728 = vmatpush2.bf16.msra.mxu0 %v2592
  %3729 = vmatprep.subr.bf16.mxu0 %v2591
  %3730 = vmatpush2.bf16.msra.mxu0 %v2590
  %3731 = vmatprep.subr.bf16.mxu0 %v2589
  %3732 = vmatpush2.bf16.msra.mxu0 %v2588
  %3733 = vmatprep.subr.bf16.mxu0 %v2587
  %3734 = vmatpush2.bf16.msra.mxu0 %v2586
  %3735 = vmatprep.subr.bf16.mxu0 %v2585
  %3736 = vmatpush2.bf16.msra.mxu0 %v2584
  %3737 = vmatprep.subr.bf16.mxu0 %v2583
  %3738 = vmatpush2.bf16.msra.mxu0 %v2582
  %3739 = vmatprep.mubr.bf16.mxu0 %v85
  %3740 = vmatmul.mubr.bf16.gmra.mxu0 %v84
  %v3741 = vpop.f32.mrf.mxu0
  %v3742 = vadd.f32 %v3701, %v3741
  %v3743 = vpop.f32.mrf.mxu0
  %v3744 = vadd.f32 %v3703, %v3743
  %v3745 = vpop.f32.mrf.mxu0
  %v3746 = vpop.f32.mrf.mxu0
  %3747 = vdwg.mxu0
  %3748 = vmatprep.subr.bf16.mxu0 %v2613
  %3749 = vmatpush1.bf16.msra.mxu0 %v2612
  %3750 = vmatprep.subr.bf16.mxu0 %v2611
  %3751 = vmatpush1.bf16.msra.mxu0 %v2610
  %3752 = vmatprep.subr.bf16.mxu0 %v2609
  %3753 = vmatpush1.bf16.msra.mxu0 %v2608
  %3754 = vmatprep.subr.bf16.mxu0 %v2607
  %3755 = vmatpush1.bf16.msra.mxu0 %v2606
  %3756 = vmatprep.subr.bf16.mxu0 %v2605
  %3757 = vmatpush1.bf16.msra.mxu0 %v2604
  %3758 = vmatprep.subr.bf16.mxu0 %v2603
  %3759 = vmatpush1.bf16.msra.mxu0 %v2602
  %3760 = vmatprep.subr.bf16.mxu0 %v2601
  %3761 = vmatpush1.bf16.msra.mxu0 %v2600
  %3762 = vmatprep.subr.bf16.mxu0 %v2599
  %3763 = vmatpush1.bf16.msra.mxu0 %v2598
  %3764 = vmatprep.subr.bf16.mxu0 %v2629
  %3765 = vmatpush2.bf16.msra.mxu0 %v2628
  %3766 = vmatprep.subr.bf16.mxu0 %v2627
  %3767 = vmatpush2.bf16.msra.mxu0 %v2626
  %3768 = vmatprep.subr.bf16.mxu0 %v2625
  %3769 = vmatpush2.bf16.msra.mxu0 %v2624
  %3770 = vmatprep.subr.bf16.mxu0 %v2623
  %3771 = vmatpush2.bf16.msra.mxu0 %v2622
  %3772 = vmatprep.subr.bf16.mxu0 %v2621
  %3773 = vmatpush2.bf16.msra.mxu0 %v2620
  %3774 = vmatprep.subr.bf16.mxu0 %v2619
  %3775 = vmatpush2.bf16.msra.mxu0 %v2618
  %3776 = vmatprep.subr.bf16.mxu0 %v2617
  %3777 = vmatpush2.bf16.msra.mxu0 %v2616
  %3778 = vmatprep.subr.bf16.mxu0 %v2615
  %3779 = vmatpush2.bf16.msra.mxu0 %v2614
  %3780 = vmatprep.mubr.bf16.mxu0 %v87
  %3781 = vmatmul.mubr.bf16.gmra.mxu0 %v86
  %v3782 = vpop.f32.mrf.mxu0
  %v3783 = vadd.f32 %v3742, %v3782
  %v3784 = vpop.f32.mrf.mxu0
  %v3785 = vadd.f32 %v3744, %v3784
  %v3786 = vpop.f32.mrf.mxu0
  %v3787 = vpop.f32.mrf.mxu0
  %3788 = vdwg.mxu0
  %3789 = vmatprep.subr.bf16.mxu0 %v2645
  %3790 = vmatpush1.bf16.msra.mxu0 %v2644
  %3791 = vmatprep.subr.bf16.mxu0 %v2643
  %3792 = vmatpush1.bf16.msra.mxu0 %v2642
  %3793 = vmatprep.subr.bf16.mxu0 %v2641
  %3794 = vmatpush1.bf16.msra.mxu0 %v2640
  %3795 = vmatprep.subr.bf16.mxu0 %v2639
  %3796 = vmatpush1.bf16.msra.mxu0 %v2638
  %3797 = vmatprep.subr.bf16.mxu0 %v2637
  %3798 = vmatpush1.bf16.msra.mxu0 %v2636
  %3799 = vmatprep.subr.bf16.mxu0 %v2635
  %3800 = vmatpush1.bf16.msra.mxu0 %v2634
  %3801 = vmatprep.subr.bf16.mxu0 %v2633
  %3802 = vmatpush1.bf16.msra.mxu0 %v2632
  %3803 = vmatprep.subr.bf16.mxu0 %v2631
  %3804 = vmatpush1.bf16.msra.mxu0 %v2630
  %3805 = vmatprep.subr.bf16.mxu0 %v2661
  %3806 = vmatpush2.bf16.msra.mxu0 %v2660
  %3807 = vmatprep.subr.bf16.mxu0 %v2659
  %3808 = vmatpush2.bf16.msra.mxu0 %v2658
  %3809 = vmatprep.subr.bf16.mxu0 %v2657
  %3810 = vmatpush2.bf16.msra.mxu0 %v2656
  %3811 = vmatprep.subr.bf16.mxu0 %v2655
  %3812 = vmatpush2.bf16.msra.mxu0 %v2654
  %3813 = vmatprep.subr.bf16.mxu0 %v2653
  %3814 = vmatpush2.bf16.msra.mxu0 %v2652
  %3815 = vmatprep.subr.bf16.mxu0 %v2651
  %3816 = vmatpush2.bf16.msra.mxu0 %v2650
  %3817 = vmatprep.subr.bf16.mxu0 %v2649
  %3818 = vmatpush2.bf16.msra.mxu0 %v2648
  %3819 = vmatprep.subr.bf16.mxu0 %v2647
  %3820 = vmatpush2.bf16.msra.mxu0 %v2646
  %3821 = vmatprep.mubr.bf16.mxu0 %v89
  %3822 = vmatmul.mubr.bf16.gmra.mxu0 %v88
  %v3823 = vpop.f32.mrf.mxu0
  %v3824 = vadd.f32 %v3783, %v3823
  %v3825 = vpop.f32.mrf.mxu0
  %v3826 = vadd.f32 %v3785, %v3825
  %v3827 = vpop.f32.mrf.mxu0
  %v3828 = vpop.f32.mrf.mxu0
  %3829 = vdwg.mxu0
  %v3830 = vxor.u32 %v3824, 2147483648
  %v3831 = vxor.u32 %v3826, 2147483648
  %v3832 = vmul.f32 %v3830, 1.442695
  %v3833 = vpow.pop %v3832
  %v3834 = vmul.f32 %v3831, 1.442695
  %v3835 = vpow.pop %v3834
  %v3836 = vadd.f32 %v3833, 1.0
  %v3837 = vadd.f32 %v3835, 1.0
  %v3838 = vrcp.pop %v3836
  %v3839 = vmul.f32 1.0, %v3838
  %v3840 = vrcp.pop %v3837
  %v3841 = vmul.f32 1.0, %v3840
  %v3842 = vld [vmem:[%s3] sm:$0xf]
  %v3843 = vld [vmem:[%s3 + $0x4] sm:$0xf]
  %v3844 = vld [vmem:[%s3 + $0x8] sm:$0xf]
  %v3845 = vld [vmem:[%s3 + $0xc] sm:$0xf]
  %v3846 = vld [vmem:[%s3 + $0x10] sm:$0xf]
  %v3847 = vld [vmem:[%s3 + $0x14] sm:$0xf]
  %v3848 = vld [vmem:[%s3 + $0x18] sm:$0xf]
  %v3849 = vld [vmem:[%s3 + $0x1c] sm:$0xf]
  %v3850 = vld [vmem:[%s3 + $0x20] sm:$0xf]
  %v3851 = vld [vmem:[%s3 + $0x24] sm:$0xf]
  %v3852 = vld [vmem:[%s3 + $0x28] sm:$0xf]
  %v3853 = vld [vmem:[%s3 + $0x2c] sm:$0xf]
  %v3854 = vld [vmem:[%s3 + $0x30] sm:$0xf]
  %v3855 = vld [vmem:[%s3 + $0x34] sm:$0xf]
  %v3856 = vld [vmem:[%s3 + $0x38] sm:$0xf]
  %v3857 = vld [vmem:[%s3 + $0x3c] sm:$0xf]
  %v3858 = vld [vmem:[%s3 + $0x40] sm:$0xf]
  %v3859 = vld [vmem:[%s3 + $0x44] sm:$0xf]
  %v3860 = vld [vmem:[%s3 + $0x48] sm:$0xf]
  %v3861 = vld [vmem:[%s3 + $0x4c] sm:$0xf]
  %v3862 = vld [vmem:[%s3 + $0x50] sm:$0xf]
  %v3863 = vld [vmem:[%s3 + $0x54] sm:$0xf]
  %v3864 = vld [vmem:[%s3 + $0x58] sm:$0xf]
  %v3865 = vld [vmem:[%s3 + $0x5c] sm:$0xf]
  %v3866 = vld [vmem:[%s3 + $0x60] sm:$0xf]
  %v3867 = vunpack.c.l.bf16 %v3842
  %v3868 = vunpack.c.l.bf16 %v3843
  %v3869 = vunpack.c.l.bf16 %v3844
  %v3870 = vunpack.c.l.bf16 %v3845
  %v3871 = vunpack.c.l.bf16 %v3846
  %v3872 = vunpack.c.l.bf16 %v3847
  %v3873 = vunpack.c.l.bf16 %v3848
  %v3874 = vunpack.c.l.bf16 %v3849
  %v3875 = vunpack.c.l.bf16 %v3850
  %v3876 = vunpack.c.l.bf16 %v3851
  %v3877 = vunpack.c.l.bf16 %v3852
  %v3878 = vunpack.c.l.bf16 %v3853
  %v3879 = vunpack.c.l.bf16 %v3854
  %v3880 = vunpack.c.l.bf16 %v3855
  %v3881 = vunpack.c.l.bf16 %v3856
  %v3882 = vunpack.c.l.bf16 %v3857
  %v3883 = vunpack.c.l.bf16 %v3858
  %v3884 = vunpack.c.l.bf16 %v3859
  %v3885 = vunpack.c.l.bf16 %v3860
  %v3886 = vunpack.c.l.bf16 %v3861
  %v3887 = vunpack.c.l.bf16 %v3862
  %v3888 = vunpack.c.l.bf16 %v3863
  %v3889 = vunpack.c.l.bf16 %v3864
  %v3890 = vunpack.c.l.bf16 %v3865
  %v3891 = vunpack.c.l.bf16 %v3866
  %v3892 = vld [vmem:[%s4] sm:$0x1]
  %v3894 = vlaneseq
  %v3895 = vshrl.u32 %v3894, 7
  %v3896 = vsub.s32 0, %v3895
  %v3897 = vrot.slane %v3892, %v3896
  %vm3899 = vcmask 588800
  %v3901 = vsel %vm3899, %v3841, 0
  %3903 = vmatprep.subr.mxu0 0.0
  %3904 = vmatpush1.msra.mxu0 %v3882
  %3905 = vmatprep.subr.mxu0 0.0
  %3906 = vmatpush1.msra.mxu0 %v3881
  %3907 = vmatprep.subr.mxu0 0.0
  %3908 = vmatpush1.msra.mxu0 %v3880
  %3909 = vmatprep.subr.mxu0 0.0
  %3910 = vmatpush1.msra.mxu0 %v3879
  %3911 = vmatprep.subr.mxu0 0.0
  %3912 = vmatpush1.msra.mxu0 %v3878
  %3913 = vmatprep.subr.mxu0 0.0
  %3914 = vmatpush1.msra.mxu0 %v3877
  %3915 = vmatprep.subr.mxu0 0.0
  %3916 = vmatpush1.msra.mxu0 %v3876
  %3917 = vmatprep.subr.mxu0 0.0
  %3918 = vmatpush1.msra.mxu0 %v3875
  %3919 = vmatprep.subr.mxu0 0.0
  %3920 = vmatpush1.msra.mxu0 %v3874
  %3921 = vmatprep.subr.mxu0 0.0
  %3922 = vmatpush1.msra.mxu0 %v3873
  %3923 = vmatprep.subr.mxu0 0.0
  %3924 = vmatpush1.msra.mxu0 %v3872
  %3925 = vmatprep.subr.mxu0 0.0
  %3926 = vmatpush1.msra.mxu0 %v3871
  %3927 = vmatprep.subr.mxu0 0.0
  %3928 = vmatpush1.msra.mxu0 %v3870
  %3929 = vmatprep.subr.mxu0 0.0
  %3930 = vmatpush1.msra.mxu0 %v3869
  %3931 = vmatprep.subr.mxu0 0.0
  %3932 = vmatpush1.msra.mxu0 %v3868
  %3933 = vmatprep.subr.mxu0 0.0
  %3934 = vmatpush1.msra.mxu0 %v3867
  %3935 = vmatprep.subr.mxu0 0.0
  %3936 = vmatpush2.msra.mxu0 0.0
  %3937 = vmatprep.subr.mxu0 0.0
  %3938 = vmatpush2.msra.mxu0 0.0
  %3939 = vmatprep.subr.mxu0 0.0
  %3940 = vmatpush2.msra.mxu0 0.0
  %3941 = vmatprep.subr.mxu0 0.0
  %3942 = vmatpush2.msra.mxu0 0.0
  %3943 = vmatprep.subr.mxu0 0.0
  %3944 = vmatpush2.msra.mxu0 0.0
  %3945 = vmatprep.subr.mxu0 0.0
  %3946 = vmatpush2.msra.mxu0 0.0
  %3947 = vmatprep.subr.mxu0 0.0
  %3948 = vmatpush2.msra.mxu0 0.0
  %3949 = vmatprep.subr.mxu0 0.0
  %3950 = vmatpush2.msra.mxu0 %v3891
  %3951 = vmatprep.subr.mxu0 0.0
  %3952 = vmatpush2.msra.mxu0 %v3890
  %3953 = vmatprep.subr.mxu0 0.0
  %3954 = vmatpush2.msra.mxu0 %v3889
  %3955 = vmatprep.subr.mxu0 0.0
  %3956 = vmatpush2.msra.mxu0 %v3888
  %3957 = vmatprep.subr.mxu0 0.0
  %3958 = vmatpush2.msra.mxu0 %v3887
  %3959 = vmatprep.subr.mxu0 0.0
  %3960 = vmatpush2.msra.mxu0 %v3886
  %3961 = vmatprep.subr.mxu0 0.0
  %3962 = vmatpush2.msra.mxu0 %v3885
  %3963 = vmatprep.subr.mxu0 0.0
  %3964 = vmatpush2.msra.mxu0 %v3884
  %3965 = vmatprep.subr.mxu0 0.0
  %3966 = vmatpush2.msra.mxu0 %v3883
  %3967 = vmatprep.mubr.f32.mxu0 %v3901
  %3968 = vmatmul.mubr.f32.gmra.mxu0 %v3839
  %v3969 = vpop.f32.mrf.mxu0
  %v3970 = vadd.f32 %v3897, %v3969
  %v3971 = vpop.f32.mrf.mxu0
  %3972 = vdwg.mxu0
  %v3973 = vxor.u32 %v3970, 2147483648
  %v3974 = vmul.f32 %v3973, 1.442695
  %v3975 = vpow.pop %v3974
  %v3976 = vadd.f32 %v3975, 1.0
  %v3977 = vrcp.pop %v3976
  %v3978 = vmul.f32 1.0, %v3977
  %v3979 = vld [vmem:[%s5] sm:$0xf]
  %v3980 = vld [vmem:[%s5 + $0x4] sm:$0xf]
  %v3981 = vld [vmem:[%s5 + $0x8] sm:$0xf]
  %v3982 = vld [vmem:[%s5 + $0xc] sm:$0xf]
  %v3983 = vld [vmem:[%s5 + $0x10] sm:$0xf]
  %v3984 = vld [vmem:[%s5 + $0x14] sm:$0xf]
  %v3985 = vld [vmem:[%s5 + $0x18] sm:$0x1]
  %v3986 = vunpack.c.l.bf16 %v3979
  %v3987 = vunpack.c.l.bf16 %v3980
  %v3988 = vunpack.c.l.bf16 %v3981
  %v3989 = vunpack.c.l.bf16 %v3982
  %v3990 = vunpack.c.l.bf16 %v3983
  %v3991 = vunpack.c.l.bf16 %v3984
  %v3992 = vunpack.c.l.bf16 %v3985
  %v3993 = vld [vmem:[%s6] sm:$0x1]
  %v3995 = vlaneseq
  %v3996 = vshrl.u32 %v3995, 7
  %v3997 = vsub.s32 0, %v3996
  %v3998 = vrot.slane %v3993, %v3997
  %vm4000 = vcmask 408576
  %v4002 = vsel %vm4000, %v3978, 0
  %vm4004 = vcmask 1041408
  %v4006 = vsel %vm4004, %v3992, 0
  %4008 = vmatprep.subr.mxu0 0.0
  %4009 = vmatpush1.msra.mxu0 0.0
  %4010 = vmatprep.subr.mxu0 0.0
  %4011 = vmatpush1.msra.mxu0 0.0
  %4012 = vmatprep.subr.mxu0 0.0
  %4013 = vmatpush1.msra.mxu0 0.0
  %4014 = vmatprep.subr.mxu0 0.0
  %4015 = vmatpush1.msra.mxu0 0.0
  %4016 = vmatprep.subr.mxu0 0.0
  %4017 = vmatpush1.msra.mxu0 0.0
  %4018 = vmatprep.subr.mxu0 0.0
  %4019 = vmatpush1.msra.mxu0 0.0
  %4020 = vmatprep.subr.mxu0 0.0
  %4021 = vmatpush1.msra.mxu0 0.0
  %4022 = vmatprep.subr.mxu0 0.0
  %4023 = vmatpush1.msra.mxu0 0.0
  %4024 = vmatprep.subr.mxu0 0.0
  %4025 = vmatpush1.msra.mxu0 0.0
  %4026 = vmatprep.subr.mxu0 0.0
  %4027 = vmatpush1.msra.mxu0 %v4006
  %4028 = vmatprep.subr.mxu0 0.0
  %4029 = vmatpush1.msra.mxu0 %v3991
  %4030 = vmatprep.subr.mxu0 0.0
  %4031 = vmatpush1.msra.mxu0 %v3990
  %4032 = vmatprep.subr.mxu0 0.0
  %4033 = vmatpush1.msra.mxu0 %v3989
  %4034 = vmatprep.subr.mxu0 0.0
  %4035 = vmatpush1.msra.mxu0 %v3988
  %4036 = vmatprep.subr.mxu0 0.0
  %4037 = vmatpush1.msra.mxu0 %v3987
  %4038 = vmatprep.subr.mxu0 0.0
  %4039 = vmatpush1.msra.mxu0 %v3986
  %4040 = vmatprep.subr.mxu0 0.0
  %4041 = vmatpush2.msra.mxu0 0.0
  %4042 = vmatprep.subr.mxu0 0.0
  %4043 = vmatpush2.msra.mxu0 0.0
  %4044 = vmatprep.subr.mxu0 0.0
  %4045 = vmatpush2.msra.mxu0 0.0
  %4046 = vmatprep.subr.mxu0 0.0
  %4047 = vmatpush2.msra.mxu0 0.0
  %4048 = vmatprep.subr.mxu0 0.0
  %4049 = vmatpush2.msra.mxu0 0.0
  %4050 = vmatprep.subr.mxu0 0.0
  %4051 = vmatpush2.msra.mxu0 0.0
  %4052 = vmatprep.subr.mxu0 0.0
  %4053 = vmatpush2.msra.mxu0 0.0
  %4054 = vmatprep.subr.mxu0 0.0
  %4055 = vmatpush2.msra.mxu0 0.0
  %4056 = vmatprep.subr.mxu0 0.0
  %4057 = vmatpush2.msra.mxu0 0.0
  %4058 = vmatprep.subr.mxu0 0.0
  %4059 = vmatpush2.msra.mxu0 0.0
  %4060 = vmatprep.subr.mxu0 0.0
  %4061 = vmatpush2.msra.mxu0 0.0
  %4062 = vmatprep.subr.mxu0 0.0
  %4063 = vmatpush2.msra.mxu0 0.0
  %4064 = vmatprep.subr.mxu0 0.0
  %4065 = vmatpush2.msra.mxu0 0.0
  %4066 = vmatprep.subr.mxu0 0.0
  %4067 = vmatpush2.msra.mxu0 0.0
  %4068 = vmatprep.subr.mxu0 0.0
  %4069 = vmatpush2.msra.mxu0 0.0
  %4070 = vmatprep.subr.mxu0 0.0
  %4071 = vmatpush2.msra.mxu0 0.0
  %4072 = vmatprep.mubr.f32.mxu0 0.0
  %4073 = vmatmul.mubr.f32.gmra.mxu0 %v4002
  %v4074 = vpop.f32.mrf.mxu0
  %v4075 = vadd.f32 %v3998, %v4074
  %v4076 = vpop.f32.mrf.mxu0
  %4077 = vdwg.mxu0
  %vm4078 = vcmask 15360
  %4079 = vst.msk [vmem:[%s7] sm:$0xff] %vm4078, %v4075
  // Predicated region
  $region30: #{tpu_custom_call.1} parent=0 // pred_check
    _
  $region31: #{tpu_custom_call.1} parent=0 // pred_check_branch
    %4081 = sbr.rel (0) target = $region33
  $region32: #{tpu_custom_call.1} parent=0 // pred_region
    _
  $region33: #{tpu_custom_call.1} parent=0 // pred_fallthru
    _
  // Predicated region
  $region34: #{tpu_custom_call.1} parent=0 // pred_check
    _
  $region35: #{tpu_custom_call.1} parent=0 // pred_check_branch
    %4083 = sbr.rel (0) target = $region37
  $region36: #{tpu_custom_call.1} parent=0 // pred_region
    _
  $region37: #{tpu_custom_call.1} parent=0 // pred_fallthru
    _

</llo_original>
